<compile_context>
chip_gen: v6e
topology: v6e:2x2x1
jax: 0.10.0
libtpu: 0.0.40
codegen_flags: <defaults>
</compile_context>

<pallas_src>
import functools

import jax
import jax.numpy as jnp
from jax import lax
from jax.experimental import pallas as pl
from jax.experimental.pallas import tpu as pltpu  # noqa: F401  (imported per template)


EPS = 1e-5


# ------------------------------ Pallas kernel --------------------------------

def _aeblock_kernel(x_ref,
                    s1_ref, q1_ref, g1_ref, b1_ref,
                    s2_ref, q2_ref, g2_ref, b2_ref,
                    s3_ref, q3_ref, g3_ref, b3_ref,
                    s4_ref, q4_ref, g4_ref, b4_ref,
                    res4_ref, res3_ref, res2_ref, *, C):
    """Whole AEBlock forward on VMEM-resident 2D slabs [N*H, W*C]."""

    def bn_relu(a, g_tiled, b_tiled):
        # Training-mode BatchNorm2d (batch stats, biased variance) + ReLU.
        rows, lanes = a.shape
        count = rows * (lanes // C)                 # N * H * W elements / channel
        inv_count = 1.0 / count
        lane = lax.broadcasted_iota(jnp.int32, a.shape, 1)
        if C & (C - 1) == 0:                        # channel id = lane mod C
            chan = lane & (C - 1)
        else:
            chan = lane % C
        mean_map = jnp.zeros_like(a)
        var_map = jnp.zeros_like(a)
        for c in range(C):
            m = chan == c
            s = jnp.sum(jnp.where(m, a, 0.0))
            ss = jnp.sum(jnp.where(m, a * a, 0.0))
            mu = s * inv_count
            var = jnp.maximum(ss * inv_count - mu * mu, 0.0)
            mean_map = jnp.where(m, mu, mean_map)
            var_map = jnp.where(m, var, var_map)
        scale = g_tiled * lax.rsqrt(var_map + EPS)  # [1, L] broadcast over rows
        bias = b_tiled - mean_map * scale
        return jnp.maximum(a * scale + bias, 0.0)

    def conv_like(a, s_ref, q_ref):
        # sum_kh (S_kh @ a) @ Q_kh  -- S/Q already encode stride, padding,
        # kernel taps, weights and the batch block structure.
        acc = None
        for kh in range(3):
            t = jnp.dot(s_ref[kh], a, preferred_element_type=jnp.float32)
            t = jnp.dot(t, q_ref[kh], preferred_element_type=jnp.float32)
            acc = t if acc is None else acc + t
        return acc

    x = x_ref[...]                                             # [N*16, 16*C]

    a1 = bn_relu(x, g1_ref[...], b1_ref[...])
    res1 = conv_like(a1, s1_ref, q1_ref)                       # [N*8, 8*C]

    a2 = bn_relu(res1, g2_ref[...], b2_ref[...])
    res2 = conv_like(a2, s2_ref, q2_ref)                       # [N*4, 4*C]

    a3 = bn_relu(res2, g3_ref[...], b3_ref[...])
    res3 = conv_like(a3, s3_ref, q3_ref)                       # [N*8, 8*C]

    a4 = bn_relu(res3 + res1, g4_ref[...], b4_ref[...])
    res4 = conv_like(a4, s4_ref, q4_ref) + x                   # [N*16, 16*C]

    res4_ref[...] = res4
    res3_ref[...] = res3
    res2_ref[...] = res2


# --------------------- weight-derived operand preparation --------------------

def _conv_matrices(w, n, h, wd):
    """Conv2d(k=3, stride=2, padding=1, bias=False).  w: [Cout, Cin, 3, 3]."""
    cout, cin = w.shape[0], w.shape[1]
    oh, ow = h // 2, wd // 2
    ro = jnp.arange(n * oh)
    ri = jnp.arange(n * h)
    same_n = (ro[:, None] // oh) == (ri[None, :] // h)
    row_hit = [same_n & ((ri[None, :] % h) == 2 * (ro[:, None] % oh) + kh - 1)
               for kh in range(3)]
    S = jnp.stack(row_hit).astype(jnp.float32)                  # [3, n*oh, n*h]
    j = jnp.arange(wd)
    o = jnp.arange(ow)
    k = jnp.arange(3)
    ind = (j[None, :, None] == 2 * o[None, None, :] + k[:, None, None] - 1
           ).astype(jnp.float32)                                # [3, wd, ow]
    # Q[kh][j*Cin+ci, ow*Cout+co] = sum_kw [j == 2*ow+kw-1] * w[co, ci, kh, kw]
    Q = jnp.einsum('kjo,cihk->hjioc', ind, w).reshape(3, wd * cin, ow * cout)
    return S, Q


def _deconv_matrices(w, n, h, wd):
    """ConvTranspose2d(k=3, stride=2, padding=1, output_padding=1, bias=False).
    w: [Cin, Cout, 3, 3] (PyTorch layout)."""
    cin, cout = w.shape[0], w.shape[1]
    oh, ow = 2 * h, 2 * wd
    ro = jnp.arange(n * oh)
    ri = jnp.arange(n * h)
    same_n = (ro[:, None] // oh) == (ri[None, :] // h)
    row_hit = [same_n & ((ro[:, None] % oh) == 2 * (ri[None, :] % h) + kh - 1)
               for kh in range(3)]
    S = jnp.stack(row_hit).astype(jnp.float32)                  # [3, n*oh, n*h]
    j = jnp.arange(wd)
    s = jnp.arange(ow)
    k = jnp.arange(3)
    ind = (s[None, None, :] == 2 * j[None, :, None] + k[:, None, None] - 1
           ).astype(jnp.float32)                                # [3, wd, ow]
    # Q[kh][j*Cin+ci, s*Cout+co] = sum_kw [s == 2*j+kw-1] * w[ci, co, kh, kw]
    Q = jnp.einsum('kjs,ichk->hjisc', ind, w).reshape(3, wd * cin, ow * cout)
    return S, Q


def prepare_operands(params, n, c, h, w):
    """Builds all weight-derived kernel operands (done once, outside the kernel)."""
    s1, q1 = _conv_matrices(params["w1"], n, h, w)              # 16x16 -> 8x8
    s2, q2 = _conv_matrices(params["w2"], n, h // 2, w // 2)    #  8x8  -> 4x4
    s3, q3 = _deconv_matrices(params["w3"], n, h // 4, w // 4)  #  4x4  -> 8x8
    s4, q4 = _deconv_matrices(params["w4"], n, h // 2, w // 2)  #  8x8  -> 16x16

    def tiled(v, width):
        # per-channel vector -> lane pattern v[w*C + c] = vec[c]
        return jnp.tile(v, width).reshape(1, width * c).astype(jnp.float32)

    return (s1, q1, tiled(params["g1"], w), tiled(params["b1"], w),
            s2, q2, tiled(params["g2"], w // 2), tiled(params["b2"], w // 2),
            s3, q3, tiled(params["g3"], w // 4), tiled(params["b3"], w // 4),
            s4, q4, tiled(params["g4"], w // 2), tiled(params["b4"], w // 2))


# ------------------------------ forward wrapper -------------------------------

def aeblock_forward(ops, x_nchw, *, after=True):
    n, c, h, w = x_nchw.shape
    x2d = jnp.transpose(x_nchw, (0, 2, 3, 1)).reshape(n * h, w * c)

    out_shape = (
        jax.ShapeDtypeStruct((n * h, w * c), jnp.float32),            # res4
        jax.ShapeDtypeStruct((n * h // 2, w * c // 2), jnp.float32),  # res3
        jax.ShapeDtypeStruct((n * h // 4, w * c // 4), jnp.float32),  # res2
    )
    kernel = functools.partial(_aeblock_kernel, C=c)
    res4_2d, res3_2d, res2_2d = pl.pallas_call(kernel, out_shape=out_shape)(x2d, *ops)

    def to_nchw(t, hh, ww):
        return jnp.transpose(t.reshape(n, hh, ww, c), (0, 3, 1, 2))

    res4 = to_nchw(res4_2d, h, w)
    res3 = to_nchw(res3_2d, h // 2, w // 2)
    res2 = to_nchw(res2_2d, h // 4, w // 4)
    if after:
        return res4, res3, res2
    return res4


# ----------------------------- pure-JAX reference -----------------------------

def _ref_bn_relu(x, gamma, beta, eps=EPS):
    mean = jnp.mean(x, axis=(0, 2, 3), keepdims=True)
    var = jnp.mean(jnp.square(x - mean), axis=(0, 2, 3), keepdims=True)
    xn = (x - mean) / jnp.sqrt(var + eps)
    return jnp.maximum(xn * gamma[None, :, None, None] + beta[None, :, None, None], 0.0)


def _ref_conv(x, w):
    return lax.conv_general_dilated(
        x, w, (2, 2), ((1, 1), (1, 1)),
        dimension_numbers=("NCHW", "OIHW", "NCHW"),
        precision=lax.Precision.HIGHEST)


def _ref_deconv(x, w_t):
    w = jnp.transpose(w_t[:, :, ::-1, ::-1], (1, 0, 2, 3))   # -> [Cout, Cin, kh, kw]
    return lax.conv_general_dilated(
        x, w, (1, 1), ((1, 2), (1, 2)), lhs_dilation=(2, 2),
        dimension_numbers=("NCHW", "OIHW", "NCHW"),
        precision=lax.Precision.HIGHEST)


def ref_forward(params, x):
    res1 = _ref_conv(_ref_bn_relu(x, params["g1"], params["b1"]), params["w1"])
    res2 = _ref_conv(_ref_bn_relu(res1, params["g2"], params["b2"]), params["w2"])
    res3 = _ref_deconv(_ref_bn_relu(res2, params["g3"], params["b3"]), params["w3"])
    res4 = _ref_deconv(_ref_bn_relu(res3 + res1, params["g4"], params["b4"]),
                       params["w4"])
    res4 = res4 + x
    return res4, res3, res2


# ----------------------------------- main --------------------------------------

def init_params(depth, key):
    ks = jax.random.split(key, 12)
    p = {}
    # Conv2d weights: [Cout, Cin, 3, 3]; ConvTranspose2d weights: [Cin, Cout, 3, 3]
    p["w1"] = 0.1 * jax.random.normal(ks[0], (depth, depth, 3, 3), jnp.float32)
    p["w2"] = 0.1 * jax.random.normal(ks[1], (depth, depth, 3, 3), jnp.float32)
    p["w3"] = 0.1 * jax.random.normal(ks[2], (depth, depth, 3, 3), jnp.float32)
    p["w4"] = 0.1 * jax.random.normal(ks[3], (depth, depth, 3, 3), jnp.float32)
    for i, (gk, bk) in enumerate(zip(ks[4:8], ks[8:12]), start=1):
        p[f"g{i}"] = 1.0 + 0.1 * jax.random.normal(gk, (depth,), jnp.float32)
        p[f"b{i}"] = 0.1 * jax.random.normal(bk, (depth,), jnp.float32)
    return p


if __name__ == "__main__":
    depth, batch, spatial = 4, 2, 16
    key = jax.random.PRNGKey(0)
    pkey, xkey = jax.random.split(key)
    params = init_params(depth, pkey)
    x = jax.random.normal(xkey, (batch, depth, spatial, spatial), jnp.float32)

    # Weight-derived constants prepared once (outside the hot path).
    ops = prepare_operands(params, batch, depth, spatial, spatial)
    ops = jax.tree_util.tree_map(jax.block_until_ready, ops)

    fwd = jax.jit(aeblock_forward)
    res4, res3, res2 = fwd(ops, x)
    jax.block_until_ready((res4, res3, res2))

    r4, r3, r2 = jax.jit(functools.partial(ref_forward, params))(x)
    jax.block_until_ready((r4, r3, r2))

    assert res4.shape == (batch, depth, spatial, spatial)
    assert res3.shape == (batch, depth, spatial // 2, spatial // 2)
    assert res2.shape == (batch, depth, spatial // 4, spatial // 4)

    for name, got, want in [("res4", res4, r4), ("res3", res3, r3), ("res2", res2, r2)]:
        err = float(jnp.max(jnp.abs(got - want)))
        if not (err < 5e-2):
            raise AssertionError(f"{name} mismatch vs reference: max abs err {err}")

    print("KERNEL_OK")
</pallas_src>

<mosaic_0001>
module attributes {stable_mosaic.version = 11 : i64} {
  func.func @_aeblock_kernel(%arg0: memref<32x64xf32, #tpu.memory_space<vmem>>, %arg1: memref<3x16x32xf32, #tpu.memory_space<vmem>>, %arg2: memref<3x64x32xf32, #tpu.memory_space<vmem>>, %arg3: memref<1x64xf32, #tpu.memory_space<vmem>>, %arg4: memref<1x64xf32, #tpu.memory_space<vmem>>, %arg5: memref<3x8x16xf32, #tpu.memory_space<vmem>>, %arg6: memref<3x32x16xf32, #tpu.memory_space<vmem>>, %arg7: memref<1x32xf32, #tpu.memory_space<vmem>>, %arg8: memref<1x32xf32, #tpu.memory_space<vmem>>, %arg9: memref<3x16x8xf32, #tpu.memory_space<vmem>>, %arg10: memref<3x16x32xf32, #tpu.memory_space<vmem>>, %arg11: memref<1x16xf32, #tpu.memory_space<vmem>>, %arg12: memref<1x16xf32, #tpu.memory_space<vmem>>, %arg13: memref<3x32x16xf32, #tpu.memory_space<vmem>>, %arg14: memref<3x32x64xf32, #tpu.memory_space<vmem>>, %arg15: memref<1x32xf32, #tpu.memory_space<vmem>>, %arg16: memref<1x32xf32, #tpu.memory_space<vmem>>, %arg17: memref<32x64xf32, #tpu.memory_space<vmem>>, %arg18: memref<16x32xf32, #tpu.memory_space<vmem>>, %arg19: memref<8x16xf32, #tpu.memory_space<vmem>>) attributes {dimension_semantics = [], scalar_prefetch = 0 : i64, scratch_operands = 0 : i64, tpu.core_type = #tpu.core_type<tc>} {
    %c0 = arith.constant 0 : index
    %c0_0 = arith.constant 0 : index
    %0 = vector.load %arg0[%c0, %c0_0] : memref<32x64xf32, #tpu.memory_space<vmem>>, vector<32x64xf32>
    %c0_1 = arith.constant 0 : index
    %c0_2 = arith.constant 0 : index
    %1 = vector.load %arg3[%c0_1, %c0_2] : memref<1x64xf32, #tpu.memory_space<vmem>>, vector<1x64xf32>
    %c0_3 = arith.constant 0 : index
    %c0_4 = arith.constant 0 : index
    %2 = vector.load %arg4[%c0_3, %c0_4] : memref<1x64xf32, #tpu.memory_space<vmem>>, vector<1x64xf32>
    %3 = tpu.iota {dimensions = array<i32: 1>} : vector<32x64xi32>
    %c3_i32 = arith.constant 3 : i32
    %4 = vector.broadcast %c3_i32 : i32 to vector<32x64xi32>
    %5 = arith.andi %3, %4 : vector<32x64xi32>
    %cst = arith.constant 0.000000e+00 : f32
    %6 = vector.broadcast %cst : f32 to vector<32x64xf32>
    %cst_5 = arith.constant 0.000000e+00 : f32
    %7 = vector.broadcast %cst_5 : f32 to vector<32x64xf32>
    %c0_i32 = arith.constant 0 : i32
    %8 = vector.broadcast %c0_i32 : i32 to vector<32x64xi32>
    %9 = arith.cmpi eq, %5, %8 : vector<32x64xi32>
    %cst_6 = arith.constant 0.000000e+00 : f32
    %10 = vector.broadcast %cst_6 : f32 to vector<32x64xf32>
    %11 = arith.select %9, %0, %10 : vector<32x64xi1>, vector<32x64xf32>
    %12 = vector.shape_cast %11 : vector<32x64xf32> to vector<1x32x64xf32>
    %cst_7 = arith.constant dense<0.000000e+00> : vector<1xf32>
    %13 = vector.multi_reduction <add>, %12, %cst_7 [1, 2] : vector<1x32x64xf32> to vector<1xf32>
    %14 = vector.shape_cast %13 : vector<1xf32> to vector<1x1x1xf32>
    %15 = vector.extract %14[0, 0, 0] : f32 from vector<1x1x1xf32>
    %16 = arith.mulf %0, %0 : vector<32x64xf32>
    %cst_8 = arith.constant 0.000000e+00 : f32
    %17 = vector.broadcast %cst_8 : f32 to vector<32x64xf32>
    %18 = arith.select %9, %16, %17 : vector<32x64xi1>, vector<32x64xf32>
    %19 = vector.shape_cast %18 : vector<32x64xf32> to vector<1x32x64xf32>
    %cst_9 = arith.constant dense<0.000000e+00> : vector<1xf32>
    %20 = vector.multi_reduction <add>, %19, %cst_9 [1, 2] : vector<1x32x64xf32> to vector<1xf32>
    %21 = vector.shape_cast %20 : vector<1xf32> to vector<1x1x1xf32>
    %22 = vector.extract %21[0, 0, 0] : f32 from vector<1x1x1xf32>
    %cst_10 = arith.constant 0.001953125 : f32
    %23 = arith.mulf %15, %cst_10 : f32
    %cst_11 = arith.constant 0.001953125 : f32
    %24 = arith.mulf %22, %cst_11 : f32
    %25 = arith.mulf %23, %23 : f32
    %26 = arith.subf %24, %25 : f32
    %cst_12 = arith.constant 0.000000e+00 : f32
    %27 = arith.maximumf %26, %cst_12 : f32
    %28 = vector.broadcast %23 : f32 to vector<32x64xf32>
    %29 = arith.select %9, %28, %6 : vector<32x64xi1>, vector<32x64xf32>
    %30 = vector.broadcast %27 : f32 to vector<32x64xf32>
    %31 = arith.select %9, %30, %7 : vector<32x64xi1>, vector<32x64xf32>
    %c1_i32 = arith.constant 1 : i32
    %32 = vector.broadcast %c1_i32 : i32 to vector<32x64xi32>
    %33 = arith.cmpi eq, %5, %32 : vector<32x64xi32>
    %cst_13 = arith.constant 0.000000e+00 : f32
    %34 = vector.broadcast %cst_13 : f32 to vector<32x64xf32>
    %35 = arith.select %33, %0, %34 : vector<32x64xi1>, vector<32x64xf32>
    %36 = vector.shape_cast %35 : vector<32x64xf32> to vector<1x32x64xf32>
    %cst_14 = arith.constant dense<0.000000e+00> : vector<1xf32>
    %37 = vector.multi_reduction <add>, %36, %cst_14 [1, 2] : vector<1x32x64xf32> to vector<1xf32>
    %38 = vector.shape_cast %37 : vector<1xf32> to vector<1x1x1xf32>
    %39 = vector.extract %38[0, 0, 0] : f32 from vector<1x1x1xf32>
    %40 = arith.mulf %0, %0 : vector<32x64xf32>
    %cst_15 = arith.constant 0.000000e+00 : f32
    %41 = vector.broadcast %cst_15 : f32 to vector<32x64xf32>
    %42 = arith.select %33, %40, %41 : vector<32x64xi1>, vector<32x64xf32>
    %43 = vector.shape_cast %42 : vector<32x64xf32> to vector<1x32x64xf32>
    %cst_16 = arith.constant dense<0.000000e+00> : vector<1xf32>
    %44 = vector.multi_reduction <add>, %43, %cst_16 [1, 2] : vector<1x32x64xf32> to vector<1xf32>
    %45 = vector.shape_cast %44 : vector<1xf32> to vector<1x1x1xf32>
    %46 = vector.extract %45[0, 0, 0] : f32 from vector<1x1x1xf32>
    %cst_17 = arith.constant 0.001953125 : f32
    %47 = arith.mulf %39, %cst_17 : f32
    %cst_18 = arith.constant 0.001953125 : f32
    %48 = arith.mulf %46, %cst_18 : f32
    %49 = arith.mulf %47, %47 : f32
    %50 = arith.subf %48, %49 : f32
    %cst_19 = arith.constant 0.000000e+00 : f32
    %51 = arith.maximumf %50, %cst_19 : f32
    %52 = vector.broadcast %47 : f32 to vector<32x64xf32>
    %53 = arith.select %33, %52, %29 : vector<32x64xi1>, vector<32x64xf32>
    %54 = vector.broadcast %51 : f32 to vector<32x64xf32>
    %55 = arith.select %33, %54, %31 : vector<32x64xi1>, vector<32x64xf32>
    %c2_i32 = arith.constant 2 : i32
    %56 = vector.broadcast %c2_i32 : i32 to vector<32x64xi32>
    %57 = arith.cmpi eq, %5, %56 : vector<32x64xi32>
    %cst_20 = arith.constant 0.000000e+00 : f32
    %58 = vector.broadcast %cst_20 : f32 to vector<32x64xf32>
    %59 = arith.select %57, %0, %58 : vector<32x64xi1>, vector<32x64xf32>
    %60 = vector.shape_cast %59 : vector<32x64xf32> to vector<1x32x64xf32>
    %cst_21 = arith.constant dense<0.000000e+00> : vector<1xf32>
    %61 = vector.multi_reduction <add>, %60, %cst_21 [1, 2] : vector<1x32x64xf32> to vector<1xf32>
    %62 = vector.shape_cast %61 : vector<1xf32> to vector<1x1x1xf32>
    %63 = vector.extract %62[0, 0, 0] : f32 from vector<1x1x1xf32>
    %64 = arith.mulf %0, %0 : vector<32x64xf32>
    %cst_22 = arith.constant 0.000000e+00 : f32
    %65 = vector.broadcast %cst_22 : f32 to vector<32x64xf32>
    %66 = arith.select %57, %64, %65 : vector<32x64xi1>, vector<32x64xf32>
    %67 = vector.shape_cast %66 : vector<32x64xf32> to vector<1x32x64xf32>
    %cst_23 = arith.constant dense<0.000000e+00> : vector<1xf32>
    %68 = vector.multi_reduction <add>, %67, %cst_23 [1, 2] : vector<1x32x64xf32> to vector<1xf32>
    %69 = vector.shape_cast %68 : vector<1xf32> to vector<1x1x1xf32>
    %70 = vector.extract %69[0, 0, 0] : f32 from vector<1x1x1xf32>
    %cst_24 = arith.constant 0.001953125 : f32
    %71 = arith.mulf %63, %cst_24 : f32
    %cst_25 = arith.constant 0.001953125 : f32
    %72 = arith.mulf %70, %cst_25 : f32
    %73 = arith.mulf %71, %71 : f32
    %74 = arith.subf %72, %73 : f32
    %cst_26 = arith.constant 0.000000e+00 : f32
    %75 = arith.maximumf %74, %cst_26 : f32
    %76 = vector.broadcast %71 : f32 to vector<32x64xf32>
    %77 = arith.select %57, %76, %53 : vector<32x64xi1>, vector<32x64xf32>
    %78 = vector.broadcast %75 : f32 to vector<32x64xf32>
    %79 = arith.select %57, %78, %55 : vector<32x64xi1>, vector<32x64xf32>
    %c3_i32_27 = arith.constant 3 : i32
    %80 = vector.broadcast %c3_i32_27 : i32 to vector<32x64xi32>
    %81 = arith.cmpi eq, %5, %80 : vector<32x64xi32>
    %cst_28 = arith.constant 0.000000e+00 : f32
    %82 = vector.broadcast %cst_28 : f32 to vector<32x64xf32>
    %83 = arith.select %81, %0, %82 : vector<32x64xi1>, vector<32x64xf32>
    %84 = vector.shape_cast %83 : vector<32x64xf32> to vector<1x32x64xf32>
    %cst_29 = arith.constant dense<0.000000e+00> : vector<1xf32>
    %85 = vector.multi_reduction <add>, %84, %cst_29 [1, 2] : vector<1x32x64xf32> to vector<1xf32>
    %86 = vector.shape_cast %85 : vector<1xf32> to vector<1x1x1xf32>
    %87 = vector.extract %86[0, 0, 0] : f32 from vector<1x1x1xf32>
    %88 = arith.mulf %0, %0 : vector<32x64xf32>
    %cst_30 = arith.constant 0.000000e+00 : f32
    %89 = vector.broadcast %cst_30 : f32 to vector<32x64xf32>
    %90 = arith.select %81, %88, %89 : vector<32x64xi1>, vector<32x64xf32>
    %91 = vector.shape_cast %90 : vector<32x64xf32> to vector<1x32x64xf32>
    %cst_31 = arith.constant dense<0.000000e+00> : vector<1xf32>
    %92 = vector.multi_reduction <add>, %91, %cst_31 [1, 2] : vector<1x32x64xf32> to vector<1xf32>
    %93 = vector.shape_cast %92 : vector<1xf32> to vector<1x1x1xf32>
    %94 = vector.extract %93[0, 0, 0] : f32 from vector<1x1x1xf32>
    %cst_32 = arith.constant 0.001953125 : f32
    %95 = arith.mulf %87, %cst_32 : f32
    %cst_33 = arith.constant 0.001953125 : f32
    %96 = arith.mulf %94, %cst_33 : f32
    %97 = arith.mulf %95, %95 : f32
    %98 = arith.subf %96, %97 : f32
    %cst_34 = arith.constant 0.000000e+00 : f32
    %99 = arith.maximumf %98, %cst_34 : f32
    %100 = vector.broadcast %95 : f32 to vector<32x64xf32>
    %101 = arith.select %81, %100, %77 : vector<32x64xi1>, vector<32x64xf32>
    %102 = vector.broadcast %99 : f32 to vector<32x64xf32>
    %103 = arith.select %81, %102, %79 : vector<32x64xi1>, vector<32x64xf32>
    %cst_35 = arith.constant 9.99999974E-6 : f32
    %104 = vector.broadcast %cst_35 : f32 to vector<32x64xf32>
    %105 = arith.addf %103, %104 : vector<32x64xf32>
    %106 = math.rsqrt %105 : vector<32x64xf32>
    %107 = vector.broadcast %1 : vector<1x64xf32> to vector<32x64xf32>
    %108 = arith.mulf %107, %106 : vector<32x64xf32>
    %109 = arith.mulf %101, %108 : vector<32x64xf32>
    %110 = vector.broadcast %2 : vector<1x64xf32> to vector<32x64xf32>
    %111 = arith.subf %110, %109 : vector<32x64xf32>
    %112 = arith.mulf %0, %108 : vector<32x64xf32>
    %113 = arith.addf %112, %111 : vector<32x64xf32>
    %cst_36 = arith.constant 0.000000e+00 : f32
    %114 = vector.broadcast %cst_36 : f32 to vector<32x64xf32>
    %115 = arith.maximumf %113, %114 : vector<32x64xf32>
    %c0_37 = arith.constant 0 : index
    %c0_38 = arith.constant 0 : index
    %c0_39 = arith.constant 0 : index
    %116 = vector.load %arg1[%c0_37, %c0_38, %c0_39] : memref<3x16x32xf32, #tpu.memory_space<vmem>>, vector<1x16x32xf32>
    %117 = vector.shape_cast %116 : vector<1x16x32xf32> to vector<16x32xf32>
    %cst_40 = arith.constant dense<0.000000e+00> : vector<16x64xf32>
    %118 = tpu.matmul %117, %115, %cst_40 {dimension_numbers = #tpu.dot_dimension_numbers<[1], [0], [0], [1], [0, 0, 1, 1], [], []>} : vector<16x32xf32>, vector<32x64xf32>, vector<16x64xf32> -> vector<16x64xf32>
    %c0_41 = arith.constant 0 : index
    %c0_42 = arith.constant 0 : index
    %c0_43 = arith.constant 0 : index
    %119 = vector.load %arg2[%c0_41, %c0_42, %c0_43] : memref<3x64x32xf32, #tpu.memory_space<vmem>>, vector<1x64x32xf32>
    %120 = vector.shape_cast %119 : vector<1x64x32xf32> to vector<64x32xf32>
    %cst_44 = arith.constant dense<0.000000e+00> : vector<16x32xf32>
    %121 = tpu.matmul %118, %120, %cst_44 {dimension_numbers = #tpu.dot_dimension_numbers<[1], [0], [0], [1], [0, 0, 1, 1], [], []>} : vector<16x64xf32>, vector<64x32xf32>, vector<16x32xf32> -> vector<16x32xf32>
    %c1 = arith.constant 1 : index
    %c0_45 = arith.constant 0 : index
    %c0_46 = arith.constant 0 : index
    %122 = vector.load %arg1[%c1, %c0_45, %c0_46] : memref<3x16x32xf32, #tpu.memory_space<vmem>>, vector<1x16x32xf32>
    %123 = vector.shape_cast %122 : vector<1x16x32xf32> to vector<16x32xf32>
    %cst_47 = arith.constant dense<0.000000e+00> : vector<16x64xf32>
    %124 = tpu.matmul %123, %115, %cst_47 {dimension_numbers = #tpu.dot_dimension_numbers<[1], [0], [0], [1], [0, 0, 1, 1], [], []>} : vector<16x32xf32>, vector<32x64xf32>, vector<16x64xf32> -> vector<16x64xf32>
    %c1_48 = arith.constant 1 : index
    %c0_49 = arith.constant 0 : index
    %c0_50 = arith.constant 0 : index
    %125 = vector.load %arg2[%c1_48, %c0_49, %c0_50] : memref<3x64x32xf32, #tpu.memory_space<vmem>>, vector<1x64x32xf32>
    %126 = vector.shape_cast %125 : vector<1x64x32xf32> to vector<64x32xf32>
    %cst_51 = arith.constant dense<0.000000e+00> : vector<16x32xf32>
    %127 = tpu.matmul %124, %126, %cst_51 {dimension_numbers = #tpu.dot_dimension_numbers<[1], [0], [0], [1], [0, 0, 1, 1], [], []>} : vector<16x64xf32>, vector<64x32xf32>, vector<16x32xf32> -> vector<16x32xf32>
    %128 = arith.addf %121, %127 : vector<16x32xf32>
    %c2 = arith.constant 2 : index
    %c0_52 = arith.constant 0 : index
    %c0_53 = arith.constant 0 : index
    %129 = vector.load %arg1[%c2, %c0_52, %c0_53] : memref<3x16x32xf32, #tpu.memory_space<vmem>>, vector<1x16x32xf32>
    %130 = vector.shape_cast %129 : vector<1x16x32xf32> to vector<16x32xf32>
    %cst_54 = arith.constant dense<0.000000e+00> : vector<16x64xf32>
    %131 = tpu.matmul %130, %115, %cst_54 {dimension_numbers = #tpu.dot_dimension_numbers<[1], [0], [0], [1], [0, 0, 1, 1], [], []>} : vector<16x32xf32>, vector<32x64xf32>, vector<16x64xf32> -> vector<16x64xf32>
    %c2_55 = arith.constant 2 : index
    %c0_56 = arith.constant 0 : index
    %c0_57 = arith.constant 0 : index
    %132 = vector.load %arg2[%c2_55, %c0_56, %c0_57] : memref<3x64x32xf32, #tpu.memory_space<vmem>>, vector<1x64x32xf32>
    %133 = vector.shape_cast %132 : vector<1x64x32xf32> to vector<64x32xf32>
    %cst_58 = arith.constant dense<0.000000e+00> : vector<16x32xf32>
    %134 = tpu.matmul %131, %133, %cst_58 {dimension_numbers = #tpu.dot_dimension_numbers<[1], [0], [0], [1], [0, 0, 1, 1], [], []>} : vector<16x64xf32>, vector<64x32xf32>, vector<16x32xf32> -> vector<16x32xf32>
    %135 = arith.addf %128, %134 : vector<16x32xf32>
    %c0_59 = arith.constant 0 : index
    %c0_60 = arith.constant 0 : index
    %136 = vector.load %arg7[%c0_59, %c0_60] : memref<1x32xf32, #tpu.memory_space<vmem>>, vector<1x32xf32>
    %c0_61 = arith.constant 0 : index
    %c0_62 = arith.constant 0 : index
    %137 = vector.load %arg8[%c0_61, %c0_62] : memref<1x32xf32, #tpu.memory_space<vmem>>, vector<1x32xf32>
    %138 = tpu.iota {dimensions = array<i32: 1>} : vector<16x32xi32>
    %c3_i32_63 = arith.constant 3 : i32
    %139 = vector.broadcast %c3_i32_63 : i32 to vector<16x32xi32>
    %140 = arith.andi %138, %139 : vector<16x32xi32>
    %cst_64 = arith.constant 0.000000e+00 : f32
    %141 = vector.broadcast %cst_64 : f32 to vector<16x32xf32>
    %cst_65 = arith.constant 0.000000e+00 : f32
    %142 = vector.broadcast %cst_65 : f32 to vector<16x32xf32>
    %c0_i32_66 = arith.constant 0 : i32
    %143 = vector.broadcast %c0_i32_66 : i32 to vector<16x32xi32>
    %144 = arith.cmpi eq, %140, %143 : vector<16x32xi32>
    %cst_67 = arith.constant 0.000000e+00 : f32
    %145 = vector.broadcast %cst_67 : f32 to vector<16x32xf32>
    %146 = arith.select %144, %135, %145 : vector<16x32xi1>, vector<16x32xf32>
    %147 = vector.shape_cast %146 : vector<16x32xf32> to vector<1x16x32xf32>
    %cst_68 = arith.constant dense<0.000000e+00> : vector<1xf32>
    %148 = vector.multi_reduction <add>, %147, %cst_68 [1, 2] : vector<1x16x32xf32> to vector<1xf32>
    %149 = vector.shape_cast %148 : vector<1xf32> to vector<1x1x1xf32>
    %150 = vector.extract %149[0, 0, 0] : f32 from vector<1x1x1xf32>
    %151 = arith.mulf %135, %135 : vector<16x32xf32>
    %cst_69 = arith.constant 0.000000e+00 : f32
    %152 = vector.broadcast %cst_69 : f32 to vector<16x32xf32>
    %153 = arith.select %144, %151, %152 : vector<16x32xi1>, vector<16x32xf32>
    %154 = vector.shape_cast %153 : vector<16x32xf32> to vector<1x16x32xf32>
    %cst_70 = arith.constant dense<0.000000e+00> : vector<1xf32>
    %155 = vector.multi_reduction <add>, %154, %cst_70 [1, 2] : vector<1x16x32xf32> to vector<1xf32>
    %156 = vector.shape_cast %155 : vector<1xf32> to vector<1x1x1xf32>
    %157 = vector.extract %156[0, 0, 0] : f32 from vector<1x1x1xf32>
    %cst_71 = arith.constant 7.812500e-03 : f32
    %158 = arith.mulf %150, %cst_71 : f32
    %cst_72 = arith.constant 7.812500e-03 : f32
    %159 = arith.mulf %157, %cst_72 : f32
    %160 = arith.mulf %158, %158 : f32
    %161 = arith.subf %159, %160 : f32
    %cst_73 = arith.constant 0.000000e+00 : f32
    %162 = arith.maximumf %161, %cst_73 : f32
    %163 = vector.broadcast %158 : f32 to vector<16x32xf32>
    %164 = arith.select %144, %163, %141 : vector<16x32xi1>, vector<16x32xf32>
    %165 = vector.broadcast %162 : f32 to vector<16x32xf32>
    %166 = arith.select %144, %165, %142 : vector<16x32xi1>, vector<16x32xf32>
    %c1_i32_74 = arith.constant 1 : i32
    %167 = vector.broadcast %c1_i32_74 : i32 to vector<16x32xi32>
    %168 = arith.cmpi eq, %140, %167 : vector<16x32xi32>
    %cst_75 = arith.constant 0.000000e+00 : f32
    %169 = vector.broadcast %cst_75 : f32 to vector<16x32xf32>
    %170 = arith.select %168, %135, %169 : vector<16x32xi1>, vector<16x32xf32>
    %171 = vector.shape_cast %170 : vector<16x32xf32> to vector<1x16x32xf32>
    %cst_76 = arith.constant dense<0.000000e+00> : vector<1xf32>
    %172 = vector.multi_reduction <add>, %171, %cst_76 [1, 2] : vector<1x16x32xf32> to vector<1xf32>
    %173 = vector.shape_cast %172 : vector<1xf32> to vector<1x1x1xf32>
    %174 = vector.extract %173[0, 0, 0] : f32 from vector<1x1x1xf32>
    %175 = arith.mulf %135, %135 : vector<16x32xf32>
    %cst_77 = arith.constant 0.000000e+00 : f32
    %176 = vector.broadcast %cst_77 : f32 to vector<16x32xf32>
    %177 = arith.select %168, %175, %176 : vector<16x32xi1>, vector<16x32xf32>
    %178 = vector.shape_cast %177 : vector<16x32xf32> to vector<1x16x32xf32>
    %cst_78 = arith.constant dense<0.000000e+00> : vector<1xf32>
    %179 = vector.multi_reduction <add>, %178, %cst_78 [1, 2] : vector<1x16x32xf32> to vector<1xf32>
    %180 = vector.shape_cast %179 : vector<1xf32> to vector<1x1x1xf32>
    %181 = vector.extract %180[0, 0, 0] : f32 from vector<1x1x1xf32>
    %cst_79 = arith.constant 7.812500e-03 : f32
    %182 = arith.mulf %174, %cst_79 : f32
    %cst_80 = arith.constant 7.812500e-03 : f32
    %183 = arith.mulf %181, %cst_80 : f32
    %184 = arith.mulf %182, %182 : f32
    %185 = arith.subf %183, %184 : f32
    %cst_81 = arith.constant 0.000000e+00 : f32
    %186 = arith.maximumf %185, %cst_81 : f32
    %187 = vector.broadcast %182 : f32 to vector<16x32xf32>
    %188 = arith.select %168, %187, %164 : vector<16x32xi1>, vector<16x32xf32>
    %189 = vector.broadcast %186 : f32 to vector<16x32xf32>
    %190 = arith.select %168, %189, %166 : vector<16x32xi1>, vector<16x32xf32>
    %c2_i32_82 = arith.constant 2 : i32
    %191 = vector.broadcast %c2_i32_82 : i32 to vector<16x32xi32>
    %192 = arith.cmpi eq, %140, %191 : vector<16x32xi32>
    %cst_83 = arith.constant 0.000000e+00 : f32
    %193 = vector.broadcast %cst_83 : f32 to vector<16x32xf32>
    %194 = arith.select %192, %135, %193 : vector<16x32xi1>, vector<16x32xf32>
    %195 = vector.shape_cast %194 : vector<16x32xf32> to vector<1x16x32xf32>
    %cst_84 = arith.constant dense<0.000000e+00> : vector<1xf32>
    %196 = vector.multi_reduction <add>, %195, %cst_84 [1, 2] : vector<1x16x32xf32> to vector<1xf32>
    %197 = vector.shape_cast %196 : vector<1xf32> to vector<1x1x1xf32>
    %198 = vector.extract %197[0, 0, 0] : f32 from vector<1x1x1xf32>
    %199 = arith.mulf %135, %135 : vector<16x32xf32>
    %cst_85 = arith.constant 0.000000e+00 : f32
    %200 = vector.broadcast %cst_85 : f32 to vector<16x32xf32>
    %201 = arith.select %192, %199, %200 : vector<16x32xi1>, vector<16x32xf32>
    %202 = vector.shape_cast %201 : vector<16x32xf32> to vector<1x16x32xf32>
    %cst_86 = arith.constant dense<0.000000e+00> : vector<1xf32>
    %203 = vector.multi_reduction <add>, %202, %cst_86 [1, 2] : vector<1x16x32xf32> to vector<1xf32>
    %204 = vector.shape_cast %203 : vector<1xf32> to vector<1x1x1xf32>
    %205 = vector.extract %204[0, 0, 0] : f32 from vector<1x1x1xf32>
    %cst_87 = arith.constant 7.812500e-03 : f32
    %206 = arith.mulf %198, %cst_87 : f32
    %cst_88 = arith.constant 7.812500e-03 : f32
    %207 = arith.mulf %205, %cst_88 : f32
    %208 = arith.mulf %206, %206 : f32
    %209 = arith.subf %207, %208 : f32
    %cst_89 = arith.constant 0.000000e+00 : f32
    %210 = arith.maximumf %209, %cst_89 : f32
    %211 = vector.broadcast %206 : f32 to vector<16x32xf32>
    %212 = arith.select %192, %211, %188 : vector<16x32xi1>, vector<16x32xf32>
    %213 = vector.broadcast %210 : f32 to vector<16x32xf32>
    %214 = arith.select %192, %213, %190 : vector<16x32xi1>, vector<16x32xf32>
    %c3_i32_90 = arith.constant 3 : i32
    %215 = vector.broadcast %c3_i32_90 : i32 to vector<16x32xi32>
    %216 = arith.cmpi eq, %140, %215 : vector<16x32xi32>
    %cst_91 = arith.constant 0.000000e+00 : f32
    %217 = vector.broadcast %cst_91 : f32 to vector<16x32xf32>
    %218 = arith.select %216, %135, %217 : vector<16x32xi1>, vector<16x32xf32>
    %219 = vector.shape_cast %218 : vector<16x32xf32> to vector<1x16x32xf32>
    %cst_92 = arith.constant dense<0.000000e+00> : vector<1xf32>
    %220 = vector.multi_reduction <add>, %219, %cst_92 [1, 2] : vector<1x16x32xf32> to vector<1xf32>
    %221 = vector.shape_cast %220 : vector<1xf32> to vector<1x1x1xf32>
    %222 = vector.extract %221[0, 0, 0] : f32 from vector<1x1x1xf32>
    %223 = arith.mulf %135, %135 : vector<16x32xf32>
    %cst_93 = arith.constant 0.000000e+00 : f32
    %224 = vector.broadcast %cst_93 : f32 to vector<16x32xf32>
    %225 = arith.select %216, %223, %224 : vector<16x32xi1>, vector<16x32xf32>
    %226 = vector.shape_cast %225 : vector<16x32xf32> to vector<1x16x32xf32>
    %cst_94 = arith.constant dense<0.000000e+00> : vector<1xf32>
    %227 = vector.multi_reduction <add>, %226, %cst_94 [1, 2] : vector<1x16x32xf32> to vector<1xf32>
    %228 = vector.shape_cast %227 : vector<1xf32> to vector<1x1x1xf32>
    %229 = vector.extract %228[0, 0, 0] : f32 from vector<1x1x1xf32>
    %cst_95 = arith.constant 7.812500e-03 : f32
    %230 = arith.mulf %222, %cst_95 : f32
    %cst_96 = arith.constant 7.812500e-03 : f32
    %231 = arith.mulf %229, %cst_96 : f32
    %232 = arith.mulf %230, %230 : f32
    %233 = arith.subf %231, %232 : f32
    %cst_97 = arith.constant 0.000000e+00 : f32
    %234 = arith.maximumf %233, %cst_97 : f32
    %235 = vector.broadcast %230 : f32 to vector<16x32xf32>
    %236 = arith.select %216, %235, %212 : vector<16x32xi1>, vector<16x32xf32>
    %237 = vector.broadcast %234 : f32 to vector<16x32xf32>
    %238 = arith.select %216, %237, %214 : vector<16x32xi1>, vector<16x32xf32>
    %cst_98 = arith.constant 9.99999974E-6 : f32
    %239 = vector.broadcast %cst_98 : f32 to vector<16x32xf32>
    %240 = arith.addf %238, %239 : vector<16x32xf32>
    %241 = math.rsqrt %240 : vector<16x32xf32>
    %242 = vector.broadcast %136 : vector<1x32xf32> to vector<16x32xf32>
    %243 = arith.mulf %242, %241 : vector<16x32xf32>
    %244 = arith.mulf %236, %243 : vector<16x32xf32>
    %245 = vector.broadcast %137 : vector<1x32xf32> to vector<16x32xf32>
    %246 = arith.subf %245, %244 : vector<16x32xf32>
    %247 = arith.mulf %135, %243 : vector<16x32xf32>
    %248 = arith.addf %247, %246 : vector<16x32xf32>
    %cst_99 = arith.constant 0.000000e+00 : f32
    %249 = vector.broadcast %cst_99 : f32 to vector<16x32xf32>
    %250 = arith.maximumf %248, %249 : vector<16x32xf32>
    %c0_100 = arith.constant 0 : index
    %c0_101 = arith.constant 0 : index
    %c0_102 = arith.constant 0 : index
    %251 = vector.load %arg5[%c0_100, %c0_101, %c0_102] : memref<3x8x16xf32, #tpu.memory_space<vmem>>, vector<1x8x16xf32>
    %252 = vector.shape_cast %251 : vector<1x8x16xf32> to vector<8x16xf32>
    %cst_103 = arith.constant dense<0.000000e+00> : vector<8x32xf32>
    %253 = tpu.matmul %252, %250, %cst_103 {dimension_numbers = #tpu.dot_dimension_numbers<[1], [0], [0], [1], [0, 0, 1, 1], [], []>} : vector<8x16xf32>, vector<16x32xf32>, vector<8x32xf32> -> vector<8x32xf32>
    %c0_104 = arith.constant 0 : index
    %c0_105 = arith.constant 0 : index
    %c0_106 = arith.constant 0 : index
    %254 = vector.load %arg6[%c0_104, %c0_105, %c0_106] : memref<3x32x16xf32, #tpu.memory_space<vmem>>, vector<1x32x16xf32>
    %255 = vector.shape_cast %254 : vector<1x32x16xf32> to vector<32x16xf32>
    %cst_107 = arith.constant dense<0.000000e+00> : vector<8x16xf32>
    %256 = tpu.matmul %253, %255, %cst_107 {dimension_numbers = #tpu.dot_dimension_numbers<[1], [0], [0], [1], [0, 0, 1, 1], [], []>} : vector<8x32xf32>, vector<32x16xf32>, vector<8x16xf32> -> vector<8x16xf32>
    %c1_108 = arith.constant 1 : index
    %c0_109 = arith.constant 0 : index
    %c0_110 = arith.constant 0 : index
    %257 = vector.load %arg5[%c1_108, %c0_109, %c0_110] : memref<3x8x16xf32, #tpu.memory_space<vmem>>, vector<1x8x16xf32>
    %258 = vector.shape_cast %257 : vector<1x8x16xf32> to vector<8x16xf32>
    %cst_111 = arith.constant dense<0.000000e+00> : vector<8x32xf32>
    %259 = tpu.matmul %258, %250, %cst_111 {dimension_numbers = #tpu.dot_dimension_numbers<[1], [0], [0], [1], [0, 0, 1, 1], [], []>} : vector<8x16xf32>, vector<16x32xf32>, vector<8x32xf32> -> vector<8x32xf32>
    %c1_112 = arith.constant 1 : index
    %c0_113 = arith.constant 0 : index
    %c0_114 = arith.constant 0 : index
    %260 = vector.load %arg6[%c1_112, %c0_113, %c0_114] : memref<3x32x16xf32, #tpu.memory_space<vmem>>, vector<1x32x16xf32>
    %261 = vector.shape_cast %260 : vector<1x32x16xf32> to vector<32x16xf32>
    %cst_115 = arith.constant dense<0.000000e+00> : vector<8x16xf32>
    %262 = tpu.matmul %259, %261, %cst_115 {dimension_numbers = #tpu.dot_dimension_numbers<[1], [0], [0], [1], [0, 0, 1, 1], [], []>} : vector<8x32xf32>, vector<32x16xf32>, vector<8x16xf32> -> vector<8x16xf32>
    %263 = arith.addf %256, %262 : vector<8x16xf32>
    %c2_116 = arith.constant 2 : index
    %c0_117 = arith.constant 0 : index
    %c0_118 = arith.constant 0 : index
    %264 = vector.load %arg5[%c2_116, %c0_117, %c0_118] : memref<3x8x16xf32, #tpu.memory_space<vmem>>, vector<1x8x16xf32>
    %265 = vector.shape_cast %264 : vector<1x8x16xf32> to vector<8x16xf32>
    %cst_119 = arith.constant dense<0.000000e+00> : vector<8x32xf32>
    %266 = tpu.matmul %265, %250, %cst_119 {dimension_numbers = #tpu.dot_dimension_numbers<[1], [0], [0], [1], [0, 0, 1, 1], [], []>} : vector<8x16xf32>, vector<16x32xf32>, vector<8x32xf32> -> vector<8x32xf32>
    %c2_120 = arith.constant 2 : index
    %c0_121 = arith.constant 0 : index
    %c0_122 = arith.constant 0 : index
    %267 = vector.load %arg6[%c2_120, %c0_121, %c0_122] : memref<3x32x16xf32, #tpu.memory_space<vmem>>, vector<1x32x16xf32>
    %268 = vector.shape_cast %267 : vector<1x32x16xf32> to vector<32x16xf32>
    %cst_123 = arith.constant dense<0.000000e+00> : vector<8x16xf32>
    %269 = tpu.matmul %266, %268, %cst_123 {dimension_numbers = #tpu.dot_dimension_numbers<[1], [0], [0], [1], [0, 0, 1, 1], [], []>} : vector<8x32xf32>, vector<32x16xf32>, vector<8x16xf32> -> vector<8x16xf32>
    %270 = arith.addf %263, %269 : vector<8x16xf32>
    %c0_124 = arith.constant 0 : index
    %c0_125 = arith.constant 0 : index
    %271 = vector.load %arg11[%c0_124, %c0_125] : memref<1x16xf32, #tpu.memory_space<vmem>>, vector<1x16xf32>
    %c0_126 = arith.constant 0 : index
    %c0_127 = arith.constant 0 : index
    %272 = vector.load %arg12[%c0_126, %c0_127] : memref<1x16xf32, #tpu.memory_space<vmem>>, vector<1x16xf32>
    %273 = tpu.iota {dimensions = array<i32: 1>} : vector<8x16xi32>
    %c3_i32_128 = arith.constant 3 : i32
    %274 = vector.broadcast %c3_i32_128 : i32 to vector<8x16xi32>
    %275 = arith.andi %273, %274 : vector<8x16xi32>
    %cst_129 = arith.constant 0.000000e+00 : f32
    %276 = vector.broadcast %cst_129 : f32 to vector<8x16xf32>
    %cst_130 = arith.constant 0.000000e+00 : f32
    %277 = vector.broadcast %cst_130 : f32 to vector<8x16xf32>
    %c0_i32_131 = arith.constant 0 : i32
    %278 = vector.broadcast %c0_i32_131 : i32 to vector<8x16xi32>
    %279 = arith.cmpi eq, %275, %278 : vector<8x16xi32>
    %cst_132 = arith.constant 0.000000e+00 : f32
    %280 = vector.broadcast %cst_132 : f32 to vector<8x16xf32>
    %281 = arith.select %279, %270, %280 : vector<8x16xi1>, vector<8x16xf32>
    %282 = vector.shape_cast %281 : vector<8x16xf32> to vector<1x8x16xf32>
    %cst_133 = arith.constant dense<0.000000e+00> : vector<1xf32>
    %283 = vector.multi_reduction <add>, %282, %cst_133 [1, 2] : vector<1x8x16xf32> to vector<1xf32>
    %284 = vector.shape_cast %283 : vector<1xf32> to vector<1x1x1xf32>
    %285 = vector.extract %284[0, 0, 0] : f32 from vector<1x1x1xf32>
    %286 = arith.mulf %270, %270 : vector<8x16xf32>
    %cst_134 = arith.constant 0.000000e+00 : f32
    %287 = vector.broadcast %cst_134 : f32 to vector<8x16xf32>
    %288 = arith.select %279, %286, %287 : vector<8x16xi1>, vector<8x16xf32>
    %289 = vector.shape_cast %288 : vector<8x16xf32> to vector<1x8x16xf32>
    %cst_135 = arith.constant dense<0.000000e+00> : vector<1xf32>
    %290 = vector.multi_reduction <add>, %289, %cst_135 [1, 2] : vector<1x8x16xf32> to vector<1xf32>
    %291 = vector.shape_cast %290 : vector<1xf32> to vector<1x1x1xf32>
    %292 = vector.extract %291[0, 0, 0] : f32 from vector<1x1x1xf32>
    %cst_136 = arith.constant 3.125000e-02 : f32
    %293 = arith.mulf %285, %cst_136 : f32
    %cst_137 = arith.constant 3.125000e-02 : f32
    %294 = arith.mulf %292, %cst_137 : f32
    %295 = arith.mulf %293, %293 : f32
    %296 = arith.subf %294, %295 : f32
    %cst_138 = arith.constant 0.000000e+00 : f32
    %297 = arith.maximumf %296, %cst_138 : f32
    %298 = vector.broadcast %293 : f32 to vector<8x16xf32>
    %299 = arith.select %279, %298, %276 : vector<8x16xi1>, vector<8x16xf32>
    %300 = vector.broadcast %297 : f32 to vector<8x16xf32>
    %301 = arith.select %279, %300, %277 : vector<8x16xi1>, vector<8x16xf32>
    %c1_i32_139 = arith.constant 1 : i32
    %302 = vector.broadcast %c1_i32_139 : i32 to vector<8x16xi32>
    %303 = arith.cmpi eq, %275, %302 : vector<8x16xi32>
    %cst_140 = arith.constant 0.000000e+00 : f32
    %304 = vector.broadcast %cst_140 : f32 to vector<8x16xf32>
    %305 = arith.select %303, %270, %304 : vector<8x16xi1>, vector<8x16xf32>
    %306 = vector.shape_cast %305 : vector<8x16xf32> to vector<1x8x16xf32>
    %cst_141 = arith.constant dense<0.000000e+00> : vector<1xf32>
    %307 = vector.multi_reduction <add>, %306, %cst_141 [1, 2] : vector<1x8x16xf32> to vector<1xf32>
    %308 = vector.shape_cast %307 : vector<1xf32> to vector<1x1x1xf32>
    %309 = vector.extract %308[0, 0, 0] : f32 from vector<1x1x1xf32>
    %310 = arith.mulf %270, %270 : vector<8x16xf32>
    %cst_142 = arith.constant 0.000000e+00 : f32
    %311 = vector.broadcast %cst_142 : f32 to vector<8x16xf32>
    %312 = arith.select %303, %310, %311 : vector<8x16xi1>, vector<8x16xf32>
    %313 = vector.shape_cast %312 : vector<8x16xf32> to vector<1x8x16xf32>
    %cst_143 = arith.constant dense<0.000000e+00> : vector<1xf32>
    %314 = vector.multi_reduction <add>, %313, %cst_143 [1, 2] : vector<1x8x16xf32> to vector<1xf32>
    %315 = vector.shape_cast %314 : vector<1xf32> to vector<1x1x1xf32>
    %316 = vector.extract %315[0, 0, 0] : f32 from vector<1x1x1xf32>
    %cst_144 = arith.constant 3.125000e-02 : f32
    %317 = arith.mulf %309, %cst_144 : f32
    %cst_145 = arith.constant 3.125000e-02 : f32
    %318 = arith.mulf %316, %cst_145 : f32
    %319 = arith.mulf %317, %317 : f32
    %320 = arith.subf %318, %319 : f32
    %cst_146 = arith.constant 0.000000e+00 : f32
    %321 = arith.maximumf %320, %cst_146 : f32
    %322 = vector.broadcast %317 : f32 to vector<8x16xf32>
    %323 = arith.select %303, %322, %299 : vector<8x16xi1>, vector<8x16xf32>
    %324 = vector.broadcast %321 : f32 to vector<8x16xf32>
    %325 = arith.select %303, %324, %301 : vector<8x16xi1>, vector<8x16xf32>
    %c2_i32_147 = arith.constant 2 : i32
    %326 = vector.broadcast %c2_i32_147 : i32 to vector<8x16xi32>
    %327 = arith.cmpi eq, %275, %326 : vector<8x16xi32>
    %cst_148 = arith.constant 0.000000e+00 : f32
    %328 = vector.broadcast %cst_148 : f32 to vector<8x16xf32>
    %329 = arith.select %327, %270, %328 : vector<8x16xi1>, vector<8x16xf32>
    %330 = vector.shape_cast %329 : vector<8x16xf32> to vector<1x8x16xf32>
    %cst_149 = arith.constant dense<0.000000e+00> : vector<1xf32>
    %331 = vector.multi_reduction <add>, %330, %cst_149 [1, 2] : vector<1x8x16xf32> to vector<1xf32>
    %332 = vector.shape_cast %331 : vector<1xf32> to vector<1x1x1xf32>
    %333 = vector.extract %332[0, 0, 0] : f32 from vector<1x1x1xf32>
    %334 = arith.mulf %270, %270 : vector<8x16xf32>
    %cst_150 = arith.constant 0.000000e+00 : f32
    %335 = vector.broadcast %cst_150 : f32 to vector<8x16xf32>
    %336 = arith.select %327, %334, %335 : vector<8x16xi1>, vector<8x16xf32>
    %337 = vector.shape_cast %336 : vector<8x16xf32> to vector<1x8x16xf32>
    %cst_151 = arith.constant dense<0.000000e+00> : vector<1xf32>
    %338 = vector.multi_reduction <add>, %337, %cst_151 [1, 2] : vector<1x8x16xf32> to vector<1xf32>
    %339 = vector.shape_cast %338 : vector<1xf32> to vector<1x1x1xf32>
    %340 = vector.extract %339[0, 0, 0] : f32 from vector<1x1x1xf32>
    %cst_152 = arith.constant 3.125000e-02 : f32
    %341 = arith.mulf %333, %cst_152 : f32
    %cst_153 = arith.constant 3.125000e-02 : f32
    %342 = arith.mulf %340, %cst_153 : f32
    %343 = arith.mulf %341, %341 : f32
    %344 = arith.subf %342, %343 : f32
    %cst_154 = arith.constant 0.000000e+00 : f32
    %345 = arith.maximumf %344, %cst_154 : f32
    %346 = vector.broadcast %341 : f32 to vector<8x16xf32>
    %347 = arith.select %327, %346, %323 : vector<8x16xi1>, vector<8x16xf32>
    %348 = vector.broadcast %345 : f32 to vector<8x16xf32>
    %349 = arith.select %327, %348, %325 : vector<8x16xi1>, vector<8x16xf32>
    %c3_i32_155 = arith.constant 3 : i32
    %350 = vector.broadcast %c3_i32_155 : i32 to vector<8x16xi32>
    %351 = arith.cmpi eq, %275, %350 : vector<8x16xi32>
    %cst_156 = arith.constant 0.000000e+00 : f32
    %352 = vector.broadcast %cst_156 : f32 to vector<8x16xf32>
    %353 = arith.select %351, %270, %352 : vector<8x16xi1>, vector<8x16xf32>
    %354 = vector.shape_cast %353 : vector<8x16xf32> to vector<1x8x16xf32>
    %cst_157 = arith.constant dense<0.000000e+00> : vector<1xf32>
    %355 = vector.multi_reduction <add>, %354, %cst_157 [1, 2] : vector<1x8x16xf32> to vector<1xf32>
    %356 = vector.shape_cast %355 : vector<1xf32> to vector<1x1x1xf32>
    %357 = vector.extract %356[0, 0, 0] : f32 from vector<1x1x1xf32>
    %358 = arith.mulf %270, %270 : vector<8x16xf32>
    %cst_158 = arith.constant 0.000000e+00 : f32
    %359 = vector.broadcast %cst_158 : f32 to vector<8x16xf32>
    %360 = arith.select %351, %358, %359 : vector<8x16xi1>, vector<8x16xf32>
    %361 = vector.shape_cast %360 : vector<8x16xf32> to vector<1x8x16xf32>
    %cst_159 = arith.constant dense<0.000000e+00> : vector<1xf32>
    %362 = vector.multi_reduction <add>, %361, %cst_159 [1, 2] : vector<1x8x16xf32> to vector<1xf32>
    %363 = vector.shape_cast %362 : vector<1xf32> to vector<1x1x1xf32>
    %364 = vector.extract %363[0, 0, 0] : f32 from vector<1x1x1xf32>
    %cst_160 = arith.constant 3.125000e-02 : f32
    %365 = arith.mulf %357, %cst_160 : f32
    %cst_161 = arith.constant 3.125000e-02 : f32
    %366 = arith.mulf %364, %cst_161 : f32
    %367 = arith.mulf %365, %365 : f32
    %368 = arith.subf %366, %367 : f32
    %cst_162 = arith.constant 0.000000e+00 : f32
    %369 = arith.maximumf %368, %cst_162 : f32
    %370 = vector.broadcast %365 : f32 to vector<8x16xf32>
    %371 = arith.select %351, %370, %347 : vector<8x16xi1>, vector<8x16xf32>
    %372 = vector.broadcast %369 : f32 to vector<8x16xf32>
    %373 = arith.select %351, %372, %349 : vector<8x16xi1>, vector<8x16xf32>
    %cst_163 = arith.constant 9.99999974E-6 : f32
    %374 = vector.broadcast %cst_163 : f32 to vector<8x16xf32>
    %375 = arith.addf %373, %374 : vector<8x16xf32>
    %376 = math.rsqrt %375 : vector<8x16xf32>
    %377 = vector.broadcast %271 : vector<1x16xf32> to vector<8x16xf32>
    %378 = arith.mulf %377, %376 : vector<8x16xf32>
    %379 = arith.mulf %371, %378 : vector<8x16xf32>
    %380 = vector.broadcast %272 : vector<1x16xf32> to vector<8x16xf32>
    %381 = arith.subf %380, %379 : vector<8x16xf32>
    %382 = arith.mulf %270, %378 : vector<8x16xf32>
    %383 = arith.addf %382, %381 : vector<8x16xf32>
    %cst_164 = arith.constant 0.000000e+00 : f32
    %384 = vector.broadcast %cst_164 : f32 to vector<8x16xf32>
    %385 = arith.maximumf %383, %384 : vector<8x16xf32>
    %c0_165 = arith.constant 0 : index
    %c0_166 = arith.constant 0 : index
    %c0_167 = arith.constant 0 : index
    %386 = vector.load %arg9[%c0_165, %c0_166, %c0_167] : memref<3x16x8xf32, #tpu.memory_space<vmem>>, vector<1x16x8xf32>
    %387 = vector.shape_cast %386 : vector<1x16x8xf32> to vector<16x8xf32>
    %cst_168 = arith.constant dense<0.000000e+00> : vector<16x16xf32>
    %388 = tpu.matmul %387, %385, %cst_168 {dimension_numbers = #tpu.dot_dimension_numbers<[1], [0], [0], [1], [0, 0, 1, 1], [], []>} : vector<16x8xf32>, vector<8x16xf32>, vector<16x16xf32> -> vector<16x16xf32>
    %c0_169 = arith.constant 0 : index
    %c0_170 = arith.constant 0 : index
    %c0_171 = arith.constant 0 : index
    %389 = vector.load %arg10[%c0_169, %c0_170, %c0_171] : memref<3x16x32xf32, #tpu.memory_space<vmem>>, vector<1x16x32xf32>
    %390 = vector.shape_cast %389 : vector<1x16x32xf32> to vector<16x32xf32>
    %cst_172 = arith.constant dense<0.000000e+00> : vector<16x32xf32>
    %391 = tpu.matmul %388, %390, %cst_172 {dimension_numbers = #tpu.dot_dimension_numbers<[1], [0], [0], [1], [0, 0, 1, 1], [], []>} : vector<16x16xf32>, vector<16x32xf32>, vector<16x32xf32> -> vector<16x32xf32>
    %c1_173 = arith.constant 1 : index
    %c0_174 = arith.constant 0 : index
    %c0_175 = arith.constant 0 : index
    %392 = vector.load %arg9[%c1_173, %c0_174, %c0_175] : memref<3x16x8xf32, #tpu.memory_space<vmem>>, vector<1x16x8xf32>
    %393 = vector.shape_cast %392 : vector<1x16x8xf32> to vector<16x8xf32>
    %cst_176 = arith.constant dense<0.000000e+00> : vector<16x16xf32>
    %394 = tpu.matmul %393, %385, %cst_176 {dimension_numbers = #tpu.dot_dimension_numbers<[1], [0], [0], [1], [0, 0, 1, 1], [], []>} : vector<16x8xf32>, vector<8x16xf32>, vector<16x16xf32> -> vector<16x16xf32>
    %c1_177 = arith.constant 1 : index
    %c0_178 = arith.constant 0 : index
    %c0_179 = arith.constant 0 : index
    %395 = vector.load %arg10[%c1_177, %c0_178, %c0_179] : memref<3x16x32xf32, #tpu.memory_space<vmem>>, vector<1x16x32xf32>
    %396 = vector.shape_cast %395 : vector<1x16x32xf32> to vector<16x32xf32>
    %cst_180 = arith.constant dense<0.000000e+00> : vector<16x32xf32>
    %397 = tpu.matmul %394, %396, %cst_180 {dimension_numbers = #tpu.dot_dimension_numbers<[1], [0], [0], [1], [0, 0, 1, 1], [], []>} : vector<16x16xf32>, vector<16x32xf32>, vector<16x32xf32> -> vector<16x32xf32>
    %398 = arith.addf %391, %397 : vector<16x32xf32>
    %c2_181 = arith.constant 2 : index
    %c0_182 = arith.constant 0 : index
    %c0_183 = arith.constant 0 : index
    %399 = vector.load %arg9[%c2_181, %c0_182, %c0_183] : memref<3x16x8xf32, #tpu.memory_space<vmem>>, vector<1x16x8xf32>
    %400 = vector.shape_cast %399 : vector<1x16x8xf32> to vector<16x8xf32>
    %cst_184 = arith.constant dense<0.000000e+00> : vector<16x16xf32>
    %401 = tpu.matmul %400, %385, %cst_184 {dimension_numbers = #tpu.dot_dimension_numbers<[1], [0], [0], [1], [0, 0, 1, 1], [], []>} : vector<16x8xf32>, vector<8x16xf32>, vector<16x16xf32> -> vector<16x16xf32>
    %c2_185 = arith.constant 2 : index
    %c0_186 = arith.constant 0 : index
    %c0_187 = arith.constant 0 : index
    %402 = vector.load %arg10[%c2_185, %c0_186, %c0_187] : memref<3x16x32xf32, #tpu.memory_space<vmem>>, vector<1x16x32xf32>
    %403 = vector.shape_cast %402 : vector<1x16x32xf32> to vector<16x32xf32>
    %cst_188 = arith.constant dense<0.000000e+00> : vector<16x32xf32>
    %404 = tpu.matmul %401, %403, %cst_188 {dimension_numbers = #tpu.dot_dimension_numbers<[1], [0], [0], [1], [0, 0, 1, 1], [], []>} : vector<16x16xf32>, vector<16x32xf32>, vector<16x32xf32> -> vector<16x32xf32>
    %405 = arith.addf %398, %404 : vector<16x32xf32>
    %406 = arith.addf %405, %135 : vector<16x32xf32>
    %c0_189 = arith.constant 0 : index
    %c0_190 = arith.constant 0 : index
    %407 = vector.load %arg15[%c0_189, %c0_190] : memref<1x32xf32, #tpu.memory_space<vmem>>, vector<1x32xf32>
    %c0_191 = arith.constant 0 : index
    %c0_192 = arith.constant 0 : index
    %408 = vector.load %arg16[%c0_191, %c0_192] : memref<1x32xf32, #tpu.memory_space<vmem>>, vector<1x32xf32>
    %409 = tpu.iota {dimensions = array<i32: 1>} : vector<16x32xi32>
    %c3_i32_193 = arith.constant 3 : i32
    %410 = vector.broadcast %c3_i32_193 : i32 to vector<16x32xi32>
    %411 = arith.andi %409, %410 : vector<16x32xi32>
    %cst_194 = arith.constant 0.000000e+00 : f32
    %412 = vector.broadcast %cst_194 : f32 to vector<16x32xf32>
    %cst_195 = arith.constant 0.000000e+00 : f32
    %413 = vector.broadcast %cst_195 : f32 to vector<16x32xf32>
    %c0_i32_196 = arith.constant 0 : i32
    %414 = vector.broadcast %c0_i32_196 : i32 to vector<16x32xi32>
    %415 = arith.cmpi eq, %411, %414 : vector<16x32xi32>
    %cst_197 = arith.constant 0.000000e+00 : f32
    %416 = vector.broadcast %cst_197 : f32 to vector<16x32xf32>
    %417 = arith.select %415, %406, %416 : vector<16x32xi1>, vector<16x32xf32>
    %418 = vector.shape_cast %417 : vector<16x32xf32> to vector<1x16x32xf32>
    %cst_198 = arith.constant dense<0.000000e+00> : vector<1xf32>
    %419 = vector.multi_reduction <add>, %418, %cst_198 [1, 2] : vector<1x16x32xf32> to vector<1xf32>
    %420 = vector.shape_cast %419 : vector<1xf32> to vector<1x1x1xf32>
    %421 = vector.extract %420[0, 0, 0] : f32 from vector<1x1x1xf32>
    %422 = arith.mulf %406, %406 : vector<16x32xf32>
    %cst_199 = arith.constant 0.000000e+00 : f32
    %423 = vector.broadcast %cst_199 : f32 to vector<16x32xf32>
    %424 = arith.select %415, %422, %423 : vector<16x32xi1>, vector<16x32xf32>
    %425 = vector.shape_cast %424 : vector<16x32xf32> to vector<1x16x32xf32>
    %cst_200 = arith.constant dense<0.000000e+00> : vector<1xf32>
    %426 = vector.multi_reduction <add>, %425, %cst_200 [1, 2] : vector<1x16x32xf32> to vector<1xf32>
    %427 = vector.shape_cast %426 : vector<1xf32> to vector<1x1x1xf32>
    %428 = vector.extract %427[0, 0, 0] : f32 from vector<1x1x1xf32>
    %cst_201 = arith.constant 7.812500e-03 : f32
    %429 = arith.mulf %421, %cst_201 : f32
    %cst_202 = arith.constant 7.812500e-03 : f32
    %430 = arith.mulf %428, %cst_202 : f32
    %431 = arith.mulf %429, %429 : f32
    %432 = arith.subf %430, %431 : f32
    %cst_203 = arith.constant 0.000000e+00 : f32
    %433 = arith.maximumf %432, %cst_203 : f32
    %434 = vector.broadcast %429 : f32 to vector<16x32xf32>
    %435 = arith.select %415, %434, %412 : vector<16x32xi1>, vector<16x32xf32>
    %436 = vector.broadcast %433 : f32 to vector<16x32xf32>
    %437 = arith.select %415, %436, %413 : vector<16x32xi1>, vector<16x32xf32>
    %c1_i32_204 = arith.constant 1 : i32
    %438 = vector.broadcast %c1_i32_204 : i32 to vector<16x32xi32>
    %439 = arith.cmpi eq, %411, %438 : vector<16x32xi32>
    %cst_205 = arith.constant 0.000000e+00 : f32
    %440 = vector.broadcast %cst_205 : f32 to vector<16x32xf32>
    %441 = arith.select %439, %406, %440 : vector<16x32xi1>, vector<16x32xf32>
    %442 = vector.shape_cast %441 : vector<16x32xf32> to vector<1x16x32xf32>
    %cst_206 = arith.constant dense<0.000000e+00> : vector<1xf32>
    %443 = vector.multi_reduction <add>, %442, %cst_206 [1, 2] : vector<1x16x32xf32> to vector<1xf32>
    %444 = vector.shape_cast %443 : vector<1xf32> to vector<1x1x1xf32>
    %445 = vector.extract %444[0, 0, 0] : f32 from vector<1x1x1xf32>
    %446 = arith.mulf %406, %406 : vector<16x32xf32>
    %cst_207 = arith.constant 0.000000e+00 : f32
    %447 = vector.broadcast %cst_207 : f32 to vector<16x32xf32>
    %448 = arith.select %439, %446, %447 : vector<16x32xi1>, vector<16x32xf32>
    %449 = vector.shape_cast %448 : vector<16x32xf32> to vector<1x16x32xf32>
    %cst_208 = arith.constant dense<0.000000e+00> : vector<1xf32>
    %450 = vector.multi_reduction <add>, %449, %cst_208 [1, 2] : vector<1x16x32xf32> to vector<1xf32>
    %451 = vector.shape_cast %450 : vector<1xf32> to vector<1x1x1xf32>
    %452 = vector.extract %451[0, 0, 0] : f32 from vector<1x1x1xf32>
    %cst_209 = arith.constant 7.812500e-03 : f32
    %453 = arith.mulf %445, %cst_209 : f32
    %cst_210 = arith.constant 7.812500e-03 : f32
    %454 = arith.mulf %452, %cst_210 : f32
    %455 = arith.mulf %453, %453 : f32
    %456 = arith.subf %454, %455 : f32
    %cst_211 = arith.constant 0.000000e+00 : f32
    %457 = arith.maximumf %456, %cst_211 : f32
    %458 = vector.broadcast %453 : f32 to vector<16x32xf32>
    %459 = arith.select %439, %458, %435 : vector<16x32xi1>, vector<16x32xf32>
    %460 = vector.broadcast %457 : f32 to vector<16x32xf32>
    %461 = arith.select %439, %460, %437 : vector<16x32xi1>, vector<16x32xf32>
    %c2_i32_212 = arith.constant 2 : i32
    %462 = vector.broadcast %c2_i32_212 : i32 to vector<16x32xi32>
    %463 = arith.cmpi eq, %411, %462 : vector<16x32xi32>
    %cst_213 = arith.constant 0.000000e+00 : f32
    %464 = vector.broadcast %cst_213 : f32 to vector<16x32xf32>
    %465 = arith.select %463, %406, %464 : vector<16x32xi1>, vector<16x32xf32>
    %466 = vector.shape_cast %465 : vector<16x32xf32> to vector<1x16x32xf32>
    %cst_214 = arith.constant dense<0.000000e+00> : vector<1xf32>
    %467 = vector.multi_reduction <add>, %466, %cst_214 [1, 2] : vector<1x16x32xf32> to vector<1xf32>
    %468 = vector.shape_cast %467 : vector<1xf32> to vector<1x1x1xf32>
    %469 = vector.extract %468[0, 0, 0] : f32 from vector<1x1x1xf32>
    %470 = arith.mulf %406, %406 : vector<16x32xf32>
    %cst_215 = arith.constant 0.000000e+00 : f32
    %471 = vector.broadcast %cst_215 : f32 to vector<16x32xf32>
    %472 = arith.select %463, %470, %471 : vector<16x32xi1>, vector<16x32xf32>
    %473 = vector.shape_cast %472 : vector<16x32xf32> to vector<1x16x32xf32>
    %cst_216 = arith.constant dense<0.000000e+00> : vector<1xf32>
    %474 = vector.multi_reduction <add>, %473, %cst_216 [1, 2] : vector<1x16x32xf32> to vector<1xf32>
    %475 = vector.shape_cast %474 : vector<1xf32> to vector<1x1x1xf32>
    %476 = vector.extract %475[0, 0, 0] : f32 from vector<1x1x1xf32>
    %cst_217 = arith.constant 7.812500e-03 : f32
    %477 = arith.mulf %469, %cst_217 : f32
    %cst_218 = arith.constant 7.812500e-03 : f32
    %478 = arith.mulf %476, %cst_218 : f32
    %479 = arith.mulf %477, %477 : f32
    %480 = arith.subf %478, %479 : f32
    %cst_219 = arith.constant 0.000000e+00 : f32
    %481 = arith.maximumf %480, %cst_219 : f32
    %482 = vector.broadcast %477 : f32 to vector<16x32xf32>
    %483 = arith.select %463, %482, %459 : vector<16x32xi1>, vector<16x32xf32>
    %484 = vector.broadcast %481 : f32 to vector<16x32xf32>
    %485 = arith.select %463, %484, %461 : vector<16x32xi1>, vector<16x32xf32>
    %c3_i32_220 = arith.constant 3 : i32
    %486 = vector.broadcast %c3_i32_220 : i32 to vector<16x32xi32>
    %487 = arith.cmpi eq, %411, %486 : vector<16x32xi32>
    %cst_221 = arith.constant 0.000000e+00 : f32
    %488 = vector.broadcast %cst_221 : f32 to vector<16x32xf32>
    %489 = arith.select %487, %406, %488 : vector<16x32xi1>, vector<16x32xf32>
    %490 = vector.shape_cast %489 : vector<16x32xf32> to vector<1x16x32xf32>
    %cst_222 = arith.constant dense<0.000000e+00> : vector<1xf32>
    %491 = vector.multi_reduction <add>, %490, %cst_222 [1, 2] : vector<1x16x32xf32> to vector<1xf32>
    %492 = vector.shape_cast %491 : vector<1xf32> to vector<1x1x1xf32>
    %493 = vector.extract %492[0, 0, 0] : f32 from vector<1x1x1xf32>
    %494 = arith.mulf %406, %406 : vector<16x32xf32>
    %cst_223 = arith.constant 0.000000e+00 : f32
    %495 = vector.broadcast %cst_223 : f32 to vector<16x32xf32>
    %496 = arith.select %487, %494, %495 : vector<16x32xi1>, vector<16x32xf32>
    %497 = vector.shape_cast %496 : vector<16x32xf32> to vector<1x16x32xf32>
    %cst_224 = arith.constant dense<0.000000e+00> : vector<1xf32>
    %498 = vector.multi_reduction <add>, %497, %cst_224 [1, 2] : vector<1x16x32xf32> to vector<1xf32>
    %499 = vector.shape_cast %498 : vector<1xf32> to vector<1x1x1xf32>
    %500 = vector.extract %499[0, 0, 0] : f32 from vector<1x1x1xf32>
    %cst_225 = arith.constant 7.812500e-03 : f32
    %501 = arith.mulf %493, %cst_225 : f32
    %cst_226 = arith.constant 7.812500e-03 : f32
    %502 = arith.mulf %500, %cst_226 : f32
    %503 = arith.mulf %501, %501 : f32
    %504 = arith.subf %502, %503 : f32
    %cst_227 = arith.constant 0.000000e+00 : f32
    %505 = arith.maximumf %504, %cst_227 : f32
    %506 = vector.broadcast %501 : f32 to vector<16x32xf32>
    %507 = arith.select %487, %506, %483 : vector<16x32xi1>, vector<16x32xf32>
    %508 = vector.broadcast %505 : f32 to vector<16x32xf32>
    %509 = arith.select %487, %508, %485 : vector<16x32xi1>, vector<16x32xf32>
    %cst_228 = arith.constant 9.99999974E-6 : f32
    %510 = vector.broadcast %cst_228 : f32 to vector<16x32xf32>
    %511 = arith.addf %509, %510 : vector<16x32xf32>
    %512 = math.rsqrt %511 : vector<16x32xf32>
    %513 = vector.broadcast %407 : vector<1x32xf32> to vector<16x32xf32>
    %514 = arith.mulf %513, %512 : vector<16x32xf32>
    %515 = arith.mulf %507, %514 : vector<16x32xf32>
    %516 = vector.broadcast %408 : vector<1x32xf32> to vector<16x32xf32>
    %517 = arith.subf %516, %515 : vector<16x32xf32>
    %518 = arith.mulf %406, %514 : vector<16x32xf32>
    %519 = arith.addf %518, %517 : vector<16x32xf32>
    %cst_229 = arith.constant 0.000000e+00 : f32
    %520 = vector.broadcast %cst_229 : f32 to vector<16x32xf32>
    %521 = arith.maximumf %519, %520 : vector<16x32xf32>
    %c0_230 = arith.constant 0 : index
    %c0_231 = arith.constant 0 : index
    %c0_232 = arith.constant 0 : index
    %522 = vector.load %arg13[%c0_230, %c0_231, %c0_232] : memref<3x32x16xf32, #tpu.memory_space<vmem>>, vector<1x32x16xf32>
    %523 = vector.shape_cast %522 : vector<1x32x16xf32> to vector<32x16xf32>
    %cst_233 = arith.constant dense<0.000000e+00> : vector<32x32xf32>
    %524 = tpu.matmul %523, %521, %cst_233 {dimension_numbers = #tpu.dot_dimension_numbers<[1], [0], [0], [1], [0, 0, 1, 1], [], []>} : vector<32x16xf32>, vector<16x32xf32>, vector<32x32xf32> -> vector<32x32xf32>
    %c0_234 = arith.constant 0 : index
    %c0_235 = arith.constant 0 : index
    %c0_236 = arith.constant 0 : index
    %525 = vector.load %arg14[%c0_234, %c0_235, %c0_236] : memref<3x32x64xf32, #tpu.memory_space<vmem>>, vector<1x32x64xf32>
    %526 = vector.shape_cast %525 : vector<1x32x64xf32> to vector<32x64xf32>
    %cst_237 = arith.constant dense<0.000000e+00> : vector<32x64xf32>
    %527 = tpu.matmul %524, %526, %cst_237 {dimension_numbers = #tpu.dot_dimension_numbers<[1], [0], [0], [1], [0, 0, 1, 1], [], []>} : vector<32x32xf32>, vector<32x64xf32>, vector<32x64xf32> -> vector<32x64xf32>
    %c1_238 = arith.constant 1 : index
    %c0_239 = arith.constant 0 : index
    %c0_240 = arith.constant 0 : index
    %528 = vector.load %arg13[%c1_238, %c0_239, %c0_240] : memref<3x32x16xf32, #tpu.memory_space<vmem>>, vector<1x32x16xf32>
    %529 = vector.shape_cast %528 : vector<1x32x16xf32> to vector<32x16xf32>
    %cst_241 = arith.constant dense<0.000000e+00> : vector<32x32xf32>
    %530 = tpu.matmul %529, %521, %cst_241 {dimension_numbers = #tpu.dot_dimension_numbers<[1], [0], [0], [1], [0, 0, 1, 1], [], []>} : vector<32x16xf32>, vector<16x32xf32>, vector<32x32xf32> -> vector<32x32xf32>
    %c1_242 = arith.constant 1 : index
    %c0_243 = arith.constant 0 : index
    %c0_244 = arith.constant 0 : index
    %531 = vector.load %arg14[%c1_242, %c0_243, %c0_244] : memref<3x32x64xf32, #tpu.memory_space<vmem>>, vector<1x32x64xf32>
    %532 = vector.shape_cast %531 : vector<1x32x64xf32> to vector<32x64xf32>
    %cst_245 = arith.constant dense<0.000000e+00> : vector<32x64xf32>
    %533 = tpu.matmul %530, %532, %cst_245 {dimension_numbers = #tpu.dot_dimension_numbers<[1], [0], [0], [1], [0, 0, 1, 1], [], []>} : vector<32x32xf32>, vector<32x64xf32>, vector<32x64xf32> -> vector<32x64xf32>
    %534 = arith.addf %527, %533 : vector<32x64xf32>
    %c2_246 = arith.constant 2 : index
    %c0_247 = arith.constant 0 : index
    %c0_248 = arith.constant 0 : index
    %535 = vector.load %arg13[%c2_246, %c0_247, %c0_248] : memref<3x32x16xf32, #tpu.memory_space<vmem>>, vector<1x32x16xf32>
    %536 = vector.shape_cast %535 : vector<1x32x16xf32> to vector<32x16xf32>
    %cst_249 = arith.constant dense<0.000000e+00> : vector<32x32xf32>
    %537 = tpu.matmul %536, %521, %cst_249 {dimension_numbers = #tpu.dot_dimension_numbers<[1], [0], [0], [1], [0, 0, 1, 1], [], []>} : vector<32x16xf32>, vector<16x32xf32>, vector<32x32xf32> -> vector<32x32xf32>
    %c2_250 = arith.constant 2 : index
    %c0_251 = arith.constant 0 : index
    %c0_252 = arith.constant 0 : index
    %538 = vector.load %arg14[%c2_250, %c0_251, %c0_252] : memref<3x32x64xf32, #tpu.memory_space<vmem>>, vector<1x32x64xf32>
    %539 = vector.shape_cast %538 : vector<1x32x64xf32> to vector<32x64xf32>
    %cst_253 = arith.constant dense<0.000000e+00> : vector<32x64xf32>
    %540 = tpu.matmul %537, %539, %cst_253 {dimension_numbers = #tpu.dot_dimension_numbers<[1], [0], [0], [1], [0, 0, 1, 1], [], []>} : vector<32x32xf32>, vector<32x64xf32>, vector<32x64xf32> -> vector<32x64xf32>
    %541 = arith.addf %534, %540 : vector<32x64xf32>
    %542 = arith.addf %541, %0 : vector<32x64xf32>
    %c0_254 = arith.constant 0 : index
    %c0_255 = arith.constant 0 : index
    %543 = vector.load %arg17[%c0_254, %c0_255] : memref<32x64xf32, #tpu.memory_space<vmem>>, vector<32x64xf32>
    tpu.vector_store %arg17[%c0_254, %c0_255], %542 {strides = array<i32>} : memref<32x64xf32, #tpu.memory_space<vmem>>, vector<32x64xf32>,
    %c0_256 = arith.constant 0 : index
    %c0_257 = arith.constant 0 : index
    %544 = vector.load %arg18[%c0_256, %c0_257] : memref<16x32xf32, #tpu.memory_space<vmem>>, vector<16x32xf32>
    tpu.vector_store %arg18[%c0_256, %c0_257], %405 {strides = array<i32>} : memref<16x32xf32, #tpu.memory_space<vmem>>, vector<16x32xf32>,
    %c0_258 = arith.constant 0 : index
    %c0_259 = arith.constant 0 : index
    %545 = vector.load %arg19[%c0_258, %c0_259] : memref<8x16xf32, #tpu.memory_space<vmem>>, vector<8x16xf32>
    tpu.vector_store %arg19[%c0_258, %c0_259], %270 {strides = array<i32>} : memref<8x16xf32, #tpu.memory_space<vmem>>, vector<8x16xf32>,
    return
  }
}

</mosaic_0001>

<llo_original>
// kernel: aeblock_forward.1
$region0: #{aeblock_forward.1}
  #allocation0 [shape = 'u32[]', space=smem, size = 0x4, offset = 0x4, fixed_abs, tag = 'smem constant byte address 0x4 - core index']
  #allocation1 [shape = 'u32[144,128]{1,0:T(1,128)}', space=vmem, size = 0x12000, scoped, tag = 'internal scratch']
  %s0 = inlined_call_operand.vmem [shape: f32[32,64], index: 0, kind: input, shape index: {}]
  %s1 = inlined_call_operand.vmem [shape: f32[3,16,32], index: 1, kind: input, shape index: {}]
  %s2 = inlined_call_operand.vmem [shape: f32[3,64,32], index: 2, kind: input, shape index: {}]
  %s3 = inlined_call_operand.vmem [shape: f32[1,64], index: 3, kind: input, shape index: {}]
  %s4 = inlined_call_operand.vmem [shape: f32[1,64], index: 4, kind: input, shape index: {}]
  %s5 = inlined_call_operand.vmem [shape: f32[3,8,16], index: 5, kind: input, shape index: {}]
  %s6 = inlined_call_operand.vmem [shape: f32[3,32,16], index: 6, kind: input, shape index: {}]
  %s7 = inlined_call_operand.vmem [shape: f32[1,32], index: 7, kind: input, shape index: {}]
  %s8 = inlined_call_operand.vmem [shape: f32[1,32], index: 8, kind: input, shape index: {}]
  %s9 = inlined_call_operand.vmem [shape: f32[3,16,8], index: 9, kind: input, shape index: {}]
  %s10 = inlined_call_operand.vmem [shape: f32[3,16,32], index: 10, kind: input, shape index: {}]
  %s11 = inlined_call_operand.vmem [shape: f32[1,16], index: 11, kind: input, shape index: {}]
  %s12 = inlined_call_operand.vmem [shape: f32[1,16], index: 12, kind: input, shape index: {}]
  %s13 = inlined_call_operand.vmem [shape: f32[3,32,16], index: 13, kind: input, shape index: {}]
  %s14 = inlined_call_operand.vmem [shape: f32[3,32,64], index: 14, kind: input, shape index: {}]
  %s15 = inlined_call_operand.vmem [shape: f32[1,32], index: 15, kind: input, shape index: {}]
  %s16 = inlined_call_operand.vmem [shape: f32[1,32], index: 16, kind: input, shape index: {}]
  %s17 = inlined_call_operand.vmem [shape: f32[32,64], index: 17, kind: output, shape index: {0}]
  %s18 = inlined_call_operand.vmem [shape: f32[16,32], index: 18, kind: output, shape index: {1}]
  %s19 = inlined_call_operand.vmem [shape: f32[8,16], index: 19, kind: output, shape index: {2}]
  %20 = xla_tuple %s17, %s18, %s19
  %s21 = sld [smem:[#allocation0]]
  $region94: #{aeblock_forward.1} parent=0
    _
  %s23 = ssub.s32 1, %s21
  %s24 = scalar_select 0, %s23, %s21
  // Predicated region
  $region2: #{aeblock_forward.1} parent=0 // pred_check
    _
  $region3: #{aeblock_forward.1} parent=0 // pred_check_branch
    %26 = sbr.rel (0) target = $region5
  $region4: #{aeblock_forward.1} parent=0 // pred_region
    _
  $region5: #{aeblock_forward.1} parent=0 // pred_fallthru
    _
  // Predicated region
  $region6: #{aeblock_forward.1} parent=0 // pred_check
    _
  $region7: #{aeblock_forward.1} parent=0 // pred_check_branch
    %28 = sbr.rel (0) target = $region9
  $region8: #{aeblock_forward.1} parent=0 // pred_region
    _
  $region9: #{aeblock_forward.1} parent=0 // pred_fallthru
    _
  // Predicated region
  $region10: #{aeblock_forward.1} parent=0 // pred_check
    _
  $region11: #{aeblock_forward.1} parent=0 // pred_check_branch
    %30 = sbr.rel (0) target = $region13
  $region12: #{aeblock_forward.1} parent=0 // pred_region
    _
  $region13: #{aeblock_forward.1} parent=0 // pred_fallthru
    _
  // Predicated region
  $region14: #{aeblock_forward.1} parent=0 // pred_check
    _
  $region15: #{aeblock_forward.1} parent=0 // pred_check_branch
    %32 = sbr.rel (0) target = $region17
  $region16: #{aeblock_forward.1} parent=0 // pred_region
    _
  $region17: #{aeblock_forward.1} parent=0 // pred_fallthru
    _
  // Predicated region
  $region18: #{aeblock_forward.1} parent=0 // pred_check
    _
  $region19: #{aeblock_forward.1} parent=0 // pred_check_branch
    %34 = sbr.rel (0) target = $region21
  $region20: #{aeblock_forward.1} parent=0 // pred_region
    _
  $region21: #{aeblock_forward.1} parent=0 // pred_fallthru
    _
  // Predicated region
  $region22: #{aeblock_forward.1} parent=0 // pred_check
    _
  $region23: #{aeblock_forward.1} parent=0 // pred_check_branch
    %36 = sbr.rel (0) target = $region25
  $region24: #{aeblock_forward.1} parent=0 // pred_region
    _
  $region25: #{aeblock_forward.1} parent=0 // pred_fallthru
    _
  // Predicated region
  $region26: #{aeblock_forward.1} parent=0 // pred_check
    _
  $region27: #{aeblock_forward.1} parent=0 // pred_check_branch
    %38 = sbr.rel (0) target = $region29
  $region28: #{aeblock_forward.1} parent=0 // pred_region
    _
  $region29: #{aeblock_forward.1} parent=0 // pred_fallthru
    _
  // Predicated region
  $region30: #{aeblock_forward.1} parent=0 // pred_check
    _
  $region31: #{aeblock_forward.1} parent=0 // pred_check_branch
    %40 = sbr.rel (0) target = $region33
  $region32: #{aeblock_forward.1} parent=0 // pred_region
    _
  $region33: #{aeblock_forward.1} parent=0 // pred_fallthru
    _
  // Predicated region
  $region34: #{aeblock_forward.1} parent=0 // pred_check
    _
  $region35: #{aeblock_forward.1} parent=0 // pred_check_branch
    %42 = sbr.rel (0) target = $region37
  $region36: #{aeblock_forward.1} parent=0 // pred_region
    _
  $region37: #{aeblock_forward.1} parent=0 // pred_fallthru
    _
  // Predicated region
  $region38: #{aeblock_forward.1} parent=0 // pred_check
    _
  $region39: #{aeblock_forward.1} parent=0 // pred_check_branch
    %44 = sbr.rel (0) target = $region41
  $region40: #{aeblock_forward.1} parent=0 // pred_region
    _
  $region41: #{aeblock_forward.1} parent=0 // pred_fallthru
    _
  // Predicated region
  $region42: #{aeblock_forward.1} parent=0 // pred_check
    _
  $region43: #{aeblock_forward.1} parent=0 // pred_check_branch
    %46 = sbr.rel (0) target = $region45
  $region44: #{aeblock_forward.1} parent=0 // pred_region
    _
  $region45: #{aeblock_forward.1} parent=0 // pred_fallthru
    _
  // Predicated region
  $region46: #{aeblock_forward.1} parent=0 // pred_check
    _
  $region47: #{aeblock_forward.1} parent=0 // pred_check_branch
    %48 = sbr.rel (0) target = $region49
  $region48: #{aeblock_forward.1} parent=0 // pred_region
    _
  $region49: #{aeblock_forward.1} parent=0 // pred_fallthru
    _
  // Predicated region
  $region50: #{aeblock_forward.1} parent=0 // pred_check
    _
  $region51: #{aeblock_forward.1} parent=0 // pred_check_branch
    %50 = sbr.rel (0) target = $region53
  $region52: #{aeblock_forward.1} parent=0 // pred_region
    _
  $region53: #{aeblock_forward.1} parent=0 // pred_fallthru
    _
  // Predicated region
  $region54: #{aeblock_forward.1} parent=0 // pred_check
    _
  $region55: #{aeblock_forward.1} parent=0 // pred_check_branch
    %52 = sbr.rel (0) target = $region57
  $region56: #{aeblock_forward.1} parent=0 // pred_region
    _
  $region57: #{aeblock_forward.1} parent=0 // pred_fallthru
    _
  // Predicated region
  $region58: #{aeblock_forward.1} parent=0 // pred_check
    _
  $region59: #{aeblock_forward.1} parent=0 // pred_check_branch
    %54 = sbr.rel (0) target = $region61
  $region60: #{aeblock_forward.1} parent=0 // pred_region
    _
  $region61: #{aeblock_forward.1} parent=0 // pred_fallthru
    _
  // Predicated region
  $region62: #{aeblock_forward.1} parent=0 // pred_check
    _
  $region63: #{aeblock_forward.1} parent=0 // pred_check_branch
    %56 = sbr.rel (0) target = $region65
  $region64: #{aeblock_forward.1} parent=0 // pred_region
    _
  $region65: #{aeblock_forward.1} parent=0 // pred_fallthru
    _
  // Predicated region
  $region66: #{aeblock_forward.1} parent=0 // pred_check
    _
  $region67: #{aeblock_forward.1} parent=0 // pred_check_branch
    %58 = sbr.rel (0) target = $region69
  $region68: #{aeblock_forward.1} parent=0 // pred_region
    _
  $region69: #{aeblock_forward.1} parent=0 // pred_fallthru
    _
  %v59 = vld [vmem:[%s0] sm:$0xff]
  %v60 = vld [vmem:[%s0 + $0x8] sm:$0xff]
  %v61 = vld [vmem:[%s0 + $0x10] sm:$0xff]
  %v62 = vld [vmem:[%s0 + $0x18] sm:$0xff]
  %v63 = vld [vmem:[%s3] sm:$0x1]
  %v64 = vld [vmem:[%s4] sm:$0x1]
  %v65 = vlaneseq
  %v66 = vand.u32 %v65, 127
  %v67 = vand.u32 %v66, 3
  %vm68 = vcmp.eq.s32.totalorder %v67, 0
  %v69 = vsel %vm68, %v59, 0.0
  %v70 = vsel %vm68, %v60, 0.0
  %v71 = vsel %vm68, %v61, 0.0
  %v72 = vsel %vm68, %v62, 0.0
  %vm73 = vcmask 523264
  %v74 = vsel %vm73, %v69, 0.0
  %v75 = vsel %vm73, %v70, 0.0
  %v76 = vadd.f32 %v74, %v75
  %v77 = vsel %vm73, %v71, 0.0
  %v78 = vadd.f32 %v76, %v77
  %v79 = vsel %vm73, %v72, 0.0
  %v80 = vadd.f32 %v78, %v79
  %81 = vadd.xlane.f32.xlu0 %v80
  %v82 = vpop.xlane.xlu0 %81
  %v83 = vrot.slane %v82, 4
  %v84 = vadd.f32 %v82, %v83
  %v85 = vrot.slane %v84, 2
  %v86 = vadd.f32 %v84, %v85
  %v87 = vrot.slane %v86, 1
  %v88 = vadd.f32 %v86, %v87
  %s89 = vtos %v88
  %v90 = vmul.f32 %v59, %v59
  %v91 = vmul.f32 %v60, %v60
  %v92 = vmul.f32 %v61, %v61
  %v93 = vmul.f32 %v62, %v62
  %v94 = vsel %vm68, %v90, 0.0
  %v95 = vsel %vm68, %v91, 0.0
  %v96 = vsel %vm68, %v92, 0.0
  %v97 = vsel %vm68, %v93, 0.0
  %v98 = vsel %vm73, %v94, 0.0
  %v99 = vsel %vm73, %v95, 0.0
  %v100 = vadd.f32 %v98, %v99
  %v101 = vsel %vm73, %v96, 0.0
  %v102 = vadd.f32 %v100, %v101
  %v103 = vsel %vm73, %v97, 0.0
  %v104 = vadd.f32 %v102, %v103
  %105 = vadd.xlane.f32.xlu0 %v104
  %v106 = vpop.xlane.xlu0 %105
  %v107 = vrot.slane %v106, 4
  %v108 = vadd.f32 %v106, %v107
  %v109 = vrot.slane %v108, 2
  %v110 = vadd.f32 %v108, %v109
  %v111 = vrot.slane %v110, 1
  %v112 = vadd.f32 %v110, %v111
  %s113 = vtos %v112
  %s114 = smul.f32 %s89, 0.001953125
  %s115 = smul.f32 %s113, 0.001953125
  %s116 = smul.f32 %s114, %s114
  %s117 = ssub.f32 %s115, %s116
  %s118 = smax.f32 %s117, 0.0
  %v119 = vstv %s114
  %v120 = vsel %vm68, %v119, 0.0
  %v121 = vstv %s118
  %v122 = vsel %vm68, %v121, 0.0
  %vm123 = vcmp.eq.s32.totalorder %v67, 1
  %v124 = vsel %vm123, %v59, 0.0
  %v125 = vsel %vm123, %v60, 0.0
  %v126 = vsel %vm123, %v61, 0.0
  %v127 = vsel %vm123, %v62, 0.0
  %v128 = vsel %vm73, %v124, 0.0
  %v129 = vsel %vm73, %v125, 0.0
  %v130 = vadd.f32 %v128, %v129
  %v131 = vsel %vm73, %v126, 0.0
  %v132 = vadd.f32 %v130, %v131
  %v133 = vsel %vm73, %v127, 0.0
  %v134 = vadd.f32 %v132, %v133
  %135 = vadd.xlane.f32.xlu0 %v134
  %v136 = vpop.xlane.xlu0 %135
  %v137 = vrot.slane %v136, 4
  %v138 = vadd.f32 %v136, %v137
  %v139 = vrot.slane %v138, 2
  %v140 = vadd.f32 %v138, %v139
  %v141 = vrot.slane %v140, 1
  %v142 = vadd.f32 %v140, %v141
  %s143 = vtos %v142
  %v144 = vsel %vm123, %v90, 0.0
  %v145 = vsel %vm123, %v91, 0.0
  %v146 = vsel %vm123, %v92, 0.0
  %v147 = vsel %vm123, %v93, 0.0
  %v148 = vsel %vm73, %v144, 0.0
  %v149 = vsel %vm73, %v145, 0.0
  %v150 = vadd.f32 %v148, %v149
  %v151 = vsel %vm73, %v146, 0.0
  %v152 = vadd.f32 %v150, %v151
  %v153 = vsel %vm73, %v147, 0.0
  %v154 = vadd.f32 %v152, %v153
  %155 = vadd.xlane.f32.xlu0 %v154
  %v156 = vpop.xlane.xlu0 %155
  %v157 = vrot.slane %v156, 4
  %v158 = vadd.f32 %v156, %v157
  %v159 = vrot.slane %v158, 2
  %v160 = vadd.f32 %v158, %v159
  %v161 = vrot.slane %v160, 1
  %v162 = vadd.f32 %v160, %v161
  %s163 = vtos %v162
  %s164 = smul.f32 %s143, 0.001953125
  %s165 = smul.f32 %s163, 0.001953125
  %s166 = smul.f32 %s164, %s164
  %s167 = ssub.f32 %s165, %s166
  %s168 = smax.f32 %s167, 0.0
  %v169 = vstv %s164
  %v170 = vsel %vm123, %v169, %v120
  %v171 = vstv %s168
  %v172 = vsel %vm123, %v171, %v122
  %vm173 = vcmp.eq.s32.totalorder %v67, 2
  %v174 = vsel %vm173, %v59, 0.0
  %v175 = vsel %vm173, %v60, 0.0
  %v176 = vsel %vm173, %v61, 0.0
  %v177 = vsel %vm173, %v62, 0.0
  %v178 = vsel %vm73, %v174, 0.0
  %v179 = vsel %vm73, %v175, 0.0
  %v180 = vadd.f32 %v178, %v179
  %v181 = vsel %vm73, %v176, 0.0
  %v182 = vadd.f32 %v180, %v181
  %v183 = vsel %vm73, %v177, 0.0
  %v184 = vadd.f32 %v182, %v183
  %185 = vadd.xlane.f32.xlu0 %v184
  %v186 = vpop.xlane.xlu0 %185
  %v187 = vrot.slane %v186, 4
  %v188 = vadd.f32 %v186, %v187
  %v189 = vrot.slane %v188, 2
  %v190 = vadd.f32 %v188, %v189
  %v191 = vrot.slane %v190, 1
  %v192 = vadd.f32 %v190, %v191
  %s193 = vtos %v192
  %v194 = vsel %vm173, %v90, 0.0
  %v195 = vsel %vm173, %v91, 0.0
  %v196 = vsel %vm173, %v92, 0.0
  %v197 = vsel %vm173, %v93, 0.0
  %v198 = vsel %vm73, %v194, 0.0
  %v199 = vsel %vm73, %v195, 0.0
  %v200 = vadd.f32 %v198, %v199
  %v201 = vsel %vm73, %v196, 0.0
  %v202 = vadd.f32 %v200, %v201
  %v203 = vsel %vm73, %v197, 0.0
  %v204 = vadd.f32 %v202, %v203
  %205 = vadd.xlane.f32.xlu0 %v204
  %v206 = vpop.xlane.xlu0 %205
  %v207 = vrot.slane %v206, 4
  %v208 = vadd.f32 %v206, %v207
  %v209 = vrot.slane %v208, 2
  %v210 = vadd.f32 %v208, %v209
  %v211 = vrot.slane %v210, 1
  %v212 = vadd.f32 %v210, %v211
  %s213 = vtos %v212
  %s214 = smul.f32 %s193, 0.001953125
  %s215 = smul.f32 %s213, 0.001953125
  %s216 = smul.f32 %s214, %s214
  %s217 = ssub.f32 %s215, %s216
  %s218 = smax.f32 %s217, 0.0
  %v219 = vstv %s214
  %v220 = vsel %vm173, %v219, %v170
  %v221 = vstv %s218
  %v222 = vsel %vm173, %v221, %v172
  %vm223 = vcmp.eq.s32.totalorder %v67, 3
  %v224 = vsel %vm223, %v59, 0.0
  %v225 = vsel %vm223, %v60, 0.0
  %v226 = vsel %vm223, %v61, 0.0
  %v227 = vsel %vm223, %v62, 0.0
  %v228 = vsel %vm73, %v224, 0.0
  %v229 = vsel %vm73, %v225, 0.0
  %v230 = vadd.f32 %v228, %v229
  %v231 = vsel %vm73, %v226, 0.0
  %v232 = vadd.f32 %v230, %v231
  %v233 = vsel %vm73, %v227, 0.0
  %v234 = vadd.f32 %v232, %v233
  %235 = vadd.xlane.f32.xlu0 %v234
  %v236 = vpop.xlane.xlu0 %235
  %v237 = vrot.slane %v236, 4
  %v238 = vadd.f32 %v236, %v237
  %v239 = vrot.slane %v238, 2
  %v240 = vadd.f32 %v238, %v239
  %v241 = vrot.slane %v240, 1
  %v242 = vadd.f32 %v240, %v241
  %s243 = vtos %v242
  %v244 = vsel %vm223, %v90, 0.0
  %v245 = vsel %vm223, %v91, 0.0
  %v246 = vsel %vm223, %v92, 0.0
  %v247 = vsel %vm223, %v93, 0.0
  %v248 = vsel %vm73, %v244, 0.0
  %v249 = vsel %vm73, %v245, 0.0
  %v250 = vadd.f32 %v248, %v249
  %v251 = vsel %vm73, %v246, 0.0
  %v252 = vadd.f32 %v250, %v251
  %v253 = vsel %vm73, %v247, 0.0
  %v254 = vadd.f32 %v252, %v253
  %255 = vadd.xlane.f32.xlu0 %v254
  %v256 = vpop.xlane.xlu0 %255
  %v257 = vrot.slane %v256, 4
  %v258 = vadd.f32 %v256, %v257
  %v259 = vrot.slane %v258, 2
  %v260 = vadd.f32 %v258, %v259
  %v261 = vrot.slane %v260, 1
  %v262 = vadd.f32 %v260, %v261
  %s263 = vtos %v262
  %s264 = smul.f32 %s243, 0.001953125
  %s265 = smul.f32 %s263, 0.001953125
  %s266 = smul.f32 %s264, %s264
  %s267 = ssub.f32 %s265, %s266
  %s268 = smax.f32 %s267, 0.0
  %v269 = vstv %s264
  %v270 = vsel %vm223, %v269, %v220
  %v271 = vstv %s268
  %v272 = vsel %vm223, %v271, %v222
  %v273 = vadd.f32 %v272, 1e-05
  %v274 = vrsqrt.pop %v273
  %v276 = vlaneseq
  %v277 = vshrl.u32 %v276, 7
  %v278 = vsub.s32 0, %v277
  %v279 = vrot.slane %v63, %v278
  %v281 = vmul.f32 %v279, %v274
  %v282 = vmul.f32 %v270, %v281
  %v284 = vlaneseq
  %v285 = vshrl.u32 %v284, 7
  %v286 = vsub.s32 0, %v285
  %v287 = vrot.slane %v64, %v286
  %v289 = vsub.f32 %v287, %v282
  %v290 = vmul.f32 %v59, %v281
  %v291 = vmul.f32 %v60, %v281
  %v292 = vmul.f32 %v61, %v281
  %v293 = vmul.f32 %v62, %v281
  %v294 = vadd.f32 %v290, %v289
  %v295 = vadd.f32 %v291, %v289
  %v296 = vadd.f32 %v292, %v289
  %v297 = vadd.f32 %v293, %v289
  %v298 = vmax.f32 %v294, 0.0
  %v299 = vmax.f32 %v295, 0.0
  %v300 = vmax.f32 %v296, 0.0
  %v301 = vmax.f32 %v297, 0.0
  %v302 = vld [vmem:[%s1] sm:$0xff]
  %v303 = vld [vmem:[%s1 + $0x8] sm:$0xff]
  %vm304 = vcmask 261120
  %v306 = vsel %vm304, %v302, 0
  %v309 = vsel %vm304, %v303, 0
  %311 = vmatprep.subr.mxu0 0.0
  %312 = vmatpush1.msra.mxu0 0.0
  %313 = vmatprep.subr.mxu0 0.0
  %314 = vmatpush1.msra.mxu0 0.0
  %315 = vmatprep.subr.mxu0 0.0
  %316 = vmatpush1.msra.mxu0 0.0
  %317 = vmatprep.subr.mxu0 0.0
  %318 = vmatpush1.msra.mxu0 0.0
  %319 = vmatprep.subr.mxu0 0.0
  %320 = vmatpush1.msra.mxu0 0.0
  %321 = vmatprep.subr.mxu0 0.0
  %322 = vmatpush1.msra.mxu0 0.0
  %323 = vmatprep.subr.mxu0 0.0
  %324 = vmatpush1.msra.mxu0 0.0
  %325 = vmatprep.subr.mxu0 0.0
  %326 = vmatpush1.msra.mxu0 0.0
  %327 = vmatprep.subr.mxu0 0.0
  %328 = vmatpush1.msra.mxu0 0.0
  %329 = vmatprep.subr.mxu0 0.0
  %330 = vmatpush1.msra.mxu0 0.0
  %331 = vmatprep.subr.mxu0 0.0
  %332 = vmatpush1.msra.mxu0 0.0
  %333 = vmatprep.subr.mxu0 0.0
  %334 = vmatpush1.msra.mxu0 0.0
  %335 = vmatprep.subr.mxu0 0.0
  %336 = vmatpush1.msra.mxu0 %v301
  %337 = vmatprep.subr.mxu0 0.0
  %338 = vmatpush1.msra.mxu0 %v300
  %339 = vmatprep.subr.mxu0 0.0
  %340 = vmatpush1.msra.mxu0 %v299
  %341 = vmatprep.subr.mxu0 0.0
  %342 = vmatpush1.msra.mxu0 %v298
  %343 = vmatprep.subr.mxu0 0.0
  %344 = vmatpush2.msra.mxu0 0.0
  %345 = vmatprep.subr.mxu0 0.0
  %346 = vmatpush2.msra.mxu0 0.0
  %347 = vmatprep.subr.mxu0 0.0
  %348 = vmatpush2.msra.mxu0 0.0
  %349 = vmatprep.subr.mxu0 0.0
  %350 = vmatpush2.msra.mxu0 0.0
  %351 = vmatprep.subr.mxu0 0.0
  %352 = vmatpush2.msra.mxu0 0.0
  %353 = vmatprep.subr.mxu0 0.0
  %354 = vmatpush2.msra.mxu0 0.0
  %355 = vmatprep.subr.mxu0 0.0
  %356 = vmatpush2.msra.mxu0 0.0
  %357 = vmatprep.subr.mxu0 0.0
  %358 = vmatpush2.msra.mxu0 0.0
  %359 = vmatprep.subr.mxu0 0.0
  %360 = vmatpush2.msra.mxu0 0.0
  %361 = vmatprep.subr.mxu0 0.0
  %362 = vmatpush2.msra.mxu0 0.0
  %363 = vmatprep.subr.mxu0 0.0
  %364 = vmatpush2.msra.mxu0 0.0
  %365 = vmatprep.subr.mxu0 0.0
  %366 = vmatpush2.msra.mxu0 0.0
  %367 = vmatprep.subr.mxu0 0.0
  %368 = vmatpush2.msra.mxu0 0.0
  %369 = vmatprep.subr.mxu0 0.0
  %370 = vmatpush2.msra.mxu0 0.0
  %371 = vmatprep.subr.mxu0 0.0
  %372 = vmatpush2.msra.mxu0 0.0
  %373 = vmatprep.subr.mxu0 0.0
  %374 = vmatpush2.msra.mxu0 0.0
  %375 = vmatprep.mubr.f32.mxu0 0.0
  %376 = vmatmul.mubr.f32.gmra.mxu0 %v306
  %v377 = vpop.f32.mrf.mxu0
  %v378 = vadd.f32 0.0, %v377
  %v379 = vpop.f32.mrf.mxu0
  %380 = vmatprep.mubr.f32.mxu0 0.0
  %381 = vmatmul.mubr.f32.gmra.mxu0 %v309
  %v382 = vpop.f32.mrf.mxu0
  %v383 = vadd.f32 0.0, %v382
  %v384 = vpop.f32.mrf.mxu0
  %385 = vdwg.mxu0
  %v386 = vld [vmem:[%s2] sm:$0xff]
  %v387 = vld [vmem:[%s2 + $0x8] sm:$0xff]
  %v388 = vld [vmem:[%s2 + $0x10] sm:$0xff]
  %v389 = vld [vmem:[%s2 + $0x18] sm:$0xff]
  %v390 = vld [vmem:[%s2 + $0x20] sm:$0xff]
  %v391 = vld [vmem:[%s2 + $0x28] sm:$0xff]
  %v392 = vld [vmem:[%s2 + $0x30] sm:$0xff]
  %v393 = vld [vmem:[%s2 + $0x38] sm:$0xff]
  %s394 = scalar_lea.vmem %s1, 16
  %v395 = vld [vmem:[%s394] sm:$0xff]
  %v396 = vld [vmem:[%s394 + $0x8] sm:$0xff]
  %v398 = vsel %vm304, %v395, 0
  %v401 = vsel %vm304, %v396, 0
  %403 = vmatprep.subr.mxu0 0.0
  %404 = vmatpush1.msra.mxu0 0.0
  %405 = vmatprep.subr.mxu0 0.0
  %406 = vmatpush1.msra.mxu0 0.0
  %407 = vmatprep.subr.mxu0 0.0
  %408 = vmatpush1.msra.mxu0 0.0
  %409 = vmatprep.subr.mxu0 0.0
  %410 = vmatpush1.msra.mxu0 0.0
  %411 = vmatprep.subr.mxu0 0.0
  %412 = vmatpush1.msra.mxu0 0.0
  %413 = vmatprep.subr.mxu0 0.0
  %414 = vmatpush1.msra.mxu0 0.0
  %415 = vmatprep.subr.mxu0 0.0
  %416 = vmatpush1.msra.mxu0 0.0
  %417 = vmatprep.subr.mxu0 0.0
  %418 = vmatpush1.msra.mxu0 0.0
  %419 = vmatprep.subr.mxu0 0.0
  %420 = vmatpush1.msra.mxu0 0.0
  %421 = vmatprep.subr.mxu0 0.0
  %422 = vmatpush1.msra.mxu0 0.0
  %423 = vmatprep.subr.mxu0 0.0
  %424 = vmatpush1.msra.mxu0 0.0
  %425 = vmatprep.subr.mxu0 0.0
  %426 = vmatpush1.msra.mxu0 0.0
  %427 = vmatprep.subr.mxu0 0.0
  %428 = vmatpush1.msra.mxu0 %v301
  %429 = vmatprep.subr.mxu0 0.0
  %430 = vmatpush1.msra.mxu0 %v300
  %431 = vmatprep.subr.mxu0 0.0
  %432 = vmatpush1.msra.mxu0 %v299
  %433 = vmatprep.subr.mxu0 0.0
  %434 = vmatpush1.msra.mxu0 %v298
  %435 = vmatprep.subr.mxu0 0.0
  %436 = vmatpush2.msra.mxu0 0.0
  %437 = vmatprep.subr.mxu0 0.0
  %438 = vmatpush2.msra.mxu0 0.0
  %439 = vmatprep.subr.mxu0 0.0
  %440 = vmatpush2.msra.mxu0 0.0
  %441 = vmatprep.subr.mxu0 0.0
  %442 = vmatpush2.msra.mxu0 0.0
  %443 = vmatprep.subr.mxu0 0.0
  %444 = vmatpush2.msra.mxu0 0.0
  %445 = vmatprep.subr.mxu0 0.0
  %446 = vmatpush2.msra.mxu0 0.0
  %447 = vmatprep.subr.mxu0 0.0
  %448 = vmatpush2.msra.mxu0 0.0
  %449 = vmatprep.subr.mxu0 0.0
  %450 = vmatpush2.msra.mxu0 0.0
  %451 = vmatprep.subr.mxu0 0.0
  %452 = vmatpush2.msra.mxu0 0.0
  %453 = vmatprep.subr.mxu0 0.0
  %454 = vmatpush2.msra.mxu0 0.0
  %455 = vmatprep.subr.mxu0 0.0
  %456 = vmatpush2.msra.mxu0 0.0
  %457 = vmatprep.subr.mxu0 0.0
  %458 = vmatpush2.msra.mxu0 0.0
  %459 = vmatprep.subr.mxu0 0.0
  %460 = vmatpush2.msra.mxu0 0.0
  %461 = vmatprep.subr.mxu0 0.0
  %462 = vmatpush2.msra.mxu0 0.0
  %463 = vmatprep.subr.mxu0 0.0
  %464 = vmatpush2.msra.mxu0 0.0
  %465 = vmatprep.subr.mxu0 0.0
  %466 = vmatpush2.msra.mxu0 0.0
  %467 = vmatprep.mubr.f32.mxu0 0.0
  %468 = vmatmul.mubr.f32.gmra.mxu0 %v398
  %v469 = vpop.f32.mrf.mxu0
  %v470 = vadd.f32 0.0, %v469
  %v471 = vpop.f32.mrf.mxu0
  %472 = vmatprep.mubr.f32.mxu0 0.0
  %473 = vmatmul.mubr.f32.gmra.mxu0 %v401
  %v474 = vpop.f32.mrf.mxu0
  %v475 = vadd.f32 0.0, %v474
  %v476 = vpop.f32.mrf.mxu0
  %477 = vdwg.mxu0
  %s478 = scalar_lea.vmem %s2, 64
  %v479 = vld [vmem:[%s478] sm:$0xff]
  %v480 = vld [vmem:[%s478 + $0x8] sm:$0xff]
  %v481 = vld [vmem:[%s478 + $0x10] sm:$0xff]
  %v482 = vld [vmem:[%s478 + $0x18] sm:$0xff]
  %v483 = vld [vmem:[%s478 + $0x20] sm:$0xff]
  %v484 = vld [vmem:[%s478 + $0x28] sm:$0xff]
  %v485 = vld [vmem:[%s478 + $0x30] sm:$0xff]
  %v486 = vld [vmem:[%s478 + $0x38] sm:$0xff]
  %v488 = vsel %vm73, %v470, 0
  %v491 = vsel %vm73, %v475, 0
  %493 = vmatprep.subr.mxu0 0.0
  %494 = vmatpush1.msra.mxu0 0.0
  %495 = vmatprep.subr.mxu0 0.0
  %496 = vmatpush1.msra.mxu0 0.0
  %497 = vmatprep.subr.mxu0 0.0
  %498 = vmatpush1.msra.mxu0 0.0
  %499 = vmatprep.subr.mxu0 0.0
  %500 = vmatpush1.msra.mxu0 0.0
  %501 = vmatprep.subr.mxu0 0.0
  %502 = vmatpush1.msra.mxu0 0.0
  %503 = vmatprep.subr.mxu0 0.0
  %504 = vmatpush1.msra.mxu0 0.0
  %505 = vmatprep.subr.mxu0 0.0
  %506 = vmatpush1.msra.mxu0 0.0
  %507 = vmatprep.subr.mxu0 0.0
  %508 = vmatpush1.msra.mxu0 0.0
  %509 = vmatprep.subr.mxu0 0.0
  %510 = vmatpush1.msra.mxu0 %v486
  %511 = vmatprep.subr.mxu0 0.0
  %512 = vmatpush1.msra.mxu0 %v485
  %513 = vmatprep.subr.mxu0 0.0
  %514 = vmatpush1.msra.mxu0 %v484
  %515 = vmatprep.subr.mxu0 0.0
  %516 = vmatpush1.msra.mxu0 %v483
  %517 = vmatprep.subr.mxu0 0.0
  %518 = vmatpush1.msra.mxu0 %v482
  %519 = vmatprep.subr.mxu0 0.0
  %520 = vmatpush1.msra.mxu0 %v481
  %521 = vmatprep.subr.mxu0 0.0
  %522 = vmatpush1.msra.mxu0 %v480
  %523 = vmatprep.subr.mxu0 0.0
  %524 = vmatpush1.msra.mxu0 %v479
  %525 = vmatprep.subr.mxu0 0.0
  %526 = vmatpush2.msra.mxu0 0.0
  %527 = vmatprep.subr.mxu0 0.0
  %528 = vmatpush2.msra.mxu0 0.0
  %529 = vmatprep.subr.mxu0 0.0
  %530 = vmatpush2.msra.mxu0 0.0
  %531 = vmatprep.subr.mxu0 0.0
  %532 = vmatpush2.msra.mxu0 0.0
  %533 = vmatprep.subr.mxu0 0.0
  %534 = vmatpush2.msra.mxu0 0.0
  %535 = vmatprep.subr.mxu0 0.0
  %536 = vmatpush2.msra.mxu0 0.0
  %537 = vmatprep.subr.mxu0 0.0
  %538 = vmatpush2.msra.mxu0 0.0
  %539 = vmatprep.subr.mxu0 0.0
  %540 = vmatpush2.msra.mxu0 0.0
  %541 = vmatprep.subr.mxu0 0.0
  %542 = vmatpush2.msra.mxu0 0.0
  %543 = vmatprep.subr.mxu0 0.0
  %544 = vmatpush2.msra.mxu0 0.0
  %545 = vmatprep.subr.mxu0 0.0
  %546 = vmatpush2.msra.mxu0 0.0
  %547 = vmatprep.subr.mxu0 0.0
  %548 = vmatpush2.msra.mxu0 0.0
  %549 = vmatprep.subr.mxu0 0.0
  %550 = vmatpush2.msra.mxu0 0.0
  %551 = vmatprep.subr.mxu0 0.0
  %552 = vmatpush2.msra.mxu0 0.0
  %553 = vmatprep.subr.mxu0 0.0
  %554 = vmatpush2.msra.mxu0 0.0
  %555 = vmatprep.subr.mxu0 0.0
  %556 = vmatpush2.msra.mxu0 0.0
  %557 = vmatprep.mubr.f32.mxu0 0.0
  %558 = vmatmul.mubr.f32.gmra.mxu0 %v488
  %v559 = vpop.f32.mrf.mxu0
  %v560 = vadd.f32 0.0, %v559
  %v561 = vpop.f32.mrf.mxu0
  %562 = vmatprep.mubr.f32.mxu0 0.0
  %563 = vmatmul.mubr.f32.gmra.mxu0 %v491
  %v564 = vpop.f32.mrf.mxu0
  %v565 = vadd.f32 0.0, %v564
  %v566 = vpop.f32.mrf.mxu0
  %567 = vdwg.mxu0
  %v569 = vsel %vm73, %v378, 0
  %v572 = vsel %vm73, %v383, 0
  %574 = vmatprep.subr.mxu0 0.0
  %575 = vmatpush1.msra.mxu0 0.0
  %576 = vmatprep.subr.mxu0 0.0
  %577 = vmatpush1.msra.mxu0 0.0
  %578 = vmatprep.subr.mxu0 0.0
  %579 = vmatpush1.msra.mxu0 0.0
  %580 = vmatprep.subr.mxu0 0.0
  %581 = vmatpush1.msra.mxu0 0.0
  %582 = vmatprep.subr.mxu0 0.0
  %583 = vmatpush1.msra.mxu0 0.0
  %584 = vmatprep.subr.mxu0 0.0
  %585 = vmatpush1.msra.mxu0 0.0
  %586 = vmatprep.subr.mxu0 0.0
  %587 = vmatpush1.msra.mxu0 0.0
  %588 = vmatprep.subr.mxu0 0.0
  %589 = vmatpush1.msra.mxu0 0.0
  %590 = vmatprep.subr.mxu0 0.0
  %591 = vmatpush1.msra.mxu0 %v393
  %592 = vmatprep.subr.mxu0 0.0
  %593 = vmatpush1.msra.mxu0 %v392
  %594 = vmatprep.subr.mxu0 0.0
  %595 = vmatpush1.msra.mxu0 %v391
  %596 = vmatprep.subr.mxu0 0.0
  %597 = vmatpush1.msra.mxu0 %v390
  %598 = vmatprep.subr.mxu0 0.0
  %599 = vmatpush1.msra.mxu0 %v389
  %600 = vmatprep.subr.mxu0 0.0
  %601 = vmatpush1.msra.mxu0 %v388
  %602 = vmatprep.subr.mxu0 0.0
  %603 = vmatpush1.msra.mxu0 %v387
  %604 = vmatprep.subr.mxu0 0.0
  %605 = vmatpush1.msra.mxu0 %v386
  %606 = vmatprep.subr.mxu0 0.0
  %607 = vmatpush2.msra.mxu0 0.0
  %608 = vmatprep.subr.mxu0 0.0
  %609 = vmatpush2.msra.mxu0 0.0
  %610 = vmatprep.subr.mxu0 0.0
  %611 = vmatpush2.msra.mxu0 0.0
  %612 = vmatprep.subr.mxu0 0.0
  %613 = vmatpush2.msra.mxu0 0.0
  %614 = vmatprep.subr.mxu0 0.0
  %615 = vmatpush2.msra.mxu0 0.0
  %616 = vmatprep.subr.mxu0 0.0
  %617 = vmatpush2.msra.mxu0 0.0
  %618 = vmatprep.subr.mxu0 0.0
  %619 = vmatpush2.msra.mxu0 0.0
  %620 = vmatprep.subr.mxu0 0.0
  %621 = vmatpush2.msra.mxu0 0.0
  %622 = vmatprep.subr.mxu0 0.0
  %623 = vmatpush2.msra.mxu0 0.0
  %624 = vmatprep.subr.mxu0 0.0
  %625 = vmatpush2.msra.mxu0 0.0
  %626 = vmatprep.subr.mxu0 0.0
  %627 = vmatpush2.msra.mxu0 0.0
  %628 = vmatprep.subr.mxu0 0.0
  %629 = vmatpush2.msra.mxu0 0.0
  %630 = vmatprep.subr.mxu0 0.0
  %631 = vmatpush2.msra.mxu0 0.0
  %632 = vmatprep.subr.mxu0 0.0
  %633 = vmatpush2.msra.mxu0 0.0
  %634 = vmatprep.subr.mxu0 0.0
  %635 = vmatpush2.msra.mxu0 0.0
  %636 = vmatprep.subr.mxu0 0.0
  %637 = vmatpush2.msra.mxu0 0.0
  %638 = vmatprep.mubr.f32.mxu0 0.0
  %639 = vmatmul.mubr.f32.gmra.mxu0 %v569
  %v640 = vpop.f32.mrf.mxu0
  %v641 = vadd.f32 %v560, %v640
  %v642 = vpop.f32.mrf.mxu0
  %643 = vmatprep.mubr.f32.mxu0 0.0
  %644 = vmatmul.mubr.f32.gmra.mxu0 %v572
  %v645 = vpop.f32.mrf.mxu0
  %v646 = vadd.f32 %v565, %v645
  %v647 = vpop.f32.mrf.mxu0
  %648 = vdwg.mxu0
  %s649 = scalar_lea.vmem %s1, 32
  %v650 = vld [vmem:[%s649] sm:$0xff]
  %v651 = vld [vmem:[%s649 + $0x8] sm:$0xff]
  %v653 = vsel %vm304, %v650, 0
  %v656 = vsel %vm304, %v651, 0
  %658 = vmatprep.subr.mxu0 0.0
  %659 = vmatpush1.msra.mxu0 0.0
  %660 = vmatprep.subr.mxu0 0.0
  %661 = vmatpush1.msra.mxu0 0.0
  %662 = vmatprep.subr.mxu0 0.0
  %663 = vmatpush1.msra.mxu0 0.0
  %664 = vmatprep.subr.mxu0 0.0
  %665 = vmatpush1.msra.mxu0 0.0
  %666 = vmatprep.subr.mxu0 0.0
  %667 = vmatpush1.msra.mxu0 0.0
  %668 = vmatprep.subr.mxu0 0.0
  %669 = vmatpush1.msra.mxu0 0.0
  %670 = vmatprep.subr.mxu0 0.0
  %671 = vmatpush1.msra.mxu0 0.0
  %672 = vmatprep.subr.mxu0 0.0
  %673 = vmatpush1.msra.mxu0 0.0
  %674 = vmatprep.subr.mxu0 0.0
  %675 = vmatpush1.msra.mxu0 0.0
  %676 = vmatprep.subr.mxu0 0.0
  %677 = vmatpush1.msra.mxu0 0.0
  %678 = vmatprep.subr.mxu0 0.0
  %679 = vmatpush1.msra.mxu0 0.0
  %680 = vmatprep.subr.mxu0 0.0
  %681 = vmatpush1.msra.mxu0 0.0
  %682 = vmatprep.subr.mxu0 0.0
  %683 = vmatpush1.msra.mxu0 %v301
  %684 = vmatprep.subr.mxu0 0.0
  %685 = vmatpush1.msra.mxu0 %v300
  %686 = vmatprep.subr.mxu0 0.0
  %687 = vmatpush1.msra.mxu0 %v299
  %688 = vmatprep.subr.mxu0 0.0
  %689 = vmatpush1.msra.mxu0 %v298
  %690 = vmatprep.subr.mxu0 0.0
  %691 = vmatpush2.msra.mxu0 0.0
  %692 = vmatprep.subr.mxu0 0.0
  %693 = vmatpush2.msra.mxu0 0.0
  %694 = vmatprep.subr.mxu0 0.0
  %695 = vmatpush2.msra.mxu0 0.0
  %696 = vmatprep.subr.mxu0 0.0
  %697 = vmatpush2.msra.mxu0 0.0
  %698 = vmatprep.subr.mxu0 0.0
  %699 = vmatpush2.msra.mxu0 0.0
  %700 = vmatprep.subr.mxu0 0.0
  %701 = vmatpush2.msra.mxu0 0.0
  %702 = vmatprep.subr.mxu0 0.0
  %703 = vmatpush2.msra.mxu0 0.0
  %704 = vmatprep.subr.mxu0 0.0
  %705 = vmatpush2.msra.mxu0 0.0
  %706 = vmatprep.subr.mxu0 0.0
  %707 = vmatpush2.msra.mxu0 0.0
  %708 = vmatprep.subr.mxu0 0.0
  %709 = vmatpush2.msra.mxu0 0.0
  %710 = vmatprep.subr.mxu0 0.0
  %711 = vmatpush2.msra.mxu0 0.0
  %712 = vmatprep.subr.mxu0 0.0
  %713 = vmatpush2.msra.mxu0 0.0
  %714 = vmatprep.subr.mxu0 0.0
  %715 = vmatpush2.msra.mxu0 0.0
  %716 = vmatprep.subr.mxu0 0.0
  %717 = vmatpush2.msra.mxu0 0.0
  %718 = vmatprep.subr.mxu0 0.0
  %719 = vmatpush2.msra.mxu0 0.0
  %720 = vmatprep.subr.mxu0 0.0
  %721 = vmatpush2.msra.mxu0 0.0
  %722 = vmatprep.mubr.f32.mxu0 0.0
  %723 = vmatmul.mubr.f32.gmra.mxu0 %v653
  %v724 = vpop.f32.mrf.mxu0
  %v725 = vadd.f32 0.0, %v724
  %v726 = vpop.f32.mrf.mxu0
  %727 = vmatprep.mubr.f32.mxu0 0.0
  %728 = vmatmul.mubr.f32.gmra.mxu0 %v656
  %v729 = vpop.f32.mrf.mxu0
  %v730 = vadd.f32 0.0, %v729
  %v731 = vpop.f32.mrf.mxu0
  %732 = vdwg.mxu0
  %s733 = scalar_lea.vmem %s2, 128
  %v734 = vld [vmem:[%s733] sm:$0xff]
  %v735 = vld [vmem:[%s733 + $0x8] sm:$0xff]
  %v736 = vld [vmem:[%s733 + $0x10] sm:$0xff]
  %v737 = vld [vmem:[%s733 + $0x18] sm:$0xff]
  %v738 = vld [vmem:[%s733 + $0x20] sm:$0xff]
  %v739 = vld [vmem:[%s733 + $0x28] sm:$0xff]
  %v740 = vld [vmem:[%s733 + $0x30] sm:$0xff]
  %v741 = vld [vmem:[%s733 + $0x38] sm:$0xff]
  %v743 = vsel %vm73, %v725, 0
  %v746 = vsel %vm73, %v730, 0
  %748 = vmatprep.subr.mxu0 0.0
  %749 = vmatpush1.msra.mxu0 0.0
  %750 = vmatprep.subr.mxu0 0.0
  %751 = vmatpush1.msra.mxu0 0.0
  %752 = vmatprep.subr.mxu0 0.0
  %753 = vmatpush1.msra.mxu0 0.0
  %754 = vmatprep.subr.mxu0 0.0
  %755 = vmatpush1.msra.mxu0 0.0
  %756 = vmatprep.subr.mxu0 0.0
  %757 = vmatpush1.msra.mxu0 0.0
  %758 = vmatprep.subr.mxu0 0.0
  %759 = vmatpush1.msra.mxu0 0.0
  %760 = vmatprep.subr.mxu0 0.0
  %761 = vmatpush1.msra.mxu0 0.0
  %762 = vmatprep.subr.mxu0 0.0
  %763 = vmatpush1.msra.mxu0 0.0
  %764 = vmatprep.subr.mxu0 0.0
  %765 = vmatpush1.msra.mxu0 %v741
  %766 = vmatprep.subr.mxu0 0.0
  %767 = vmatpush1.msra.mxu0 %v740
  %768 = vmatprep.subr.mxu0 0.0
  %769 = vmatpush1.msra.mxu0 %v739
  %770 = vmatprep.subr.mxu0 0.0
  %771 = vmatpush1.msra.mxu0 %v738
  %772 = vmatprep.subr.mxu0 0.0
  %773 = vmatpush1.msra.mxu0 %v737
  %774 = vmatprep.subr.mxu0 0.0
  %775 = vmatpush1.msra.mxu0 %v736
  %776 = vmatprep.subr.mxu0 0.0
  %777 = vmatpush1.msra.mxu0 %v735
  %778 = vmatprep.subr.mxu0 0.0
  %779 = vmatpush1.msra.mxu0 %v734
  %780 = vmatprep.subr.mxu0 0.0
  %781 = vmatpush2.msra.mxu0 0.0
  %782 = vmatprep.subr.mxu0 0.0
  %783 = vmatpush2.msra.mxu0 0.0
  %784 = vmatprep.subr.mxu0 0.0
  %785 = vmatpush2.msra.mxu0 0.0
  %786 = vmatprep.subr.mxu0 0.0
  %787 = vmatpush2.msra.mxu0 0.0
  %788 = vmatprep.subr.mxu0 0.0
  %789 = vmatpush2.msra.mxu0 0.0
  %790 = vmatprep.subr.mxu0 0.0
  %791 = vmatpush2.msra.mxu0 0.0
  %792 = vmatprep.subr.mxu0 0.0
  %793 = vmatpush2.msra.mxu0 0.0
  %794 = vmatprep.subr.mxu0 0.0
  %795 = vmatpush2.msra.mxu0 0.0
  %796 = vmatprep.subr.mxu0 0.0
  %797 = vmatpush2.msra.mxu0 0.0
  %798 = vmatprep.subr.mxu0 0.0
  %799 = vmatpush2.msra.mxu0 0.0
  %800 = vmatprep.subr.mxu0 0.0
  %801 = vmatpush2.msra.mxu0 0.0
  %802 = vmatprep.subr.mxu0 0.0
  %803 = vmatpush2.msra.mxu0 0.0
  %804 = vmatprep.subr.mxu0 0.0
  %805 = vmatpush2.msra.mxu0 0.0
  %806 = vmatprep.subr.mxu0 0.0
  %807 = vmatpush2.msra.mxu0 0.0
  %808 = vmatprep.subr.mxu0 0.0
  %809 = vmatpush2.msra.mxu0 0.0
  %810 = vmatprep.subr.mxu0 0.0
  %811 = vmatpush2.msra.mxu0 0.0
  %812 = vmatprep.mubr.f32.mxu0 0.0
  %813 = vmatmul.mubr.f32.gmra.mxu0 %v743
  %v814 = vpop.f32.mrf.mxu0
  %v815 = vadd.f32 0.0, %v814
  %v816 = vpop.f32.mrf.mxu0
  %817 = vmatprep.mubr.f32.mxu0 0.0
  %818 = vmatmul.mubr.f32.gmra.mxu0 %v746
  %v819 = vpop.f32.mrf.mxu0
  %v820 = vadd.f32 0.0, %v819
  %v821 = vpop.f32.mrf.mxu0
  %822 = vdwg.mxu0
  %v823 = vadd.f32 %v641, %v815
  %v824 = vadd.f32 %v646, %v820
  %v825 = vld [vmem:[%s7] sm:$0x1]
  %v826 = vld [vmem:[%s8] sm:$0x1]
  %v827 = vsel %vm68, %v823, 0.0
  %v828 = vsel %vm68, %v824, 0.0
  %v829 = vsel %vm304, %v827, 0.0
  %v830 = vsel %vm304, %v828, 0.0
  %v831 = vadd.f32 %v829, %v830
  %832 = vadd.xlane.f32.xlu0 %v831
  %v833 = vpop.xlane.xlu0 %832
  %v834 = vrot.slane %v833, 4
  %v835 = vadd.f32 %v833, %v834
  %v836 = vrot.slane %v835, 2
  %v837 = vadd.f32 %v835, %v836
  %v838 = vrot.slane %v837, 1
  %v839 = vadd.f32 %v837, %v838
  %s840 = vtos %v839
  %v841 = vmul.f32 %v823, %v823
  %v842 = vmul.f32 %v824, %v824
  %v843 = vsel %vm68, %v841, 0.0
  %v844 = vsel %vm68, %v842, 0.0
  %v845 = vsel %vm304, %v843, 0.0
  %v846 = vsel %vm304, %v844, 0.0
  %v847 = vadd.f32 %v845, %v846
  %848 = vadd.xlane.f32.xlu0 %v847
  %v849 = vpop.xlane.xlu0 %848
  %v850 = vrot.slane %v849, 4
  %v851 = vadd.f32 %v849, %v850
  %v852 = vrot.slane %v851, 2
  %v853 = vadd.f32 %v851, %v852
  %v854 = vrot.slane %v853, 1
  %v855 = vadd.f32 %v853, %v854
  %s856 = vtos %v855
  %s857 = smul.f32 %s840, 0.0078125
  %s858 = smul.f32 %s856, 0.0078125
  %s859 = smul.f32 %s857, %s857
  %s860 = ssub.f32 %s858, %s859
  %s861 = smax.f32 %s860, 0.0
  %v862 = vstv %s857
  %v863 = vsel %vm68, %v862, 0.0
  %v864 = vstv %s861
  %v865 = vsel %vm68, %v864, 0.0
  %v866 = vsel %vm123, %v823, 0.0
  %v867 = vsel %vm123, %v824, 0.0
  %v868 = vsel %vm304, %v866, 0.0
  %v869 = vsel %vm304, %v867, 0.0
  %v870 = vadd.f32 %v868, %v869
  %871 = vadd.xlane.f32.xlu0 %v870
  %v872 = vpop.xlane.xlu0 %871
  %v873 = vrot.slane %v872, 4
  %v874 = vadd.f32 %v872, %v873
  %v875 = vrot.slane %v874, 2
  %v876 = vadd.f32 %v874, %v875
  %v877 = vrot.slane %v876, 1
  %v878 = vadd.f32 %v876, %v877
  %s879 = vtos %v878
  %v880 = vsel %vm123, %v841, 0.0
  %v881 = vsel %vm123, %v842, 0.0
  %v882 = vsel %vm304, %v880, 0.0
  %v883 = vsel %vm304, %v881, 0.0
  %v884 = vadd.f32 %v882, %v883
  %885 = vadd.xlane.f32.xlu0 %v884
  %v886 = vpop.xlane.xlu0 %885
  %v887 = vrot.slane %v886, 4
  %v888 = vadd.f32 %v886, %v887
  %v889 = vrot.slane %v888, 2
  %v890 = vadd.f32 %v888, %v889
  %v891 = vrot.slane %v890, 1
  %v892 = vadd.f32 %v890, %v891
  %s893 = vtos %v892
  %s894 = smul.f32 %s879, 0.0078125
  %s895 = smul.f32 %s893, 0.0078125
  %s896 = smul.f32 %s894, %s894
  %s897 = ssub.f32 %s895, %s896
  %s898 = smax.f32 %s897, 0.0
  %v899 = vstv %s894
  %v900 = vsel %vm123, %v899, %v863
  %v901 = vstv %s898
  %v902 = vsel %vm123, %v901, %v865
  %v903 = vsel %vm173, %v823, 0.0
  %v904 = vsel %vm173, %v824, 0.0
  %v905 = vsel %vm304, %v903, 0.0
  %v906 = vsel %vm304, %v904, 0.0
  %v907 = vadd.f32 %v905, %v906
  %908 = vadd.xlane.f32.xlu0 %v907
  %v909 = vpop.xlane.xlu0 %908
  %v910 = vrot.slane %v909, 4
  %v911 = vadd.f32 %v909, %v910
  %v912 = vrot.slane %v911, 2
  %v913 = vadd.f32 %v911, %v912
  %v914 = vrot.slane %v913, 1
  %v915 = vadd.f32 %v913, %v914
  %s916 = vtos %v915
  %v917 = vsel %vm173, %v841, 0.0
  %v918 = vsel %vm173, %v842, 0.0
  %v919 = vsel %vm304, %v917, 0.0
  %v920 = vsel %vm304, %v918, 0.0
  %v921 = vadd.f32 %v919, %v920
  %922 = vadd.xlane.f32.xlu0 %v921
  %v923 = vpop.xlane.xlu0 %922
  %v924 = vrot.slane %v923, 4
  %v925 = vadd.f32 %v923, %v924
  %v926 = vrot.slane %v925, 2
  %v927 = vadd.f32 %v925, %v926
  %v928 = vrot.slane %v927, 1
  %v929 = vadd.f32 %v927, %v928
  %s930 = vtos %v929
  %s931 = smul.f32 %s916, 0.0078125
  %s932 = smul.f32 %s930, 0.0078125
  %s933 = smul.f32 %s931, %s931
  %s934 = ssub.f32 %s932, %s933
  %s935 = smax.f32 %s934, 0.0
  %v936 = vstv %s931
  %v937 = vsel %vm173, %v936, %v900
  %v938 = vstv %s935
  %v939 = vsel %vm173, %v938, %v902
  %v940 = vsel %vm223, %v823, 0.0
  %v941 = vsel %vm223, %v824, 0.0
  %v942 = vsel %vm304, %v940, 0.0
  %v943 = vsel %vm304, %v941, 0.0
  %v944 = vadd.f32 %v942, %v943
  %945 = vadd.xlane.f32.xlu0 %v944
  %v946 = vpop.xlane.xlu0 %945
  %v947 = vrot.slane %v946, 4
  %v948 = vadd.f32 %v946, %v947
  %v949 = vrot.slane %v948, 2
  %v950 = vadd.f32 %v948, %v949
  %v951 = vrot.slane %v950, 1
  %v952 = vadd.f32 %v950, %v951
  %s953 = vtos %v952
  %v954 = vsel %vm223, %v841, 0.0
  %v955 = vsel %vm223, %v842, 0.0
  %v956 = vsel %vm304, %v954, 0.0
  %v957 = vsel %vm304, %v955, 0.0
  %v958 = vadd.f32 %v956, %v957
  %959 = vadd.xlane.f32.xlu0 %v958
  %v960 = vpop.xlane.xlu0 %959
  %v961 = vrot.slane %v960, 4
  %v962 = vadd.f32 %v960, %v961
  %v963 = vrot.slane %v962, 2
  %v964 = vadd.f32 %v962, %v963
  %v965 = vrot.slane %v964, 1
  %v966 = vadd.f32 %v964, %v965
  %s967 = vtos %v966
  %s968 = smul.f32 %s953, 0.0078125
  %s969 = smul.f32 %s967, 0.0078125
  %s970 = smul.f32 %s968, %s968
  %s971 = ssub.f32 %s969, %s970
  %s972 = smax.f32 %s971, 0.0
  %v973 = vstv %s968
  %v974 = vsel %vm223, %v973, %v937
  %v975 = vstv %s972
  %v976 = vsel %vm223, %v975, %v939
  %v977 = vadd.f32 %v976, 1e-05
  %v978 = vrsqrt.pop %v977
  %v980 = vlaneseq
  %v981 = vshrl.u32 %v980, 7
  %v982 = vsub.s32 0, %v981
  %v983 = vrot.slane %v825, %v982
  %v985 = vmul.f32 %v983, %v978
  %v986 = vmul.f32 %v974, %v985
  %v988 = vlaneseq
  %v989 = vshrl.u32 %v988, 7
  %v990 = vsub.s32 0, %v989
  %v991 = vrot.slane %v826, %v990
  %v993 = vsub.f32 %v991, %v986
  %v994 = vmul.f32 %v823, %v985
  %v995 = vmul.f32 %v824, %v985
  %v996 = vadd.f32 %v994, %v993
  %v997 = vadd.f32 %v995, %v993
  %v998 = vmax.f32 %v996, 0.0
  %v999 = vmax.f32 %v997, 0.0
  %v1000 = vld [vmem:[%s5] sm:$0xff]
  %vm1001 = vcmask 130048
  %v1003 = vsel %vm1001, %v1000, 0
  %1005 = vmatprep.subr.mxu0 0.0
  %1006 = vmatpush1.msra.mxu0 0.0
  %1007 = vmatprep.subr.mxu0 0.0
  %1008 = vmatpush1.msra.mxu0 0.0
  %1009 = vmatprep.subr.mxu0 0.0
  %1010 = vmatpush1.msra.mxu0 0.0
  %1011 = vmatprep.subr.mxu0 0.0
  %1012 = vmatpush1.msra.mxu0 0.0
  %1013 = vmatprep.subr.mxu0 0.0
  %1014 = vmatpush1.msra.mxu0 0.0
  %1015 = vmatprep.subr.mxu0 0.0
  %1016 = vmatpush1.msra.mxu0 0.0
  %1017 = vmatprep.subr.mxu0 0.0
  %1018 = vmatpush1.msra.mxu0 0.0
  %1019 = vmatprep.subr.mxu0 0.0
  %1020 = vmatpush1.msra.mxu0 0.0
  %1021 = vmatprep.subr.mxu0 0.0
  %1022 = vmatpush1.msra.mxu0 0.0
  %1023 = vmatprep.subr.mxu0 0.0
  %1024 = vmatpush1.msra.mxu0 0.0
  %1025 = vmatprep.subr.mxu0 0.0
  %1026 = vmatpush1.msra.mxu0 0.0
  %1027 = vmatprep.subr.mxu0 0.0
  %1028 = vmatpush1.msra.mxu0 0.0
  %1029 = vmatprep.subr.mxu0 0.0
  %1030 = vmatpush1.msra.mxu0 0.0
  %1031 = vmatprep.subr.mxu0 0.0
  %1032 = vmatpush1.msra.mxu0 0.0
  %1033 = vmatprep.subr.mxu0 0.0
  %1034 = vmatpush1.msra.mxu0 %v999
  %1035 = vmatprep.subr.mxu0 0.0
  %1036 = vmatpush1.msra.mxu0 %v998
  %1037 = vmatprep.subr.mxu0 0.0
  %1038 = vmatpush2.msra.mxu0 0.0
  %1039 = vmatprep.subr.mxu0 0.0
  %1040 = vmatpush2.msra.mxu0 0.0
  %1041 = vmatprep.subr.mxu0 0.0
  %1042 = vmatpush2.msra.mxu0 0.0
  %1043 = vmatprep.subr.mxu0 0.0
  %1044 = vmatpush2.msra.mxu0 0.0
  %1045 = vmatprep.subr.mxu0 0.0
  %1046 = vmatpush2.msra.mxu0 0.0
  %1047 = vmatprep.subr.mxu0 0.0
  %1048 = vmatpush2.msra.mxu0 0.0
  %1049 = vmatprep.subr.mxu0 0.0
  %1050 = vmatpush2.msra.mxu0 0.0
  %1051 = vmatprep.subr.mxu0 0.0
  %1052 = vmatpush2.msra.mxu0 0.0
  %1053 = vmatprep.subr.mxu0 0.0
  %1054 = vmatpush2.msra.mxu0 0.0
  %1055 = vmatprep.subr.mxu0 0.0
  %1056 = vmatpush2.msra.mxu0 0.0
  %1057 = vmatprep.subr.mxu0 0.0
  %1058 = vmatpush2.msra.mxu0 0.0
  %1059 = vmatprep.subr.mxu0 0.0
  %1060 = vmatpush2.msra.mxu0 0.0
  %1061 = vmatprep.subr.mxu0 0.0
  %1062 = vmatpush2.msra.mxu0 0.0
  %1063 = vmatprep.subr.mxu0 0.0
  %1064 = vmatpush2.msra.mxu0 0.0
  %1065 = vmatprep.subr.mxu0 0.0
  %1066 = vmatpush2.msra.mxu0 0.0
  %1067 = vmatprep.subr.mxu0 0.0
  %1068 = vmatpush2.msra.mxu0 0.0
  %1069 = vmatprep.mubr.f32.mxu0 0.0
  %1070 = vmatmul.mubr.f32.gmra.mxu0 %v1003
  %v1071 = vpop.f32.mrf.mxu0
  %v1072 = vadd.f32 0.0, %v1071
  %v1073 = vpop.f32.mrf.mxu0
  %1074 = vdwg.mxu0
  %v1075 = vld [vmem:[%s6] sm:$0xff]
  %v1076 = vld [vmem:[%s6 + $0x8] sm:$0xff]
  %v1077 = vld [vmem:[%s6 + $0x10] sm:$0xff]
  %v1078 = vld [vmem:[%s6 + $0x18] sm:$0xff]
  %s1079 = scalar_lea.vmem %s5, 8
  %v1080 = vld [vmem:[%s1079] sm:$0xff]
  %v1082 = vsel %vm1001, %v1080, 0
  %1084 = vmatprep.subr.mxu0 0.0
  %1085 = vmatpush1.msra.mxu0 0.0
  %1086 = vmatprep.subr.mxu0 0.0
  %1087 = vmatpush1.msra.mxu0 0.0
  %1088 = vmatprep.subr.mxu0 0.0
  %1089 = vmatpush1.msra.mxu0 0.0
  %1090 = vmatprep.subr.mxu0 0.0
  %1091 = vmatpush1.msra.mxu0 0.0
  %1092 = vmatprep.subr.mxu0 0.0
  %1093 = vmatpush1.msra.mxu0 0.0
  %1094 = vmatprep.subr.mxu0 0.0
  %1095 = vmatpush1.msra.mxu0 0.0
  %1096 = vmatprep.subr.mxu0 0.0
  %1097 = vmatpush1.msra.mxu0 0.0
  %1098 = vmatprep.subr.mxu0 0.0
  %1099 = vmatpush1.msra.mxu0 0.0
  %1100 = vmatprep.subr.mxu0 0.0
  %1101 = vmatpush1.msra.mxu0 0.0
  %1102 = vmatprep.subr.mxu0 0.0
  %1103 = vmatpush1.msra.mxu0 0.0
  %1104 = vmatprep.subr.mxu0 0.0
  %1105 = vmatpush1.msra.mxu0 0.0
  %1106 = vmatprep.subr.mxu0 0.0
  %1107 = vmatpush1.msra.mxu0 0.0
  %1108 = vmatprep.subr.mxu0 0.0
  %1109 = vmatpush1.msra.mxu0 0.0
  %1110 = vmatprep.subr.mxu0 0.0
  %1111 = vmatpush1.msra.mxu0 0.0
  %1112 = vmatprep.subr.mxu0 0.0
  %1113 = vmatpush1.msra.mxu0 %v999
  %1114 = vmatprep.subr.mxu0 0.0
  %1115 = vmatpush1.msra.mxu0 %v998
  %1116 = vmatprep.subr.mxu0 0.0
  %1117 = vmatpush2.msra.mxu0 0.0
  %1118 = vmatprep.subr.mxu0 0.0
  %1119 = vmatpush2.msra.mxu0 0.0
  %1120 = vmatprep.subr.mxu0 0.0
  %1121 = vmatpush2.msra.mxu0 0.0
  %1122 = vmatprep.subr.mxu0 0.0
  %1123 = vmatpush2.msra.mxu0 0.0
  %1124 = vmatprep.subr.mxu0 0.0
  %1125 = vmatpush2.msra.mxu0 0.0
  %1126 = vmatprep.subr.mxu0 0.0
  %1127 = vmatpush2.msra.mxu0 0.0
  %1128 = vmatprep.subr.mxu0 0.0
  %1129 = vmatpush2.msra.mxu0 0.0
  %1130 = vmatprep.subr.mxu0 0.0
  %1131 = vmatpush2.msra.mxu0 0.0
  %1132 = vmatprep.subr.mxu0 0.0
  %1133 = vmatpush2.msra.mxu0 0.0
  %1134 = vmatprep.subr.mxu0 0.0
  %1135 = vmatpush2.msra.mxu0 0.0
  %1136 = vmatprep.subr.mxu0 0.0
  %1137 = vmatpush2.msra.mxu0 0.0
  %1138 = vmatprep.subr.mxu0 0.0
  %1139 = vmatpush2.msra.mxu0 0.0
  %1140 = vmatprep.subr.mxu0 0.0
  %1141 = vmatpush2.msra.mxu0 0.0
  %1142 = vmatprep.subr.mxu0 0.0
  %1143 = vmatpush2.msra.mxu0 0.0
  %1144 = vmatprep.subr.mxu0 0.0
  %1145 = vmatpush2.msra.mxu0 0.0
  %1146 = vmatprep.subr.mxu0 0.0
  %1147 = vmatpush2.msra.mxu0 0.0
  %1148 = vmatprep.mubr.f32.mxu0 0.0
  %1149 = vmatmul.mubr.f32.gmra.mxu0 %v1082
  %v1150 = vpop.f32.mrf.mxu0
  %v1151 = vadd.f32 0.0, %v1150
  %v1152 = vpop.f32.mrf.mxu0
  %1153 = vdwg.mxu0
  %s1154 = scalar_lea.vmem %s6, 32
  %v1155 = vld [vmem:[%s1154] sm:$0xff]
  %v1156 = vld [vmem:[%s1154 + $0x8] sm:$0xff]
  %v1157 = vld [vmem:[%s1154 + $0x10] sm:$0xff]
  %v1158 = vld [vmem:[%s1154 + $0x18] sm:$0xff]
  %v1160 = vsel %vm304, %v1151, 0
  %1162 = vmatprep.subr.mxu0 0.0
  %1163 = vmatpush1.msra.mxu0 0.0
  %1164 = vmatprep.subr.mxu0 0.0
  %1165 = vmatpush1.msra.mxu0 0.0
  %1166 = vmatprep.subr.mxu0 0.0
  %1167 = vmatpush1.msra.mxu0 0.0
  %1168 = vmatprep.subr.mxu0 0.0
  %1169 = vmatpush1.msra.mxu0 0.0
  %1170 = vmatprep.subr.mxu0 0.0
  %1171 = vmatpush1.msra.mxu0 0.0
  %1172 = vmatprep.subr.mxu0 0.0
  %1173 = vmatpush1.msra.mxu0 0.0
  %1174 = vmatprep.subr.mxu0 0.0
  %1175 = vmatpush1.msra.mxu0 0.0
  %1176 = vmatprep.subr.mxu0 0.0
  %1177 = vmatpush1.msra.mxu0 0.0
  %1178 = vmatprep.subr.mxu0 0.0
  %1179 = vmatpush1.msra.mxu0 0.0
  %1180 = vmatprep.subr.mxu0 0.0
  %1181 = vmatpush1.msra.mxu0 0.0
  %1182 = vmatprep.subr.mxu0 0.0
  %1183 = vmatpush1.msra.mxu0 0.0
  %1184 = vmatprep.subr.mxu0 0.0
  %1185 = vmatpush1.msra.mxu0 0.0
  %1186 = vmatprep.subr.mxu0 0.0
  %1187 = vmatpush1.msra.mxu0 %v1158
  %1188 = vmatprep.subr.mxu0 0.0
  %1189 = vmatpush1.msra.mxu0 %v1157
  %1190 = vmatprep.subr.mxu0 0.0
  %1191 = vmatpush1.msra.mxu0 %v1156
  %1192 = vmatprep.subr.mxu0 0.0
  %1193 = vmatpush1.msra.mxu0 %v1155
  %1194 = vmatprep.subr.mxu0 0.0
  %1195 = vmatpush2.msra.mxu0 0.0
  %1196 = vmatprep.subr.mxu0 0.0
  %1197 = vmatpush2.msra.mxu0 0.0
  %1198 = vmatprep.subr.mxu0 0.0
  %1199 = vmatpush2.msra.mxu0 0.0
  %1200 = vmatprep.subr.mxu0 0.0
  %1201 = vmatpush2.msra.mxu0 0.0
  %1202 = vmatprep.subr.mxu0 0.0
  %1203 = vmatpush2.msra.mxu0 0.0
  %1204 = vmatprep.subr.mxu0 0.0
  %1205 = vmatpush2.msra.mxu0 0.0
  %1206 = vmatprep.subr.mxu0 0.0
  %1207 = vmatpush2.msra.mxu0 0.0
  %1208 = vmatprep.subr.mxu0 0.0
  %1209 = vmatpush2.msra.mxu0 0.0
  %1210 = vmatprep.subr.mxu0 0.0
  %1211 = vmatpush2.msra.mxu0 0.0
  %1212 = vmatprep.subr.mxu0 0.0
  %1213 = vmatpush2.msra.mxu0 0.0
  %1214 = vmatprep.subr.mxu0 0.0
  %1215 = vmatpush2.msra.mxu0 0.0
  %1216 = vmatprep.subr.mxu0 0.0
  %1217 = vmatpush2.msra.mxu0 0.0
  %1218 = vmatprep.subr.mxu0 0.0
  %1219 = vmatpush2.msra.mxu0 0.0
  %1220 = vmatprep.subr.mxu0 0.0
  %1221 = vmatpush2.msra.mxu0 0.0
  %1222 = vmatprep.subr.mxu0 0.0
  %1223 = vmatpush2.msra.mxu0 0.0
  %1224 = vmatprep.subr.mxu0 0.0
  %1225 = vmatpush2.msra.mxu0 0.0
  %1226 = vmatprep.mubr.f32.mxu0 0.0
  %1227 = vmatmul.mubr.f32.gmra.mxu0 %v1160
  %v1228 = vpop.f32.mrf.mxu0
  %v1229 = vadd.f32 0.0, %v1228
  %v1230 = vpop.f32.mrf.mxu0
  %1231 = vdwg.mxu0
  %v1233 = vsel %vm304, %v1072, 0
  %1235 = vmatprep.subr.mxu0 0.0
  %1236 = vmatpush1.msra.mxu0 0.0
  %1237 = vmatprep.subr.mxu0 0.0
  %1238 = vmatpush1.msra.mxu0 0.0
  %1239 = vmatprep.subr.mxu0 0.0
  %1240 = vmatpush1.msra.mxu0 0.0
  %1241 = vmatprep.subr.mxu0 0.0
  %1242 = vmatpush1.msra.mxu0 0.0
  %1243 = vmatprep.subr.mxu0 0.0
  %1244 = vmatpush1.msra.mxu0 0.0
  %1245 = vmatprep.subr.mxu0 0.0
  %1246 = vmatpush1.msra.mxu0 0.0
  %1247 = vmatprep.subr.mxu0 0.0
  %1248 = vmatpush1.msra.mxu0 0.0
  %1249 = vmatprep.subr.mxu0 0.0
  %1250 = vmatpush1.msra.mxu0 0.0
  %1251 = vmatprep.subr.mxu0 0.0
  %1252 = vmatpush1.msra.mxu0 0.0
  %1253 = vmatprep.subr.mxu0 0.0
  %1254 = vmatpush1.msra.mxu0 0.0
  %1255 = vmatprep.subr.mxu0 0.0
  %1256 = vmatpush1.msra.mxu0 0.0
  %1257 = vmatprep.subr.mxu0 0.0
  %1258 = vmatpush1.msra.mxu0 0.0
  %1259 = vmatprep.subr.mxu0 0.0
  %1260 = vmatpush1.msra.mxu0 %v1078
  %1261 = vmatprep.subr.mxu0 0.0
  %1262 = vmatpush1.msra.mxu0 %v1077
  %1263 = vmatprep.subr.mxu0 0.0
  %1264 = vmatpush1.msra.mxu0 %v1076
  %1265 = vmatprep.subr.mxu0 0.0
  %1266 = vmatpush1.msra.mxu0 %v1075
  %1267 = vmatprep.subr.mxu0 0.0
  %1268 = vmatpush2.msra.mxu0 0.0
  %1269 = vmatprep.subr.mxu0 0.0
  %1270 = vmatpush2.msra.mxu0 0.0
  %1271 = vmatprep.subr.mxu0 0.0
  %1272 = vmatpush2.msra.mxu0 0.0
  %1273 = vmatprep.subr.mxu0 0.0
  %1274 = vmatpush2.msra.mxu0 0.0
  %1275 = vmatprep.subr.mxu0 0.0
  %1276 = vmatpush2.msra.mxu0 0.0
  %1277 = vmatprep.subr.mxu0 0.0
  %1278 = vmatpush2.msra.mxu0 0.0
  %1279 = vmatprep.subr.mxu0 0.0
  %1280 = vmatpush2.msra.mxu0 0.0
  %1281 = vmatprep.subr.mxu0 0.0
  %1282 = vmatpush2.msra.mxu0 0.0
  %1283 = vmatprep.subr.mxu0 0.0
  %1284 = vmatpush2.msra.mxu0 0.0
  %1285 = vmatprep.subr.mxu0 0.0
  %1286 = vmatpush2.msra.mxu0 0.0
  %1287 = vmatprep.subr.mxu0 0.0
  %1288 = vmatpush2.msra.mxu0 0.0
  %1289 = vmatprep.subr.mxu0 0.0
  %1290 = vmatpush2.msra.mxu0 0.0
  %1291 = vmatprep.subr.mxu0 0.0
  %1292 = vmatpush2.msra.mxu0 0.0
  %1293 = vmatprep.subr.mxu0 0.0
  %1294 = vmatpush2.msra.mxu0 0.0
  %1295 = vmatprep.subr.mxu0 0.0
  %1296 = vmatpush2.msra.mxu0 0.0
  %1297 = vmatprep.subr.mxu0 0.0
  %1298 = vmatpush2.msra.mxu0 0.0
  %1299 = vmatprep.mubr.f32.mxu0 0.0
  %1300 = vmatmul.mubr.f32.gmra.mxu0 %v1233
  %v1301 = vpop.f32.mrf.mxu0
  %v1302 = vadd.f32 %v1229, %v1301
  %v1303 = vpop.f32.mrf.mxu0
  %1304 = vdwg.mxu0
  %s1305 = scalar_lea.vmem %s5, 16
  %v1306 = vld [vmem:[%s1305] sm:$0xff]
  %v1308 = vsel %vm1001, %v1306, 0
  %1310 = vmatprep.subr.mxu0 0.0
  %1311 = vmatpush1.msra.mxu0 0.0
  %1312 = vmatprep.subr.mxu0 0.0
  %1313 = vmatpush1.msra.mxu0 0.0
  %1314 = vmatprep.subr.mxu0 0.0
  %1315 = vmatpush1.msra.mxu0 0.0
  %1316 = vmatprep.subr.mxu0 0.0
  %1317 = vmatpush1.msra.mxu0 0.0
  %1318 = vmatprep.subr.mxu0 0.0
  %1319 = vmatpush1.msra.mxu0 0.0
  %1320 = vmatprep.subr.mxu0 0.0
  %1321 = vmatpush1.msra.mxu0 0.0
  %1322 = vmatprep.subr.mxu0 0.0
  %1323 = vmatpush1.msra.mxu0 0.0
  %1324 = vmatprep.subr.mxu0 0.0
  %1325 = vmatpush1.msra.mxu0 0.0
  %1326 = vmatprep.subr.mxu0 0.0
  %1327 = vmatpush1.msra.mxu0 0.0
  %1328 = vmatprep.subr.mxu0 0.0
  %1329 = vmatpush1.msra.mxu0 0.0
  %1330 = vmatprep.subr.mxu0 0.0
  %1331 = vmatpush1.msra.mxu0 0.0
  %1332 = vmatprep.subr.mxu0 0.0
  %1333 = vmatpush1.msra.mxu0 0.0
  %1334 = vmatprep.subr.mxu0 0.0
  %1335 = vmatpush1.msra.mxu0 0.0
  %1336 = vmatprep.subr.mxu0 0.0
  %1337 = vmatpush1.msra.mxu0 0.0
  %1338 = vmatprep.subr.mxu0 0.0
  %1339 = vmatpush1.msra.mxu0 %v999
  %1340 = vmatprep.subr.mxu0 0.0
  %1341 = vmatpush1.msra.mxu0 %v998
  %1342 = vmatprep.subr.mxu0 0.0
  %1343 = vmatpush2.msra.mxu0 0.0
  %1344 = vmatprep.subr.mxu0 0.0
  %1345 = vmatpush2.msra.mxu0 0.0
  %1346 = vmatprep.subr.mxu0 0.0
  %1347 = vmatpush2.msra.mxu0 0.0
  %1348 = vmatprep.subr.mxu0 0.0
  %1349 = vmatpush2.msra.mxu0 0.0
  %1350 = vmatprep.subr.mxu0 0.0
  %1351 = vmatpush2.msra.mxu0 0.0
  %1352 = vmatprep.subr.mxu0 0.0
  %1353 = vmatpush2.msra.mxu0 0.0
  %1354 = vmatprep.subr.mxu0 0.0
  %1355 = vmatpush2.msra.mxu0 0.0
  %1356 = vmatprep.subr.mxu0 0.0
  %1357 = vmatpush2.msra.mxu0 0.0
  %1358 = vmatprep.subr.mxu0 0.0
  %1359 = vmatpush2.msra.mxu0 0.0
  %1360 = vmatprep.subr.mxu0 0.0
  %1361 = vmatpush2.msra.mxu0 0.0
  %1362 = vmatprep.subr.mxu0 0.0
  %1363 = vmatpush2.msra.mxu0 0.0
  %1364 = vmatprep.subr.mxu0 0.0
  %1365 = vmatpush2.msra.mxu0 0.0
  %1366 = vmatprep.subr.mxu0 0.0
  %1367 = vmatpush2.msra.mxu0 0.0
  %1368 = vmatprep.subr.mxu0 0.0
  %1369 = vmatpush2.msra.mxu0 0.0
  %1370 = vmatprep.subr.mxu0 0.0
  %1371 = vmatpush2.msra.mxu0 0.0
  %1372 = vmatprep.subr.mxu0 0.0
  %1373 = vmatpush2.msra.mxu0 0.0
  %1374 = vmatprep.mubr.f32.mxu0 0.0
  %1375 = vmatmul.mubr.f32.gmra.mxu0 %v1308
  %v1376 = vpop.f32.mrf.mxu0
  %v1377 = vadd.f32 0.0, %v1376
  %v1378 = vpop.f32.mrf.mxu0
  %1379 = vdwg.mxu0
  %s1380 = scalar_lea.vmem %s6, 64
  %v1381 = vld [vmem:[%s1380] sm:$0xff]
  %v1382 = vld [vmem:[%s1380 + $0x8] sm:$0xff]
  %v1383 = vld [vmem:[%s1380 + $0x10] sm:$0xff]
  %v1384 = vld [vmem:[%s1380 + $0x18] sm:$0xff]
  %v1386 = vsel %vm304, %v1377, 0
  %1388 = vmatprep.subr.mxu0 0.0
  %1389 = vmatpush1.msra.mxu0 0.0
  %1390 = vmatprep.subr.mxu0 0.0
  %1391 = vmatpush1.msra.mxu0 0.0
  %1392 = vmatprep.subr.mxu0 0.0
  %1393 = vmatpush1.msra.mxu0 0.0
  %1394 = vmatprep.subr.mxu0 0.0
  %1395 = vmatpush1.msra.mxu0 0.0
  %1396 = vmatprep.subr.mxu0 0.0
  %1397 = vmatpush1.msra.mxu0 0.0
  %1398 = vmatprep.subr.mxu0 0.0
  %1399 = vmatpush1.msra.mxu0 0.0
  %1400 = vmatprep.subr.mxu0 0.0
  %1401 = vmatpush1.msra.mxu0 0.0
  %1402 = vmatprep.subr.mxu0 0.0
  %1403 = vmatpush1.msra.mxu0 0.0
  %1404 = vmatprep.subr.mxu0 0.0
  %1405 = vmatpush1.msra.mxu0 0.0
  %1406 = vmatprep.subr.mxu0 0.0
  %1407 = vmatpush1.msra.mxu0 0.0
  %1408 = vmatprep.subr.mxu0 0.0
  %1409 = vmatpush1.msra.mxu0 0.0
  %1410 = vmatprep.subr.mxu0 0.0
  %1411 = vmatpush1.msra.mxu0 0.0
  %1412 = vmatprep.subr.mxu0 0.0
  %1413 = vmatpush1.msra.mxu0 %v1384
  %1414 = vmatprep.subr.mxu0 0.0
  %1415 = vmatpush1.msra.mxu0 %v1383
  %1416 = vmatprep.subr.mxu0 0.0
  %1417 = vmatpush1.msra.mxu0 %v1382
  %1418 = vmatprep.subr.mxu0 0.0
  %1419 = vmatpush1.msra.mxu0 %v1381
  %1420 = vmatprep.subr.mxu0 0.0
  %1421 = vmatpush2.msra.mxu0 0.0
  %1422 = vmatprep.subr.mxu0 0.0
  %1423 = vmatpush2.msra.mxu0 0.0
  %1424 = vmatprep.subr.mxu0 0.0
  %1425 = vmatpush2.msra.mxu0 0.0
  %1426 = vmatprep.subr.mxu0 0.0
  %1427 = vmatpush2.msra.mxu0 0.0
  %1428 = vmatprep.subr.mxu0 0.0
  %1429 = vmatpush2.msra.mxu0 0.0
  %1430 = vmatprep.subr.mxu0 0.0
  %1431 = vmatpush2.msra.mxu0 0.0
  %1432 = vmatprep.subr.mxu0 0.0
  %1433 = vmatpush2.msra.mxu0 0.0
  %1434 = vmatprep.subr.mxu0 0.0
  %1435 = vmatpush2.msra.mxu0 0.0
  %1436 = vmatprep.subr.mxu0 0.0
  %1437 = vmatpush2.msra.mxu0 0.0
  %1438 = vmatprep.subr.mxu0 0.0
  %1439 = vmatpush2.msra.mxu0 0.0
  %1440 = vmatprep.subr.mxu0 0.0
  %1441 = vmatpush2.msra.mxu0 0.0
  %1442 = vmatprep.subr.mxu0 0.0
  %1443 = vmatpush2.msra.mxu0 0.0
  %1444 = vmatprep.subr.mxu0 0.0
  %1445 = vmatpush2.msra.mxu0 0.0
  %1446 = vmatprep.subr.mxu0 0.0
  %1447 = vmatpush2.msra.mxu0 0.0
  %1448 = vmatprep.subr.mxu0 0.0
  %1449 = vmatpush2.msra.mxu0 0.0
  %1450 = vmatprep.subr.mxu0 0.0
  %1451 = vmatpush2.msra.mxu0 0.0
  %1452 = vmatprep.mubr.f32.mxu0 0.0
  %1453 = vmatmul.mubr.f32.gmra.mxu0 %v1386
  %v1454 = vpop.f32.mrf.mxu0
  %v1455 = vadd.f32 0.0, %v1454
  %v1456 = vpop.f32.mrf.mxu0
  %1457 = vdwg.mxu0
  %v1458 = vadd.f32 %v1302, %v1455
  %v1459 = vld [vmem:[%s11] sm:$0x1]
  %v1460 = vld [vmem:[%s12] sm:$0x1]
  %v1461 = vsel %vm68, %v1458, 0.0
  %v1462 = vsel %vm1001, %v1461, 0.0
  %1463 = vadd.xlane.f32.xlu0 %v1462
  %v1464 = vpop.xlane.xlu0 %1463
  %v1465 = vrot.slane %v1464, 4
  %v1466 = vadd.f32 %v1464, %v1465
  %v1467 = vrot.slane %v1466, 2
  %v1468 = vadd.f32 %v1466, %v1467
  %v1469 = vrot.slane %v1468, 1
  %v1470 = vadd.f32 %v1468, %v1469
  %s1471 = vtos %v1470
  %v1472 = vmul.f32 %v1458, %v1458
  %v1473 = vsel %vm68, %v1472, 0.0
  %v1474 = vsel %vm1001, %v1473, 0.0
  %1475 = vadd.xlane.f32.xlu0 %v1474
  %v1476 = vpop.xlane.xlu0 %1475
  %v1477 = vrot.slane %v1476, 4
  %v1478 = vadd.f32 %v1476, %v1477
  %v1479 = vrot.slane %v1478, 2
  %v1480 = vadd.f32 %v1478, %v1479
  %v1481 = vrot.slane %v1480, 1
  %v1482 = vadd.f32 %v1480, %v1481
  %s1483 = vtos %v1482
  %s1484 = smul.f32 %s1471, 0.03125
  %s1485 = smul.f32 %s1483, 0.03125
  %s1486 = smul.f32 %s1484, %s1484
  %s1487 = ssub.f32 %s1485, %s1486
  %s1488 = smax.f32 %s1487, 0.0
  %v1489 = vstv %s1484
  %v1490 = vsel %vm68, %v1489, 0.0
  %v1491 = vstv %s1488
  %v1492 = vsel %vm68, %v1491, 0.0
  %v1493 = vsel %vm123, %v1458, 0.0
  %v1494 = vsel %vm1001, %v1493, 0.0
  %1495 = vadd.xlane.f32.xlu0 %v1494
  %v1496 = vpop.xlane.xlu0 %1495
  %v1497 = vrot.slane %v1496, 4
  %v1498 = vadd.f32 %v1496, %v1497
  %v1499 = vrot.slane %v1498, 2
  %v1500 = vadd.f32 %v1498, %v1499
  %v1501 = vrot.slane %v1500, 1
  %v1502 = vadd.f32 %v1500, %v1501
  %s1503 = vtos %v1502
  %v1504 = vsel %vm123, %v1472, 0.0
  %v1505 = vsel %vm1001, %v1504, 0.0
  %1506 = vadd.xlane.f32.xlu0 %v1505
  %v1507 = vpop.xlane.xlu0 %1506
  %v1508 = vrot.slane %v1507, 4
  %v1509 = vadd.f32 %v1507, %v1508
  %v1510 = vrot.slane %v1509, 2
  %v1511 = vadd.f32 %v1509, %v1510
  %v1512 = vrot.slane %v1511, 1
  %v1513 = vadd.f32 %v1511, %v1512
  %s1514 = vtos %v1513
  %s1515 = smul.f32 %s1503, 0.03125
  %s1516 = smul.f32 %s1514, 0.03125
  %s1517 = smul.f32 %s1515, %s1515
  %s1518 = ssub.f32 %s1516, %s1517
  %s1519 = smax.f32 %s1518, 0.0
  %v1520 = vstv %s1515
  %v1521 = vsel %vm123, %v1520, %v1490
  %v1522 = vstv %s1519
  %v1523 = vsel %vm123, %v1522, %v1492
  %v1524 = vsel %vm173, %v1458, 0.0
  %v1525 = vsel %vm1001, %v1524, 0.0
  %1526 = vadd.xlane.f32.xlu0 %v1525
  %v1527 = vpop.xlane.xlu0 %1526
  %v1528 = vrot.slane %v1527, 4
  %v1529 = vadd.f32 %v1527, %v1528
  %v1530 = vrot.slane %v1529, 2
  %v1531 = vadd.f32 %v1529, %v1530
  %v1532 = vrot.slane %v1531, 1
  %v1533 = vadd.f32 %v1531, %v1532
  %s1534 = vtos %v1533
  %v1535 = vsel %vm173, %v1472, 0.0
  %v1536 = vsel %vm1001, %v1535, 0.0
  %1537 = vadd.xlane.f32.xlu0 %v1536
  %v1538 = vpop.xlane.xlu0 %1537
  %v1539 = vrot.slane %v1538, 4
  %v1540 = vadd.f32 %v1538, %v1539
  %v1541 = vrot.slane %v1540, 2
  %v1542 = vadd.f32 %v1540, %v1541
  %v1543 = vrot.slane %v1542, 1
  %v1544 = vadd.f32 %v1542, %v1543
  %s1545 = vtos %v1544
  %s1546 = smul.f32 %s1534, 0.03125
  %s1547 = smul.f32 %s1545, 0.03125
  %s1548 = smul.f32 %s1546, %s1546
  %s1549 = ssub.f32 %s1547, %s1548
  %s1550 = smax.f32 %s1549, 0.0
  %v1551 = vstv %s1546
  %v1552 = vsel %vm173, %v1551, %v1521
  %v1553 = vstv %s1550
  %v1554 = vsel %vm173, %v1553, %v1523
  %v1555 = vsel %vm223, %v1458, 0.0
  %v1556 = vsel %vm1001, %v1555, 0.0
  %1557 = vadd.xlane.f32.xlu0 %v1556
  %v1558 = vpop.xlane.xlu0 %1557
  %v1559 = vrot.slane %v1558, 4
  %v1560 = vadd.f32 %v1558, %v1559
  %v1561 = vrot.slane %v1560, 2
  %v1562 = vadd.f32 %v1560, %v1561
  %v1563 = vrot.slane %v1562, 1
  %v1564 = vadd.f32 %v1562, %v1563
  %s1565 = vtos %v1564
  %v1566 = vsel %vm223, %v1472, 0.0
  %v1567 = vsel %vm1001, %v1566, 0.0
  %1568 = vadd.xlane.f32.xlu0 %v1567
  %v1569 = vpop.xlane.xlu0 %1568
  %v1570 = vrot.slane %v1569, 4
  %v1571 = vadd.f32 %v1569, %v1570
  %v1572 = vrot.slane %v1571, 2
  %v1573 = vadd.f32 %v1571, %v1572
  %v1574 = vrot.slane %v1573, 1
  %v1575 = vadd.f32 %v1573, %v1574
  %s1576 = vtos %v1575
  %s1577 = smul.f32 %s1565, 0.03125
  %s1578 = smul.f32 %s1576, 0.03125
  %s1579 = smul.f32 %s1577, %s1577
  %s1580 = ssub.f32 %s1578, %s1579
  %s1581 = smax.f32 %s1580, 0.0
  %v1582 = vstv %s1577
  %v1583 = vsel %vm223, %v1582, %v1552
  %v1584 = vstv %s1581
  %v1585 = vsel %vm223, %v1584, %v1554
  %v1586 = vadd.f32 %v1585, 1e-05
  %v1587 = vrsqrt.pop %v1586
  %v1589 = vlaneseq
  %v1590 = vshrl.u32 %v1589, 7
  %v1591 = vsub.s32 0, %v1590
  %v1592 = vrot.slane %v1459, %v1591
  %v1594 = vmul.f32 %v1592, %v1587
  %v1595 = vmul.f32 %v1583, %v1594
  %v1597 = vlaneseq
  %v1598 = vshrl.u32 %v1597, 7
  %v1599 = vsub.s32 0, %v1598
  %v1600 = vrot.slane %v1460, %v1599
  %v1602 = vsub.f32 %v1600, %v1595
  %v1603 = vmul.f32 %v1458, %v1594
  %v1604 = vadd.f32 %v1603, %v1602
  %v1605 = vmax.f32 %v1604, 0.0
  %v1606 = vld [vmem:[%s9] sm:$0xff]
  %v1607 = vld [vmem:[%s9 + $0x8] sm:$0xff]
  %vm1608 = vcmask 64512
  %v1610 = vsel %vm1608, %v1606, 0
  %v1613 = vsel %vm1608, %v1607, 0
  %1615 = vmatprep.subr.mxu0 0.0
  %1616 = vmatpush1.msra.mxu0 0.0
  %1617 = vmatprep.subr.mxu0 0.0
  %1618 = vmatpush1.msra.mxu0 0.0
  %1619 = vmatprep.subr.mxu0 0.0
  %1620 = vmatpush1.msra.mxu0 0.0
  %1621 = vmatprep.subr.mxu0 0.0
  %1622 = vmatpush1.msra.mxu0 0.0
  %1623 = vmatprep.subr.mxu0 0.0
  %1624 = vmatpush1.msra.mxu0 0.0
  %1625 = vmatprep.subr.mxu0 0.0
  %1626 = vmatpush1.msra.mxu0 0.0
  %1627 = vmatprep.subr.mxu0 0.0
  %1628 = vmatpush1.msra.mxu0 0.0
  %1629 = vmatprep.subr.mxu0 0.0
  %1630 = vmatpush1.msra.mxu0 0.0
  %1631 = vmatprep.subr.mxu0 0.0
  %1632 = vmatpush1.msra.mxu0 0.0
  %1633 = vmatprep.subr.mxu0 0.0
  %1634 = vmatpush1.msra.mxu0 0.0
  %1635 = vmatprep.subr.mxu0 0.0
  %1636 = vmatpush1.msra.mxu0 0.0
  %1637 = vmatprep.subr.mxu0 0.0
  %1638 = vmatpush1.msra.mxu0 0.0
  %1639 = vmatprep.subr.mxu0 0.0
  %1640 = vmatpush1.msra.mxu0 0.0
  %1641 = vmatprep.subr.mxu0 0.0
  %1642 = vmatpush1.msra.mxu0 0.0
  %1643 = vmatprep.subr.mxu0 0.0
  %1644 = vmatpush1.msra.mxu0 0.0
  %1645 = vmatprep.subr.mxu0 0.0
  %1646 = vmatpush1.msra.mxu0 %v1605
  %1647 = vmatprep.subr.mxu0 0.0
  %1648 = vmatpush2.msra.mxu0 0.0
  %1649 = vmatprep.subr.mxu0 0.0
  %1650 = vmatpush2.msra.mxu0 0.0
  %1651 = vmatprep.subr.mxu0 0.0
  %1652 = vmatpush2.msra.mxu0 0.0
  %1653 = vmatprep.subr.mxu0 0.0
  %1654 = vmatpush2.msra.mxu0 0.0
  %1655 = vmatprep.subr.mxu0 0.0
  %1656 = vmatpush2.msra.mxu0 0.0
  %1657 = vmatprep.subr.mxu0 0.0
  %1658 = vmatpush2.msra.mxu0 0.0
  %1659 = vmatprep.subr.mxu0 0.0
  %1660 = vmatpush2.msra.mxu0 0.0
  %1661 = vmatprep.subr.mxu0 0.0
  %1662 = vmatpush2.msra.mxu0 0.0
  %1663 = vmatprep.subr.mxu0 0.0
  %1664 = vmatpush2.msra.mxu0 0.0
  %1665 = vmatprep.subr.mxu0 0.0
  %1666 = vmatpush2.msra.mxu0 0.0
  %1667 = vmatprep.subr.mxu0 0.0
  %1668 = vmatpush2.msra.mxu0 0.0
  %1669 = vmatprep.subr.mxu0 0.0
  %1670 = vmatpush2.msra.mxu0 0.0
  %1671 = vmatprep.subr.mxu0 0.0
  %1672 = vmatpush2.msra.mxu0 0.0
  %1673 = vmatprep.subr.mxu0 0.0
  %1674 = vmatpush2.msra.mxu0 0.0
  %1675 = vmatprep.subr.mxu0 0.0
  %1676 = vmatpush2.msra.mxu0 0.0
  %1677 = vmatprep.subr.mxu0 0.0
  %1678 = vmatpush2.msra.mxu0 0.0
  %1679 = vmatprep.mubr.f32.mxu0 0.0
  %1680 = vmatmul.mubr.f32.gmra.mxu0 %v1610
  %v1681 = vpop.f32.mrf.mxu0
  %v1682 = vadd.f32 0.0, %v1681
  %v1683 = vpop.f32.mrf.mxu0
  %1684 = vmatprep.mubr.f32.mxu0 0.0
  %1685 = vmatmul.mubr.f32.gmra.mxu0 %v1613
  %v1686 = vpop.f32.mrf.mxu0
  %v1687 = vadd.f32 0.0, %v1686
  %v1688 = vpop.f32.mrf.mxu0
  %1689 = vdwg.mxu0
  %v1690 = vld [vmem:[%s10] sm:$0xff]
  %v1691 = vld [vmem:[%s10 + $0x8] sm:$0xff]
  %s1692 = scalar_lea.vmem %s9, 16
  %v1693 = vld [vmem:[%s1692] sm:$0xff]
  %v1694 = vld [vmem:[%s1692 + $0x8] sm:$0xff]
  %v1696 = vsel %vm1608, %v1693, 0
  %v1699 = vsel %vm1608, %v1694, 0
  %1701 = vmatprep.subr.mxu0 0.0
  %1702 = vmatpush1.msra.mxu0 0.0
  %1703 = vmatprep.subr.mxu0 0.0
  %1704 = vmatpush1.msra.mxu0 0.0
  %1705 = vmatprep.subr.mxu0 0.0
  %1706 = vmatpush1.msra.mxu0 0.0
  %1707 = vmatprep.subr.mxu0 0.0
  %1708 = vmatpush1.msra.mxu0 0.0
  %1709 = vmatprep.subr.mxu0 0.0
  %1710 = vmatpush1.msra.mxu0 0.0
  %1711 = vmatprep.subr.mxu0 0.0
  %1712 = vmatpush1.msra.mxu0 0.0
  %1713 = vmatprep.subr.mxu0 0.0
  %1714 = vmatpush1.msra.mxu0 0.0
  %1715 = vmatprep.subr.mxu0 0.0
  %1716 = vmatpush1.msra.mxu0 0.0
  %1717 = vmatprep.subr.mxu0 0.0
  %1718 = vmatpush1.msra.mxu0 0.0
  %1719 = vmatprep.subr.mxu0 0.0
  %1720 = vmatpush1.msra.mxu0 0.0
  %1721 = vmatprep.subr.mxu0 0.0
  %1722 = vmatpush1.msra.mxu0 0.0
  %1723 = vmatprep.subr.mxu0 0.0
  %1724 = vmatpush1.msra.mxu0 0.0
  %1725 = vmatprep.subr.mxu0 0.0
  %1726 = vmatpush1.msra.mxu0 0.0
  %1727 = vmatprep.subr.mxu0 0.0
  %1728 = vmatpush1.msra.mxu0 0.0
  %1729 = vmatprep.subr.mxu0 0.0
  %1730 = vmatpush1.msra.mxu0 0.0
  %1731 = vmatprep.subr.mxu0 0.0
  %1732 = vmatpush1.msra.mxu0 %v1605
  %1733 = vmatprep.subr.mxu0 0.0
  %1734 = vmatpush2.msra.mxu0 0.0
  %1735 = vmatprep.subr.mxu0 0.0
  %1736 = vmatpush2.msra.mxu0 0.0
  %1737 = vmatprep.subr.mxu0 0.0
  %1738 = vmatpush2.msra.mxu0 0.0
  %1739 = vmatprep.subr.mxu0 0.0
  %1740 = vmatpush2.msra.mxu0 0.0
  %1741 = vmatprep.subr.mxu0 0.0
  %1742 = vmatpush2.msra.mxu0 0.0
  %1743 = vmatprep.subr.mxu0 0.0
  %1744 = vmatpush2.msra.mxu0 0.0
  %1745 = vmatprep.subr.mxu0 0.0
  %1746 = vmatpush2.msra.mxu0 0.0
  %1747 = vmatprep.subr.mxu0 0.0
  %1748 = vmatpush2.msra.mxu0 0.0
  %1749 = vmatprep.subr.mxu0 0.0
  %1750 = vmatpush2.msra.mxu0 0.0
  %1751 = vmatprep.subr.mxu0 0.0
  %1752 = vmatpush2.msra.mxu0 0.0
  %1753 = vmatprep.subr.mxu0 0.0
  %1754 = vmatpush2.msra.mxu0 0.0
  %1755 = vmatprep.subr.mxu0 0.0
  %1756 = vmatpush2.msra.mxu0 0.0
  %1757 = vmatprep.subr.mxu0 0.0
  %1758 = vmatpush2.msra.mxu0 0.0
  %1759 = vmatprep.subr.mxu0 0.0
  %1760 = vmatpush2.msra.mxu0 0.0
  %1761 = vmatprep.subr.mxu0 0.0
  %1762 = vmatpush2.msra.mxu0 0.0
  %1763 = vmatprep.subr.mxu0 0.0
  %1764 = vmatpush2.msra.mxu0 0.0
  %1765 = vmatprep.mubr.f32.mxu0 0.0
  %1766 = vmatmul.mubr.f32.gmra.mxu0 %v1696
  %v1767 = vpop.f32.mrf.mxu0
  %v1768 = vadd.f32 0.0, %v1767
  %v1769 = vpop.f32.mrf.mxu0
  %1770 = vmatprep.mubr.f32.mxu0 0.0
  %1771 = vmatmul.mubr.f32.gmra.mxu0 %v1699
  %v1772 = vpop.f32.mrf.mxu0
  %v1773 = vadd.f32 0.0, %v1772
  %v1774 = vpop.f32.mrf.mxu0
  %1775 = vdwg.mxu0
  %s1776 = scalar_lea.vmem %s10, 16
  %v1777 = vld [vmem:[%s1776] sm:$0xff]
  %v1778 = vld [vmem:[%s1776 + $0x8] sm:$0xff]
  %v1780 = vsel %vm1001, %v1768, 0
  %v1783 = vsel %vm1001, %v1773, 0
  %1785 = vmatprep.subr.mxu0 0.0
  %1786 = vmatpush1.msra.mxu0 0.0
  %1787 = vmatprep.subr.mxu0 0.0
  %1788 = vmatpush1.msra.mxu0 0.0
  %1789 = vmatprep.subr.mxu0 0.0
  %1790 = vmatpush1.msra.mxu0 0.0
  %1791 = vmatprep.subr.mxu0 0.0
  %1792 = vmatpush1.msra.mxu0 0.0
  %1793 = vmatprep.subr.mxu0 0.0
  %1794 = vmatpush1.msra.mxu0 0.0
  %1795 = vmatprep.subr.mxu0 0.0
  %1796 = vmatpush1.msra.mxu0 0.0
  %1797 = vmatprep.subr.mxu0 0.0
  %1798 = vmatpush1.msra.mxu0 0.0
  %1799 = vmatprep.subr.mxu0 0.0
  %1800 = vmatpush1.msra.mxu0 0.0
  %1801 = vmatprep.subr.mxu0 0.0
  %1802 = vmatpush1.msra.mxu0 0.0
  %1803 = vmatprep.subr.mxu0 0.0
  %1804 = vmatpush1.msra.mxu0 0.0
  %1805 = vmatprep.subr.mxu0 0.0
  %1806 = vmatpush1.msra.mxu0 0.0
  %1807 = vmatprep.subr.mxu0 0.0
  %1808 = vmatpush1.msra.mxu0 0.0
  %1809 = vmatprep.subr.mxu0 0.0
  %1810 = vmatpush1.msra.mxu0 0.0
  %1811 = vmatprep.subr.mxu0 0.0
  %1812 = vmatpush1.msra.mxu0 0.0
  %1813 = vmatprep.subr.mxu0 0.0
  %1814 = vmatpush1.msra.mxu0 %v1778
  %1815 = vmatprep.subr.mxu0 0.0
  %1816 = vmatpush1.msra.mxu0 %v1777
  %1817 = vmatprep.subr.mxu0 0.0
  %1818 = vmatpush2.msra.mxu0 0.0
  %1819 = vmatprep.subr.mxu0 0.0
  %1820 = vmatpush2.msra.mxu0 0.0
  %1821 = vmatprep.subr.mxu0 0.0
  %1822 = vmatpush2.msra.mxu0 0.0
  %1823 = vmatprep.subr.mxu0 0.0
  %1824 = vmatpush2.msra.mxu0 0.0
  %1825 = vmatprep.subr.mxu0 0.0
  %1826 = vmatpush2.msra.mxu0 0.0
  %1827 = vmatprep.subr.mxu0 0.0
  %1828 = vmatpush2.msra.mxu0 0.0
  %1829 = vmatprep.subr.mxu0 0.0
  %1830 = vmatpush2.msra.mxu0 0.0
  %1831 = vmatprep.subr.mxu0 0.0
  %1832 = vmatpush2.msra.mxu0 0.0
  %1833 = vmatprep.subr.mxu0 0.0
  %1834 = vmatpush2.msra.mxu0 0.0
  %1835 = vmatprep.subr.mxu0 0.0
  %1836 = vmatpush2.msra.mxu0 0.0
  %1837 = vmatprep.subr.mxu0 0.0
  %1838 = vmatpush2.msra.mxu0 0.0
  %1839 = vmatprep.subr.mxu0 0.0
  %1840 = vmatpush2.msra.mxu0 0.0
  %1841 = vmatprep.subr.mxu0 0.0
  %1842 = vmatpush2.msra.mxu0 0.0
  %1843 = vmatprep.subr.mxu0 0.0
  %1844 = vmatpush2.msra.mxu0 0.0
  %1845 = vmatprep.subr.mxu0 0.0
  %1846 = vmatpush2.msra.mxu0 0.0
  %1847 = vmatprep.subr.mxu0 0.0
  %1848 = vmatpush2.msra.mxu0 0.0
  %1849 = vmatprep.mubr.f32.mxu0 0.0
  %1850 = vmatmul.mubr.f32.gmra.mxu0 %v1780
  %v1851 = vpop.f32.mrf.mxu0
  %v1852 = vadd.f32 0.0, %v1851
  %v1853 = vpop.f32.mrf.mxu0
  %1854 = vmatprep.mubr.f32.mxu0 0.0
  %1855 = vmatmul.mubr.f32.gmra.mxu0 %v1783
  %v1856 = vpop.f32.mrf.mxu0
  %v1857 = vadd.f32 0.0, %v1856
  %v1858 = vpop.f32.mrf.mxu0
  %1859 = vdwg.mxu0
  %v1861 = vsel %vm1001, %v1682, 0
  %v1864 = vsel %vm1001, %v1687, 0
  %1866 = vmatprep.subr.mxu0 0.0
  %1867 = vmatpush1.msra.mxu0 0.0
  %1868 = vmatprep.subr.mxu0 0.0
  %1869 = vmatpush1.msra.mxu0 0.0
  %1870 = vmatprep.subr.mxu0 0.0
  %1871 = vmatpush1.msra.mxu0 0.0
  %1872 = vmatprep.subr.mxu0 0.0
  %1873 = vmatpush1.msra.mxu0 0.0
  %1874 = vmatprep.subr.mxu0 0.0
  %1875 = vmatpush1.msra.mxu0 0.0
  %1876 = vmatprep.subr.mxu0 0.0
  %1877 = vmatpush1.msra.mxu0 0.0
  %1878 = vmatprep.subr.mxu0 0.0
  %1879 = vmatpush1.msra.mxu0 0.0
  %1880 = vmatprep.subr.mxu0 0.0
  %1881 = vmatpush1.msra.mxu0 0.0
  %1882 = vmatprep.subr.mxu0 0.0
  %1883 = vmatpush1.msra.mxu0 0.0
  %1884 = vmatprep.subr.mxu0 0.0
  %1885 = vmatpush1.msra.mxu0 0.0
  %1886 = vmatprep.subr.mxu0 0.0
  %1887 = vmatpush1.msra.mxu0 0.0
  %1888 = vmatprep.subr.mxu0 0.0
  %1889 = vmatpush1.msra.mxu0 0.0
  %1890 = vmatprep.subr.mxu0 0.0
  %1891 = vmatpush1.msra.mxu0 0.0
  %1892 = vmatprep.subr.mxu0 0.0
  %1893 = vmatpush1.msra.mxu0 0.0
  %1894 = vmatprep.subr.mxu0 0.0
  %1895 = vmatpush1.msra.mxu0 %v1691
  %1896 = vmatprep.subr.mxu0 0.0
  %1897 = vmatpush1.msra.mxu0 %v1690
  %1898 = vmatprep.subr.mxu0 0.0
  %1899 = vmatpush2.msra.mxu0 0.0
  %1900 = vmatprep.subr.mxu0 0.0
  %1901 = vmatpush2.msra.mxu0 0.0
  %1902 = vmatprep.subr.mxu0 0.0
  %1903 = vmatpush2.msra.mxu0 0.0
  %1904 = vmatprep.subr.mxu0 0.0
  %1905 = vmatpush2.msra.mxu0 0.0
  %1906 = vmatprep.subr.mxu0 0.0
  %1907 = vmatpush2.msra.mxu0 0.0
  %1908 = vmatprep.subr.mxu0 0.0
  %1909 = vmatpush2.msra.mxu0 0.0
  %1910 = vmatprep.subr.mxu0 0.0
  %1911 = vmatpush2.msra.mxu0 0.0
  %1912 = vmatprep.subr.mxu0 0.0
  %1913 = vmatpush2.msra.mxu0 0.0
  %1914 = vmatprep.subr.mxu0 0.0
  %1915 = vmatpush2.msra.mxu0 0.0
  %1916 = vmatprep.subr.mxu0 0.0
  %1917 = vmatpush2.msra.mxu0 0.0
  %1918 = vmatprep.subr.mxu0 0.0
  %1919 = vmatpush2.msra.mxu0 0.0
  %1920 = vmatprep.subr.mxu0 0.0
  %1921 = vmatpush2.msra.mxu0 0.0
  %1922 = vmatprep.subr.mxu0 0.0
  %1923 = vmatpush2.msra.mxu0 0.0
  %1924 = vmatprep.subr.mxu0 0.0
  %1925 = vmatpush2.msra.mxu0 0.0
  %1926 = vmatprep.subr.mxu0 0.0
  %1927 = vmatpush2.msra.mxu0 0.0
  %1928 = vmatprep.subr.mxu0 0.0
  %1929 = vmatpush2.msra.mxu0 0.0
  %1930 = vmatprep.mubr.f32.mxu0 0.0
  %1931 = vmatmul.mubr.f32.gmra.mxu0 %v1861
  %v1932 = vpop.f32.mrf.mxu0
  %v1933 = vadd.f32 %v1852, %v1932
  %v1934 = vpop.f32.mrf.mxu0
  %1935 = vmatprep.mubr.f32.mxu0 0.0
  %1936 = vmatmul.mubr.f32.gmra.mxu0 %v1864
  %v1937 = vpop.f32.mrf.mxu0
  %v1938 = vadd.f32 %v1857, %v1937
  %v1939 = vpop.f32.mrf.mxu0
  %1940 = vdwg.mxu0
  %s1941 = scalar_lea.vmem %s9, 32
  %v1942 = vld [vmem:[%s1941] sm:$0xff]
  %v1943 = vld [vmem:[%s1941 + $0x8] sm:$0xff]
  %v1945 = vsel %vm1608, %v1942, 0
  %v1948 = vsel %vm1608, %v1943, 0
  %1950 = vmatprep.subr.mxu0 0.0
  %1951 = vmatpush1.msra.mxu0 0.0
  %1952 = vmatprep.subr.mxu0 0.0
  %1953 = vmatpush1.msra.mxu0 0.0
  %1954 = vmatprep.subr.mxu0 0.0
  %1955 = vmatpush1.msra.mxu0 0.0
  %1956 = vmatprep.subr.mxu0 0.0
  %1957 = vmatpush1.msra.mxu0 0.0
  %1958 = vmatprep.subr.mxu0 0.0
  %1959 = vmatpush1.msra.mxu0 0.0
  %1960 = vmatprep.subr.mxu0 0.0
  %1961 = vmatpush1.msra.mxu0 0.0
  %1962 = vmatprep.subr.mxu0 0.0
  %1963 = vmatpush1.msra.mxu0 0.0
  %1964 = vmatprep.subr.mxu0 0.0
  %1965 = vmatpush1.msra.mxu0 0.0
  %1966 = vmatprep.subr.mxu0 0.0
  %1967 = vmatpush1.msra.mxu0 0.0
  %1968 = vmatprep.subr.mxu0 0.0
  %1969 = vmatpush1.msra.mxu0 0.0
  %1970 = vmatprep.subr.mxu0 0.0
  %1971 = vmatpush1.msra.mxu0 0.0
  %1972 = vmatprep.subr.mxu0 0.0
  %1973 = vmatpush1.msra.mxu0 0.0
  %1974 = vmatprep.subr.mxu0 0.0
  %1975 = vmatpush1.msra.mxu0 0.0
  %1976 = vmatprep.subr.mxu0 0.0
  %1977 = vmatpush1.msra.mxu0 0.0
  %1978 = vmatprep.subr.mxu0 0.0
  %1979 = vmatpush1.msra.mxu0 0.0
  %1980 = vmatprep.subr.mxu0 0.0
  %1981 = vmatpush1.msra.mxu0 %v1605
  %1982 = vmatprep.subr.mxu0 0.0
  %1983 = vmatpush2.msra.mxu0 0.0
  %1984 = vmatprep.subr.mxu0 0.0
  %1985 = vmatpush2.msra.mxu0 0.0
  %1986 = vmatprep.subr.mxu0 0.0
  %1987 = vmatpush2.msra.mxu0 0.0
  %1988 = vmatprep.subr.mxu0 0.0
  %1989 = vmatpush2.msra.mxu0 0.0
  %1990 = vmatprep.subr.mxu0 0.0
  %1991 = vmatpush2.msra.mxu0 0.0
  %1992 = vmatprep.subr.mxu0 0.0
  %1993 = vmatpush2.msra.mxu0 0.0
  %1994 = vmatprep.subr.mxu0 0.0
  %1995 = vmatpush2.msra.mxu0 0.0
  %1996 = vmatprep.subr.mxu0 0.0
  %1997 = vmatpush2.msra.mxu0 0.0
  %1998 = vmatprep.subr.mxu0 0.0
  %1999 = vmatpush2.msra.mxu0 0.0
  %2000 = vmatprep.subr.mxu0 0.0
  %2001 = vmatpush2.msra.mxu0 0.0
  %2002 = vmatprep.subr.mxu0 0.0
  %2003 = vmatpush2.msra.mxu0 0.0
  %2004 = vmatprep.subr.mxu0 0.0
  %2005 = vmatpush2.msra.mxu0 0.0
  %2006 = vmatprep.subr.mxu0 0.0
  %2007 = vmatpush2.msra.mxu0 0.0
  %2008 = vmatprep.subr.mxu0 0.0
  %2009 = vmatpush2.msra.mxu0 0.0
  %2010 = vmatprep.subr.mxu0 0.0
  %2011 = vmatpush2.msra.mxu0 0.0
  %2012 = vmatprep.subr.mxu0 0.0
  %2013 = vmatpush2.msra.mxu0 0.0
  %2014 = vmatprep.mubr.f32.mxu0 0.0
  %2015 = vmatmul.mubr.f32.gmra.mxu0 %v1945
  %v2016 = vpop.f32.mrf.mxu0
  %v2017 = vadd.f32 0.0, %v2016
  %v2018 = vpop.f32.mrf.mxu0
  %2019 = vmatprep.mubr.f32.mxu0 0.0
  %2020 = vmatmul.mubr.f32.gmra.mxu0 %v1948
  %v2021 = vpop.f32.mrf.mxu0
  %v2022 = vadd.f32 0.0, %v2021
  %v2023 = vpop.f32.mrf.mxu0
  %2024 = vdwg.mxu0
  %s2025 = scalar_lea.vmem %s10, 32
  %v2026 = vld [vmem:[%s2025] sm:$0xff]
  %v2027 = vld [vmem:[%s2025 + $0x8] sm:$0xff]
  %v2029 = vsel %vm1001, %v2017, 0
  %v2032 = vsel %vm1001, %v2022, 0
  %2034 = vmatprep.subr.mxu0 0.0
  %2035 = vmatpush1.msra.mxu0 0.0
  %2036 = vmatprep.subr.mxu0 0.0
  %2037 = vmatpush1.msra.mxu0 0.0
  %2038 = vmatprep.subr.mxu0 0.0
  %2039 = vmatpush1.msra.mxu0 0.0
  %2040 = vmatprep.subr.mxu0 0.0
  %2041 = vmatpush1.msra.mxu0 0.0
  %2042 = vmatprep.subr.mxu0 0.0
  %2043 = vmatpush1.msra.mxu0 0.0
  %2044 = vmatprep.subr.mxu0 0.0
  %2045 = vmatpush1.msra.mxu0 0.0
  %2046 = vmatprep.subr.mxu0 0.0
  %2047 = vmatpush1.msra.mxu0 0.0
  %2048 = vmatprep.subr.mxu0 0.0
  %2049 = vmatpush1.msra.mxu0 0.0
  %2050 = vmatprep.subr.mxu0 0.0
  %2051 = vmatpush1.msra.mxu0 0.0
  %2052 = vmatprep.subr.mxu0 0.0
  %2053 = vmatpush1.msra.mxu0 0.0
  %2054 = vmatprep.subr.mxu0 0.0
  %2055 = vmatpush1.msra.mxu0 0.0
  %2056 = vmatprep.subr.mxu0 0.0
  %2057 = vmatpush1.msra.mxu0 0.0
  %2058 = vmatprep.subr.mxu0 0.0
  %2059 = vmatpush1.msra.mxu0 0.0
  %2060 = vmatprep.subr.mxu0 0.0
  %2061 = vmatpush1.msra.mxu0 0.0
  %2062 = vmatprep.subr.mxu0 0.0
  %2063 = vmatpush1.msra.mxu0 %v2027
  %2064 = vmatprep.subr.mxu0 0.0
  %2065 = vmatpush1.msra.mxu0 %v2026
  %2066 = vmatprep.subr.mxu0 0.0
  %2067 = vmatpush2.msra.mxu0 0.0
  %2068 = vmatprep.subr.mxu0 0.0
  %2069 = vmatpush2.msra.mxu0 0.0
  %2070 = vmatprep.subr.mxu0 0.0
  %2071 = vmatpush2.msra.mxu0 0.0
  %2072 = vmatprep.subr.mxu0 0.0
  %2073 = vmatpush2.msra.mxu0 0.0
  %2074 = vmatprep.subr.mxu0 0.0
  %2075 = vmatpush2.msra.mxu0 0.0
  %2076 = vmatprep.subr.mxu0 0.0
  %2077 = vmatpush2.msra.mxu0 0.0
  %2078 = vmatprep.subr.mxu0 0.0
  %2079 = vmatpush2.msra.mxu0 0.0
  %2080 = vmatprep.subr.mxu0 0.0
  %2081 = vmatpush2.msra.mxu0 0.0
  %2082 = vmatprep.subr.mxu0 0.0
  %2083 = vmatpush2.msra.mxu0 0.0
  %2084 = vmatprep.subr.mxu0 0.0
  %2085 = vmatpush2.msra.mxu0 0.0
  %2086 = vmatprep.subr.mxu0 0.0
  %2087 = vmatpush2.msra.mxu0 0.0
  %2088 = vmatprep.subr.mxu0 0.0
  %2089 = vmatpush2.msra.mxu0 0.0
  %2090 = vmatprep.subr.mxu0 0.0
  %2091 = vmatpush2.msra.mxu0 0.0
  %2092 = vmatprep.subr.mxu0 0.0
  %2093 = vmatpush2.msra.mxu0 0.0
  %2094 = vmatprep.subr.mxu0 0.0
  %2095 = vmatpush2.msra.mxu0 0.0
  %2096 = vmatprep.subr.mxu0 0.0
  %2097 = vmatpush2.msra.mxu0 0.0
  %2098 = vmatprep.mubr.f32.mxu0 0.0
  %2099 = vmatmul.mubr.f32.gmra.mxu0 %v2029
  %v2100 = vpop.f32.mrf.mxu0
  %v2101 = vadd.f32 0.0, %v2100
  %v2102 = vpop.f32.mrf.mxu0
  %2103 = vmatprep.mubr.f32.mxu0 0.0
  %2104 = vmatmul.mubr.f32.gmra.mxu0 %v2032
  %v2105 = vpop.f32.mrf.mxu0
  %v2106 = vadd.f32 0.0, %v2105
  %v2107 = vpop.f32.mrf.mxu0
  %2108 = vdwg.mxu0
  %v2109 = vadd.f32 %v1933, %v2101
  %v2110 = vadd.f32 %v1938, %v2106
  %v2111 = vadd.f32 %v2109, %v823
  %v2112 = vadd.f32 %v2110, %v824
  %v2113 = vld [vmem:[%s15] sm:$0x1]
  %v2114 = vld [vmem:[%s16] sm:$0x1]
  %v2115 = vsel %vm68, %v2111, 0.0
  %v2116 = vsel %vm68, %v2112, 0.0
  %v2117 = vsel %vm304, %v2115, 0.0
  %v2118 = vsel %vm304, %v2116, 0.0
  %v2119 = vadd.f32 %v2117, %v2118
  %2120 = vadd.xlane.f32.xlu0 %v2119
  %v2121 = vpop.xlane.xlu0 %2120
  %v2122 = vrot.slane %v2121, 4
  %v2123 = vadd.f32 %v2121, %v2122
  %v2124 = vrot.slane %v2123, 2
  %v2125 = vadd.f32 %v2123, %v2124
  %v2126 = vrot.slane %v2125, 1
  %v2127 = vadd.f32 %v2125, %v2126
  %s2128 = vtos %v2127
  %v2129 = vmul.f32 %v2111, %v2111
  %v2130 = vmul.f32 %v2112, %v2112
  %v2131 = vsel %vm68, %v2129, 0.0
  %v2132 = vsel %vm68, %v2130, 0.0
  %v2133 = vsel %vm304, %v2131, 0.0
  %v2134 = vsel %vm304, %v2132, 0.0
  %v2135 = vadd.f32 %v2133, %v2134
  %2136 = vadd.xlane.f32.xlu0 %v2135
  %v2137 = vpop.xlane.xlu0 %2136
  %v2138 = vrot.slane %v2137, 4
  %v2139 = vadd.f32 %v2137, %v2138
  %v2140 = vrot.slane %v2139, 2
  %v2141 = vadd.f32 %v2139, %v2140
  %v2142 = vrot.slane %v2141, 1
  %v2143 = vadd.f32 %v2141, %v2142
  %s2144 = vtos %v2143
  %s2145 = smul.f32 %s2128, 0.0078125
  %s2146 = smul.f32 %s2144, 0.0078125
  %s2147 = smul.f32 %s2145, %s2145
  %s2148 = ssub.f32 %s2146, %s2147
  %s2149 = smax.f32 %s2148, 0.0
  %v2150 = vstv %s2145
  %v2151 = vsel %vm68, %v2150, 0.0
  %v2152 = vstv %s2149
  %v2153 = vsel %vm68, %v2152, 0.0
  %v2154 = vsel %vm123, %v2111, 0.0
  %v2155 = vsel %vm123, %v2112, 0.0
  %v2156 = vsel %vm304, %v2154, 0.0
  %v2157 = vsel %vm304, %v2155, 0.0
  %v2158 = vadd.f32 %v2156, %v2157
  %2159 = vadd.xlane.f32.xlu0 %v2158
  %v2160 = vpop.xlane.xlu0 %2159
  %v2161 = vrot.slane %v2160, 4
  %v2162 = vadd.f32 %v2160, %v2161
  %v2163 = vrot.slane %v2162, 2
  %v2164 = vadd.f32 %v2162, %v2163
  %v2165 = vrot.slane %v2164, 1
  %v2166 = vadd.f32 %v2164, %v2165
  %s2167 = vtos %v2166
  %v2168 = vsel %vm123, %v2129, 0.0
  %v2169 = vsel %vm123, %v2130, 0.0
  %v2170 = vsel %vm304, %v2168, 0.0
  %v2171 = vsel %vm304, %v2169, 0.0
  %v2172 = vadd.f32 %v2170, %v2171
  %2173 = vadd.xlane.f32.xlu0 %v2172
  %v2174 = vpop.xlane.xlu0 %2173
  %v2175 = vrot.slane %v2174, 4
  %v2176 = vadd.f32 %v2174, %v2175
  %v2177 = vrot.slane %v2176, 2
  %v2178 = vadd.f32 %v2176, %v2177
  %v2179 = vrot.slane %v2178, 1
  %v2180 = vadd.f32 %v2178, %v2179
  %s2181 = vtos %v2180
  %s2182 = smul.f32 %s2167, 0.0078125
  %s2183 = smul.f32 %s2181, 0.0078125
  %s2184 = smul.f32 %s2182, %s2182
  %s2185 = ssub.f32 %s2183, %s2184
  %s2186 = smax.f32 %s2185, 0.0
  %v2187 = vstv %s2182
  %v2188 = vsel %vm123, %v2187, %v2151
  %v2189 = vstv %s2186
  %v2190 = vsel %vm123, %v2189, %v2153
  %v2191 = vsel %vm173, %v2111, 0.0
  %v2192 = vsel %vm173, %v2112, 0.0
  %v2193 = vsel %vm304, %v2191, 0.0
  %v2194 = vsel %vm304, %v2192, 0.0
  %v2195 = vadd.f32 %v2193, %v2194
  %2196 = vadd.xlane.f32.xlu0 %v2195
  %v2197 = vpop.xlane.xlu0 %2196
  %v2198 = vrot.slane %v2197, 4
  %v2199 = vadd.f32 %v2197, %v2198
  %v2200 = vrot.slane %v2199, 2
  %v2201 = vadd.f32 %v2199, %v2200
  %v2202 = vrot.slane %v2201, 1
  %v2203 = vadd.f32 %v2201, %v2202
  %s2204 = vtos %v2203
  %v2205 = vsel %vm173, %v2129, 0.0
  %v2206 = vsel %vm173, %v2130, 0.0
  %v2207 = vsel %vm304, %v2205, 0.0
  %v2208 = vsel %vm304, %v2206, 0.0
  %v2209 = vadd.f32 %v2207, %v2208
  %2210 = vadd.xlane.f32.xlu0 %v2209
  %v2211 = vpop.xlane.xlu0 %2210
  %v2212 = vrot.slane %v2211, 4
  %v2213 = vadd.f32 %v2211, %v2212
  %v2214 = vrot.slane %v2213, 2
  %v2215 = vadd.f32 %v2213, %v2214
  %v2216 = vrot.slane %v2215, 1
  %v2217 = vadd.f32 %v2215, %v2216
  %s2218 = vtos %v2217
  %s2219 = smul.f32 %s2204, 0.0078125
  %s2220 = smul.f32 %s2218, 0.0078125
  %s2221 = smul.f32 %s2219, %s2219
  %s2222 = ssub.f32 %s2220, %s2221
  %s2223 = smax.f32 %s2222, 0.0
  %v2224 = vstv %s2219
  %v2225 = vsel %vm173, %v2224, %v2188
  %v2226 = vstv %s2223
  %v2227 = vsel %vm173, %v2226, %v2190
  %v2228 = vsel %vm223, %v2111, 0.0
  %v2229 = vsel %vm223, %v2112, 0.0
  %v2230 = vsel %vm304, %v2228, 0.0
  %v2231 = vsel %vm304, %v2229, 0.0
  %v2232 = vadd.f32 %v2230, %v2231
  %2233 = vadd.xlane.f32.xlu0 %v2232
  %v2234 = vpop.xlane.xlu0 %2233
  %v2235 = vrot.slane %v2234, 4
  %v2236 = vadd.f32 %v2234, %v2235
  %v2237 = vrot.slane %v2236, 2
  %v2238 = vadd.f32 %v2236, %v2237
  %v2239 = vrot.slane %v2238, 1
  %v2240 = vadd.f32 %v2238, %v2239
  %s2241 = vtos %v2240
  %v2242 = vsel %vm223, %v2129, 0.0
  %v2243 = vsel %vm223, %v2130, 0.0
  %v2244 = vsel %vm304, %v2242, 0.0
  %v2245 = vsel %vm304, %v2243, 0.0
  %v2246 = vadd.f32 %v2244, %v2245
  %2247 = vadd.xlane.f32.xlu0 %v2246
  %v2248 = vpop.xlane.xlu0 %2247
  %v2249 = vrot.slane %v2248, 4
  %v2250 = vadd.f32 %v2248, %v2249
  %v2251 = vrot.slane %v2250, 2
  %v2252 = vadd.f32 %v2250, %v2251
  %v2253 = vrot.slane %v2252, 1
  %v2254 = vadd.f32 %v2252, %v2253
  %s2255 = vtos %v2254
  %s2256 = smul.f32 %s2241, 0.0078125
  %s2257 = smul.f32 %s2255, 0.0078125
  %s2258 = smul.f32 %s2256, %s2256
  %s2259 = ssub.f32 %s2257, %s2258
  %s2260 = smax.f32 %s2259, 0.0
  %v2261 = vstv %s2256
  %v2262 = vsel %vm223, %v2261, %v2225
  %v2263 = vstv %s2260
  %v2264 = vsel %vm223, %v2263, %v2227
  %v2265 = vadd.f32 %v2264, 1e-05
  %v2266 = vrsqrt.pop %v2265
  %v2268 = vlaneseq
  %v2269 = vshrl.u32 %v2268, 7
  %v2270 = vsub.s32 0, %v2269
  %v2271 = vrot.slane %v2113, %v2270
  %v2273 = vmul.f32 %v2271, %v2266
  %v2274 = vmul.f32 %v2262, %v2273
  %v2276 = vlaneseq
  %v2277 = vshrl.u32 %v2276, 7
  %v2278 = vsub.s32 0, %v2277
  %v2279 = vrot.slane %v2114, %v2278
  %v2281 = vsub.f32 %v2279, %v2274
  %v2282 = vmul.f32 %v2111, %v2273
  %v2283 = vmul.f32 %v2112, %v2273
  %v2284 = vadd.f32 %v2282, %v2281
  %v2285 = vadd.f32 %v2283, %v2281
  %v2286 = vmax.f32 %v2284, 0.0
  %v2287 = vmax.f32 %v2285, 0.0
  %v2288 = vld [vmem:[%s13] sm:$0xff]
  %v2289 = vld [vmem:[%s13 + $0x8] sm:$0xff]
  %v2290 = vld [vmem:[%s13 + $0x10] sm:$0xff]
  %v2291 = vld [vmem:[%s13 + $0x18] sm:$0xff]
  %v2293 = vsel %vm1001, %v2288, 0
  %v2296 = vsel %vm1001, %v2289, 0
  %v2299 = vsel %vm1001, %v2290, 0
  %v2302 = vsel %vm1001, %v2291, 0
  %2304 = vmatprep.subr.mxu0 0.0
  %2305 = vmatpush1.msra.mxu0 0.0
  %2306 = vmatprep.subr.mxu0 0.0
  %2307 = vmatpush1.msra.mxu0 0.0
  %2308 = vmatprep.subr.mxu0 0.0
  %2309 = vmatpush1.msra.mxu0 0.0
  %2310 = vmatprep.subr.mxu0 0.0
  %2311 = vmatpush1.msra.mxu0 0.0
  %2312 = vmatprep.subr.mxu0 0.0
  %2313 = vmatpush1.msra.mxu0 0.0
  %2314 = vmatprep.subr.mxu0 0.0
  %2315 = vmatpush1.msra.mxu0 0.0
  %2316 = vmatprep.subr.mxu0 0.0
  %2317 = vmatpush1.msra.mxu0 0.0
  %2318 = vmatprep.subr.mxu0 0.0
  %2319 = vmatpush1.msra.mxu0 0.0
  %2320 = vmatprep.subr.mxu0 0.0
  %2321 = vmatpush1.msra.mxu0 0.0
  %2322 = vmatprep.subr.mxu0 0.0
  %2323 = vmatpush1.msra.mxu0 0.0
  %2324 = vmatprep.subr.mxu0 0.0
  %2325 = vmatpush1.msra.mxu0 0.0
  %2326 = vmatprep.subr.mxu0 0.0
  %2327 = vmatpush1.msra.mxu0 0.0
  %2328 = vmatprep.subr.mxu0 0.0
  %2329 = vmatpush1.msra.mxu0 0.0
  %2330 = vmatprep.subr.mxu0 0.0
  %2331 = vmatpush1.msra.mxu0 0.0
  %2332 = vmatprep.subr.mxu0 0.0
  %2333 = vmatpush1.msra.mxu0 %v2287
  %2334 = vmatprep.subr.mxu0 0.0
  %2335 = vmatpush1.msra.mxu0 %v2286
  %2336 = vmatprep.subr.mxu0 0.0
  %2337 = vmatpush2.msra.mxu0 0.0
  %2338 = vmatprep.subr.mxu0 0.0
  %2339 = vmatpush2.msra.mxu0 0.0
  %2340 = vmatprep.subr.mxu0 0.0
  %2341 = vmatpush2.msra.mxu0 0.0
  %2342 = vmatprep.subr.mxu0 0.0
  %2343 = vmatpush2.msra.mxu0 0.0
  %2344 = vmatprep.subr.mxu0 0.0
  %2345 = vmatpush2.msra.mxu0 0.0
  %2346 = vmatprep.subr.mxu0 0.0
  %2347 = vmatpush2.msra.mxu0 0.0
  %2348 = vmatprep.subr.mxu0 0.0
  %2349 = vmatpush2.msra.mxu0 0.0
  %2350 = vmatprep.subr.mxu0 0.0
  %2351 = vmatpush2.msra.mxu0 0.0
  %2352 = vmatprep.subr.mxu0 0.0
  %2353 = vmatpush2.msra.mxu0 0.0
  %2354 = vmatprep.subr.mxu0 0.0
  %2355 = vmatpush2.msra.mxu0 0.0
  %2356 = vmatprep.subr.mxu0 0.0
  %2357 = vmatpush2.msra.mxu0 0.0
  %2358 = vmatprep.subr.mxu0 0.0
  %2359 = vmatpush2.msra.mxu0 0.0
  %2360 = vmatprep.subr.mxu0 0.0
  %2361 = vmatpush2.msra.mxu0 0.0
  %2362 = vmatprep.subr.mxu0 0.0
  %2363 = vmatpush2.msra.mxu0 0.0
  %2364 = vmatprep.subr.mxu0 0.0
  %2365 = vmatpush2.msra.mxu0 0.0
  %2366 = vmatprep.subr.mxu0 0.0
  %2367 = vmatpush2.msra.mxu0 0.0
  %2368 = vmatprep.mubr.f32.mxu0 0.0
  %2369 = vmatmul.mubr.f32.gmra.mxu0 %v2293
  %v2370 = vpop.f32.mrf.mxu0
  %v2371 = vadd.f32 0.0, %v2370
  %v2372 = vpop.f32.mrf.mxu0
  %2373 = vmatprep.mubr.f32.mxu0 0.0
  %2374 = vmatmul.mubr.f32.gmra.mxu0 %v2296
  %v2375 = vpop.f32.mrf.mxu0
  %v2376 = vadd.f32 0.0, %v2375
  %v2377 = vpop.f32.mrf.mxu0
  %2378 = vmatprep.mubr.f32.mxu0 0.0
  %2379 = vmatmul.mubr.f32.gmra.mxu0 %v2299
  %v2380 = vpop.f32.mrf.mxu0
  %v2381 = vadd.f32 0.0, %v2380
  %v2382 = vpop.f32.mrf.mxu0
  %2383 = vmatprep.mubr.f32.mxu0 0.0
  %2384 = vmatmul.mubr.f32.gmra.mxu0 %v2302
  %v2385 = vpop.f32.mrf.mxu0
  %v2386 = vadd.f32 0.0, %v2385
  %v2387 = vpop.f32.mrf.mxu0
  %2388 = vdwg.mxu0
  %v2389 = vld [vmem:[%s14] sm:$0xff]
  %v2390 = vld [vmem:[%s14 + $0x8] sm:$0xff]
  %v2391 = vld [vmem:[%s14 + $0x10] sm:$0xff]
  %v2392 = vld [vmem:[%s14 + $0x18] sm:$0xff]
  %s2393 = scalar_lea.vmem %s13, 32
  %v2394 = vld [vmem:[%s2393] sm:$0xff]
  %v2395 = vld [vmem:[%s2393 + $0x8] sm:$0xff]
  %v2396 = vld [vmem:[%s2393 + $0x10] sm:$0xff]
  %v2397 = vld [vmem:[%s2393 + $0x18] sm:$0xff]
  %v2399 = vsel %vm1001, %v2394, 0
  %v2402 = vsel %vm1001, %v2395, 0
  %v2405 = vsel %vm1001, %v2396, 0
  %v2408 = vsel %vm1001, %v2397, 0
  %2410 = vmatprep.subr.mxu0 0.0
  %2411 = vmatpush1.msra.mxu0 0.0
  %2412 = vmatprep.subr.mxu0 0.0
  %2413 = vmatpush1.msra.mxu0 0.0
  %2414 = vmatprep.subr.mxu0 0.0
  %2415 = vmatpush1.msra.mxu0 0.0
  %2416 = vmatprep.subr.mxu0 0.0
  %2417 = vmatpush1.msra.mxu0 0.0
  %2418 = vmatprep.subr.mxu0 0.0
  %2419 = vmatpush1.msra.mxu0 0.0
  %2420 = vmatprep.subr.mxu0 0.0
  %2421 = vmatpush1.msra.mxu0 0.0
  %2422 = vmatprep.subr.mxu0 0.0
  %2423 = vmatpush1.msra.mxu0 0.0
  %2424 = vmatprep.subr.mxu0 0.0
  %2425 = vmatpush1.msra.mxu0 0.0
  %2426 = vmatprep.subr.mxu0 0.0
  %2427 = vmatpush1.msra.mxu0 0.0
  %2428 = vmatprep.subr.mxu0 0.0
  %2429 = vmatpush1.msra.mxu0 0.0
  %2430 = vmatprep.subr.mxu0 0.0
  %2431 = vmatpush1.msra.mxu0 0.0
  %2432 = vmatprep.subr.mxu0 0.0
  %2433 = vmatpush1.msra.mxu0 0.0
  %2434 = vmatprep.subr.mxu0 0.0
  %2435 = vmatpush1.msra.mxu0 0.0
  %2436 = vmatprep.subr.mxu0 0.0
  %2437 = vmatpush1.msra.mxu0 0.0
  %2438 = vmatprep.subr.mxu0 0.0
  %2439 = vmatpush1.msra.mxu0 %v2287
  %2440 = vmatprep.subr.mxu0 0.0
  %2441 = vmatpush1.msra.mxu0 %v2286
  %2442 = vmatprep.subr.mxu0 0.0
  %2443 = vmatpush2.msra.mxu0 0.0
  %2444 = vmatprep.subr.mxu0 0.0
  %2445 = vmatpush2.msra.mxu0 0.0
  %2446 = vmatprep.subr.mxu0 0.0
  %2447 = vmatpush2.msra.mxu0 0.0
  %2448 = vmatprep.subr.mxu0 0.0
  %2449 = vmatpush2.msra.mxu0 0.0
  %2450 = vmatprep.subr.mxu0 0.0
  %2451 = vmatpush2.msra.mxu0 0.0
  %2452 = vmatprep.subr.mxu0 0.0
  %2453 = vmatpush2.msra.mxu0 0.0
  %2454 = vmatprep.subr.mxu0 0.0
  %2455 = vmatpush2.msra.mxu0 0.0
  %2456 = vmatprep.subr.mxu0 0.0
  %2457 = vmatpush2.msra.mxu0 0.0
  %2458 = vmatprep.subr.mxu0 0.0
  %2459 = vmatpush2.msra.mxu0 0.0
  %2460 = vmatprep.subr.mxu0 0.0
  %2461 = vmatpush2.msra.mxu0 0.0
  %2462 = vmatprep.subr.mxu0 0.0
  %2463 = vmatpush2.msra.mxu0 0.0
  %2464 = vmatprep.subr.mxu0 0.0
  %2465 = vmatpush2.msra.mxu0 0.0
  %2466 = vmatprep.subr.mxu0 0.0
  %2467 = vmatpush2.msra.mxu0 0.0
  %2468 = vmatprep.subr.mxu0 0.0
  %2469 = vmatpush2.msra.mxu0 0.0
  %2470 = vmatprep.subr.mxu0 0.0
  %2471 = vmatpush2.msra.mxu0 0.0
  %2472 = vmatprep.subr.mxu0 0.0
  %2473 = vmatpush2.msra.mxu0 0.0
  %2474 = vmatprep.mubr.f32.mxu0 0.0
  %2475 = vmatmul.mubr.f32.gmra.mxu0 %v2399
  %v2476 = vpop.f32.mrf.mxu0
  %v2477 = vadd.f32 0.0, %v2476
  %v2478 = vpop.f32.mrf.mxu0
  %2479 = vmatprep.mubr.f32.mxu0 0.0
  %2480 = vmatmul.mubr.f32.gmra.mxu0 %v2402
  %v2481 = vpop.f32.mrf.mxu0
  %v2482 = vadd.f32 0.0, %v2481
  %v2483 = vpop.f32.mrf.mxu0
  %2484 = vmatprep.mubr.f32.mxu0 0.0
  %2485 = vmatmul.mubr.f32.gmra.mxu0 %v2405
  %v2486 = vpop.f32.mrf.mxu0
  %v2487 = vadd.f32 0.0, %v2486
  %v2488 = vpop.f32.mrf.mxu0
  %2489 = vmatprep.mubr.f32.mxu0 0.0
  %2490 = vmatmul.mubr.f32.gmra.mxu0 %v2408
  %v2491 = vpop.f32.mrf.mxu0
  %v2492 = vadd.f32 0.0, %v2491
  %v2493 = vpop.f32.mrf.mxu0
  %2494 = vdwg.mxu0
  %s2495 = scalar_lea.vmem %s14, 32
  %v2496 = vld [vmem:[%s2495] sm:$0xff]
  %v2497 = vld [vmem:[%s2495 + $0x8] sm:$0xff]
  %v2498 = vld [vmem:[%s2495 + $0x10] sm:$0xff]
  %v2499 = vld [vmem:[%s2495 + $0x18] sm:$0xff]
  %v2501 = vsel %vm304, %v2477, 0
  %v2504 = vsel %vm304, %v2482, 0
  %v2507 = vsel %vm304, %v2487, 0
  %v2510 = vsel %vm304, %v2492, 0
  %2512 = vmatprep.subr.mxu0 0.0
  %2513 = vmatpush1.msra.mxu0 0.0
  %2514 = vmatprep.subr.mxu0 0.0
  %2515 = vmatpush1.msra.mxu0 0.0
  %2516 = vmatprep.subr.mxu0 0.0
  %2517 = vmatpush1.msra.mxu0 0.0
  %2518 = vmatprep.subr.mxu0 0.0
  %2519 = vmatpush1.msra.mxu0 0.0
  %2520 = vmatprep.subr.mxu0 0.0
  %2521 = vmatpush1.msra.mxu0 0.0
  %2522 = vmatprep.subr.mxu0 0.0
  %2523 = vmatpush1.msra.mxu0 0.0
  %2524 = vmatprep.subr.mxu0 0.0
  %2525 = vmatpush1.msra.mxu0 0.0
  %2526 = vmatprep.subr.mxu0 0.0
  %2527 = vmatpush1.msra.mxu0 0.0
  %2528 = vmatprep.subr.mxu0 0.0
  %2529 = vmatpush1.msra.mxu0 0.0
  %2530 = vmatprep.subr.mxu0 0.0
  %2531 = vmatpush1.msra.mxu0 0.0
  %2532 = vmatprep.subr.mxu0 0.0
  %2533 = vmatpush1.msra.mxu0 0.0
  %2534 = vmatprep.subr.mxu0 0.0
  %2535 = vmatpush1.msra.mxu0 0.0
  %2536 = vmatprep.subr.mxu0 0.0
  %2537 = vmatpush1.msra.mxu0 %v2499
  %2538 = vmatprep.subr.mxu0 0.0
  %2539 = vmatpush1.msra.mxu0 %v2498
  %2540 = vmatprep.subr.mxu0 0.0
  %2541 = vmatpush1.msra.mxu0 %v2497
  %2542 = vmatprep.subr.mxu0 0.0
  %2543 = vmatpush1.msra.mxu0 %v2496
  %2544 = vmatprep.subr.mxu0 0.0
  %2545 = vmatpush2.msra.mxu0 0.0
  %2546 = vmatprep.subr.mxu0 0.0
  %2547 = vmatpush2.msra.mxu0 0.0
  %2548 = vmatprep.subr.mxu0 0.0
  %2549 = vmatpush2.msra.mxu0 0.0
  %2550 = vmatprep.subr.mxu0 0.0
  %2551 = vmatpush2.msra.mxu0 0.0
  %2552 = vmatprep.subr.mxu0 0.0
  %2553 = vmatpush2.msra.mxu0 0.0
  %2554 = vmatprep.subr.mxu0 0.0
  %2555 = vmatpush2.msra.mxu0 0.0
  %2556 = vmatprep.subr.mxu0 0.0
  %2557 = vmatpush2.msra.mxu0 0.0
  %2558 = vmatprep.subr.mxu0 0.0
  %2559 = vmatpush2.msra.mxu0 0.0
  %2560 = vmatprep.subr.mxu0 0.0
  %2561 = vmatpush2.msra.mxu0 0.0
  %2562 = vmatprep.subr.mxu0 0.0
  %2563 = vmatpush2.msra.mxu0 0.0
  %2564 = vmatprep.subr.mxu0 0.0
  %2565 = vmatpush2.msra.mxu0 0.0
  %2566 = vmatprep.subr.mxu0 0.0
  %2567 = vmatpush2.msra.mxu0 0.0
  %2568 = vmatprep.subr.mxu0 0.0
  %2569 = vmatpush2.msra.mxu0 0.0
  %2570 = vmatprep.subr.mxu0 0.0
  %2571 = vmatpush2.msra.mxu0 0.0
  %2572 = vmatprep.subr.mxu0 0.0
  %2573 = vmatpush2.msra.mxu0 0.0
  %2574 = vmatprep.subr.mxu0 0.0
  %2575 = vmatpush2.msra.mxu0 0.0
  %2576 = vmatprep.mubr.f32.mxu0 0.0
  %2577 = vmatmul.mubr.f32.gmra.mxu0 %v2501
  %v2578 = vpop.f32.mrf.mxu0
  %v2579 = vadd.f32 0.0, %v2578
  %v2580 = vpop.f32.mrf.mxu0
  %2581 = vmatprep.mubr.f32.mxu0 0.0
  %2582 = vmatmul.mubr.f32.gmra.mxu0 %v2504
  %v2583 = vpop.f32.mrf.mxu0
  %v2584 = vadd.f32 0.0, %v2583
  %v2585 = vpop.f32.mrf.mxu0
  %2586 = vmatprep.mubr.f32.mxu0 0.0
  %2587 = vmatmul.mubr.f32.gmra.mxu0 %v2507
  %v2588 = vpop.f32.mrf.mxu0
  %v2589 = vadd.f32 0.0, %v2588
  %v2590 = vpop.f32.mrf.mxu0
  %2591 = vmatprep.mubr.f32.mxu0 0.0
  %2592 = vmatmul.mubr.f32.gmra.mxu0 %v2510
  %v2593 = vpop.f32.mrf.mxu0
  %v2594 = vadd.f32 0.0, %v2593
  %v2595 = vpop.f32.mrf.mxu0
  %2596 = vdwg.mxu0
  %v2598 = vsel %vm304, %v2371, 0
  %v2601 = vsel %vm304, %v2376, 0
  %v2604 = vsel %vm304, %v2381, 0
  %v2607 = vsel %vm304, %v2386, 0
  %2609 = vmatprep.subr.mxu0 0.0
  %2610 = vmatpush1.msra.mxu0 0.0
  %2611 = vmatprep.subr.mxu0 0.0
  %2612 = vmatpush1.msra.mxu0 0.0
  %2613 = vmatprep.subr.mxu0 0.0
  %2614 = vmatpush1.msra.mxu0 0.0
  %2615 = vmatprep.subr.mxu0 0.0
  %2616 = vmatpush1.msra.mxu0 0.0
  %2617 = vmatprep.subr.mxu0 0.0
  %2618 = vmatpush1.msra.mxu0 0.0
  %2619 = vmatprep.subr.mxu0 0.0
  %2620 = vmatpush1.msra.mxu0 0.0
  %2621 = vmatprep.subr.mxu0 0.0
  %2622 = vmatpush1.msra.mxu0 0.0
  %2623 = vmatprep.subr.mxu0 0.0
  %2624 = vmatpush1.msra.mxu0 0.0
  %2625 = vmatprep.subr.mxu0 0.0
  %2626 = vmatpush1.msra.mxu0 0.0
  %2627 = vmatprep.subr.mxu0 0.0
  %2628 = vmatpush1.msra.mxu0 0.0
  %2629 = vmatprep.subr.mxu0 0.0
  %2630 = vmatpush1.msra.mxu0 0.0
  %2631 = vmatprep.subr.mxu0 0.0
  %2632 = vmatpush1.msra.mxu0 0.0
  %2633 = vmatprep.subr.mxu0 0.0
  %2634 = vmatpush1.msra.mxu0 %v2392
  %2635 = vmatprep.subr.mxu0 0.0
  %2636 = vmatpush1.msra.mxu0 %v2391
  %2637 = vmatprep.subr.mxu0 0.0
  %2638 = vmatpush1.msra.mxu0 %v2390
  %2639 = vmatprep.subr.mxu0 0.0
  %2640 = vmatpush1.msra.mxu0 %v2389
  %2641 = vmatprep.subr.mxu0 0.0
  %2642 = vmatpush2.msra.mxu0 0.0
  %2643 = vmatprep.subr.mxu0 0.0
  %2644 = vmatpush2.msra.mxu0 0.0
  %2645 = vmatprep.subr.mxu0 0.0
  %2646 = vmatpush2.msra.mxu0 0.0
  %2647 = vmatprep.subr.mxu0 0.0
  %2648 = vmatpush2.msra.mxu0 0.0
  %2649 = vmatprep.subr.mxu0 0.0
  %2650 = vmatpush2.msra.mxu0 0.0
  %2651 = vmatprep.subr.mxu0 0.0
  %2652 = vmatpush2.msra.mxu0 0.0
  %2653 = vmatprep.subr.mxu0 0.0
  %2654 = vmatpush2.msra.mxu0 0.0
  %2655 = vmatprep.subr.mxu0 0.0
  %2656 = vmatpush2.msra.mxu0 0.0
  %2657 = vmatprep.subr.mxu0 0.0
  %2658 = vmatpush2.msra.mxu0 0.0
  %2659 = vmatprep.subr.mxu0 0.0
  %2660 = vmatpush2.msra.mxu0 0.0
  %2661 = vmatprep.subr.mxu0 0.0
  %2662 = vmatpush2.msra.mxu0 0.0
  %2663 = vmatprep.subr.mxu0 0.0
  %2664 = vmatpush2.msra.mxu0 0.0
  %2665 = vmatprep.subr.mxu0 0.0
  %2666 = vmatpush2.msra.mxu0 0.0
  %2667 = vmatprep.subr.mxu0 0.0
  %2668 = vmatpush2.msra.mxu0 0.0
  %2669 = vmatprep.subr.mxu0 0.0
  %2670 = vmatpush2.msra.mxu0 0.0
  %2671 = vmatprep.subr.mxu0 0.0
  %2672 = vmatpush2.msra.mxu0 0.0
  %2673 = vmatprep.mubr.f32.mxu0 0.0
  %2674 = vmatmul.mubr.f32.gmra.mxu0 %v2598
  %v2675 = vpop.f32.mrf.mxu0
  %v2676 = vadd.f32 %v2579, %v2675
  %v2677 = vpop.f32.mrf.mxu0
  %2678 = vmatprep.mubr.f32.mxu0 0.0
  %2679 = vmatmul.mubr.f32.gmra.mxu0 %v2601
  %v2680 = vpop.f32.mrf.mxu0
  %v2681 = vadd.f32 %v2584, %v2680
  %v2682 = vpop.f32.mrf.mxu0
  %2683 = vmatprep.mubr.f32.mxu0 0.0
  %2684 = vmatmul.mubr.f32.gmra.mxu0 %v2604
  %v2685 = vpop.f32.mrf.mxu0
  %v2686 = vadd.f32 %v2589, %v2685
  %v2687 = vpop.f32.mrf.mxu0
  %2688 = vmatprep.mubr.f32.mxu0 0.0
  %2689 = vmatmul.mubr.f32.gmra.mxu0 %v2607
  %v2690 = vpop.f32.mrf.mxu0
  %v2691 = vadd.f32 %v2594, %v2690
  %v2692 = vpop.f32.mrf.mxu0
  %2693 = vdwg.mxu0
  %s2694 = scalar_lea.vmem %s13, 64
  %v2695 = vld [vmem:[%s2694] sm:$0xff]
  %v2696 = vld [vmem:[%s2694 + $0x8] sm:$0xff]
  %v2697 = vld [vmem:[%s2694 + $0x10] sm:$0xff]
  %v2698 = vld [vmem:[%s2694 + $0x18] sm:$0xff]
  %v2700 = vsel %vm1001, %v2695, 0
  %v2703 = vsel %vm1001, %v2696, 0
  %v2706 = vsel %vm1001, %v2697, 0
  %v2709 = vsel %vm1001, %v2698, 0
  %2711 = vmatprep.subr.mxu0 0.0
  %2712 = vmatpush1.msra.mxu0 0.0
  %2713 = vmatprep.subr.mxu0 0.0
  %2714 = vmatpush1.msra.mxu0 0.0
  %2715 = vmatprep.subr.mxu0 0.0
  %2716 = vmatpush1.msra.mxu0 0.0
  %2717 = vmatprep.subr.mxu0 0.0
  %2718 = vmatpush1.msra.mxu0 0.0
  %2719 = vmatprep.subr.mxu0 0.0
  %2720 = vmatpush1.msra.mxu0 0.0
  %2721 = vmatprep.subr.mxu0 0.0
  %2722 = vmatpush1.msra.mxu0 0.0
  %2723 = vmatprep.subr.mxu0 0.0
  %2724 = vmatpush1.msra.mxu0 0.0
  %2725 = vmatprep.subr.mxu0 0.0
  %2726 = vmatpush1.msra.mxu0 0.0
  %2727 = vmatprep.subr.mxu0 0.0
  %2728 = vmatpush1.msra.mxu0 0.0
  %2729 = vmatprep.subr.mxu0 0.0
  %2730 = vmatpush1.msra.mxu0 0.0
  %2731 = vmatprep.subr.mxu0 0.0
  %2732 = vmatpush1.msra.mxu0 0.0
  %2733 = vmatprep.subr.mxu0 0.0
  %2734 = vmatpush1.msra.mxu0 0.0
  %2735 = vmatprep.subr.mxu0 0.0
  %2736 = vmatpush1.msra.mxu0 0.0
  %2737 = vmatprep.subr.mxu0 0.0
  %2738 = vmatpush1.msra.mxu0 0.0
  %2739 = vmatprep.subr.mxu0 0.0
  %2740 = vmatpush1.msra.mxu0 %v2287
  %2741 = vmatprep.subr.mxu0 0.0
  %2742 = vmatpush1.msra.mxu0 %v2286
  %2743 = vmatprep.subr.mxu0 0.0
  %2744 = vmatpush2.msra.mxu0 0.0
  %2745 = vmatprep.subr.mxu0 0.0
  %2746 = vmatpush2.msra.mxu0 0.0
  %2747 = vmatprep.subr.mxu0 0.0
  %2748 = vmatpush2.msra.mxu0 0.0
  %2749 = vmatprep.subr.mxu0 0.0
  %2750 = vmatpush2.msra.mxu0 0.0
  %2751 = vmatprep.subr.mxu0 0.0
  %2752 = vmatpush2.msra.mxu0 0.0
  %2753 = vmatprep.subr.mxu0 0.0
  %2754 = vmatpush2.msra.mxu0 0.0
  %2755 = vmatprep.subr.mxu0 0.0
  %2756 = vmatpush2.msra.mxu0 0.0
  %2757 = vmatprep.subr.mxu0 0.0
  %2758 = vmatpush2.msra.mxu0 0.0
  %2759 = vmatprep.subr.mxu0 0.0
  %2760 = vmatpush2.msra.mxu0 0.0
  %2761 = vmatprep.subr.mxu0 0.0
  %2762 = vmatpush2.msra.mxu0 0.0
  %2763 = vmatprep.subr.mxu0 0.0
  %2764 = vmatpush2.msra.mxu0 0.0
  %2765 = vmatprep.subr.mxu0 0.0
  %2766 = vmatpush2.msra.mxu0 0.0
  %2767 = vmatprep.subr.mxu0 0.0
  %2768 = vmatpush2.msra.mxu0 0.0
  %2769 = vmatprep.subr.mxu0 0.0
  %2770 = vmatpush2.msra.mxu0 0.0
  %2771 = vmatprep.subr.mxu0 0.0
  %2772 = vmatpush2.msra.mxu0 0.0
  %2773 = vmatprep.subr.mxu0 0.0
  %2774 = vmatpush2.msra.mxu0 0.0
  %2775 = vmatprep.mubr.f32.mxu0 0.0
  %2776 = vmatmul.mubr.f32.gmra.mxu0 %v2700
  %v2777 = vpop.f32.mrf.mxu0
  %v2778 = vadd.f32 0.0, %v2777
  %v2779 = vpop.f32.mrf.mxu0
  %2780 = vmatprep.mubr.f32.mxu0 0.0
  %2781 = vmatmul.mubr.f32.gmra.mxu0 %v2703
  %v2782 = vpop.f32.mrf.mxu0
  %v2783 = vadd.f32 0.0, %v2782
  %v2784 = vpop.f32.mrf.mxu0
  %2785 = vmatprep.mubr.f32.mxu0 0.0
  %2786 = vmatmul.mubr.f32.gmra.mxu0 %v2706
  %v2787 = vpop.f32.mrf.mxu0
  %v2788 = vadd.f32 0.0, %v2787
  %v2789 = vpop.f32.mrf.mxu0
  %2790 = vmatprep.mubr.f32.mxu0 0.0
  %2791 = vmatmul.mubr.f32.gmra.mxu0 %v2709
  %v2792 = vpop.f32.mrf.mxu0
  %v2793 = vadd.f32 0.0, %v2792
  %v2794 = vpop.f32.mrf.mxu0
  %2795 = vdwg.mxu0
  %s2796 = scalar_lea.vmem %s14, 64
  %v2797 = vld [vmem:[%s2796] sm:$0xff]
  %v2798 = vld [vmem:[%s2796 + $0x8] sm:$0xff]
  %v2799 = vld [vmem:[%s2796 + $0x10] sm:$0xff]
  %v2800 = vld [vmem:[%s2796 + $0x18] sm:$0xff]
  %v2802 = vsel %vm304, %v2778, 0
  %v2805 = vsel %vm304, %v2783, 0
  %v2808 = vsel %vm304, %v2788, 0
  %v2811 = vsel %vm304, %v2793, 0
  %2813 = vmatprep.subr.mxu0 0.0
  %2814 = vmatpush1.msra.mxu0 0.0
  %2815 = vmatprep.subr.mxu0 0.0
  %2816 = vmatpush1.msra.mxu0 0.0
  %2817 = vmatprep.subr.mxu0 0.0
  %2818 = vmatpush1.msra.mxu0 0.0
  %2819 = vmatprep.subr.mxu0 0.0
  %2820 = vmatpush1.msra.mxu0 0.0
  %2821 = vmatprep.subr.mxu0 0.0
  %2822 = vmatpush1.msra.mxu0 0.0
  %2823 = vmatprep.subr.mxu0 0.0
  %2824 = vmatpush1.msra.mxu0 0.0
  %2825 = vmatprep.subr.mxu0 0.0
  %2826 = vmatpush1.msra.mxu0 0.0
  %2827 = vmatprep.subr.mxu0 0.0
  %2828 = vmatpush1.msra.mxu0 0.0
  %2829 = vmatprep.subr.mxu0 0.0
  %2830 = vmatpush1.msra.mxu0 0.0
  %2831 = vmatprep.subr.mxu0 0.0
  %2832 = vmatpush1.msra.mxu0 0.0
  %2833 = vmatprep.subr.mxu0 0.0
  %2834 = vmatpush1.msra.mxu0 0.0
  %2835 = vmatprep.subr.mxu0 0.0
  %2836 = vmatpush1.msra.mxu0 0.0
  %2837 = vmatprep.subr.mxu0 0.0
  %2838 = vmatpush1.msra.mxu0 %v2800
  %2839 = vmatprep.subr.mxu0 0.0
  %2840 = vmatpush1.msra.mxu0 %v2799
  %2841 = vmatprep.subr.mxu0 0.0
  %2842 = vmatpush1.msra.mxu0 %v2798
  %2843 = vmatprep.subr.mxu0 0.0
  %2844 = vmatpush1.msra.mxu0 %v2797
  %2845 = vmatprep.subr.mxu0 0.0
  %2846 = vmatpush2.msra.mxu0 0.0
  %2847 = vmatprep.subr.mxu0 0.0
  %2848 = vmatpush2.msra.mxu0 0.0
  %2849 = vmatprep.subr.mxu0 0.0
  %2850 = vmatpush2.msra.mxu0 0.0
  %2851 = vmatprep.subr.mxu0 0.0
  %2852 = vmatpush2.msra.mxu0 0.0
  %2853 = vmatprep.subr.mxu0 0.0
  %2854 = vmatpush2.msra.mxu0 0.0
  %2855 = vmatprep.subr.mxu0 0.0
  %2856 = vmatpush2.msra.mxu0 0.0
  %2857 = vmatprep.subr.mxu0 0.0
  %2858 = vmatpush2.msra.mxu0 0.0
  %2859 = vmatprep.subr.mxu0 0.0
  %2860 = vmatpush2.msra.mxu0 0.0
  %2861 = vmatprep.subr.mxu0 0.0
  %2862 = vmatpush2.msra.mxu0 0.0
  %2863 = vmatprep.subr.mxu0 0.0
  %2864 = vmatpush2.msra.mxu0 0.0
  %2865 = vmatprep.subr.mxu0 0.0
  %2866 = vmatpush2.msra.mxu0 0.0
  %2867 = vmatprep.subr.mxu0 0.0
  %2868 = vmatpush2.msra.mxu0 0.0
  %2869 = vmatprep.subr.mxu0 0.0
  %2870 = vmatpush2.msra.mxu0 0.0
  %2871 = vmatprep.subr.mxu0 0.0
  %2872 = vmatpush2.msra.mxu0 0.0
  %2873 = vmatprep.subr.mxu0 0.0
  %2874 = vmatpush2.msra.mxu0 0.0
  %2875 = vmatprep.subr.mxu0 0.0
  %2876 = vmatpush2.msra.mxu0 0.0
  %2877 = vmatprep.mubr.f32.mxu0 0.0
  %2878 = vmatmul.mubr.f32.gmra.mxu0 %v2802
  %v2879 = vpop.f32.mrf.mxu0
  %v2880 = vadd.f32 0.0, %v2879
  %v2881 = vpop.f32.mrf.mxu0
  %2882 = vmatprep.mubr.f32.mxu0 0.0
  %2883 = vmatmul.mubr.f32.gmra.mxu0 %v2805
  %v2884 = vpop.f32.mrf.mxu0
  %v2885 = vadd.f32 0.0, %v2884
  %v2886 = vpop.f32.mrf.mxu0
  %2887 = vmatprep.mubr.f32.mxu0 0.0
  %2888 = vmatmul.mubr.f32.gmra.mxu0 %v2808
  %v2889 = vpop.f32.mrf.mxu0
  %v2890 = vadd.f32 0.0, %v2889
  %v2891 = vpop.f32.mrf.mxu0
  %2892 = vmatprep.mubr.f32.mxu0 0.0
  %2893 = vmatmul.mubr.f32.gmra.mxu0 %v2811
  %v2894 = vpop.f32.mrf.mxu0
  %v2895 = vadd.f32 0.0, %v2894
  %v2896 = vpop.f32.mrf.mxu0
  %2897 = vdwg.mxu0
  %v2898 = vadd.f32 %v2676, %v2880
  %v2899 = vadd.f32 %v2681, %v2885
  %v2900 = vadd.f32 %v2686, %v2890
  %v2901 = vadd.f32 %v2691, %v2895
  %v2902 = vadd.f32 %v2898, %v59
  %v2903 = vadd.f32 %v2899, %v60
  %v2904 = vadd.f32 %v2900, %v61
  %v2905 = vadd.f32 %v2901, %v62
  %2906 = vst.msk [vmem:[%s17] sm:$0xff] %vm73, %v2902
  %2907 = vst.msk [vmem:[%s17 + $0x8] sm:$0xff] %vm73, %v2903
  %2908 = vst.msk [vmem:[%s17 + $0x10] sm:$0xff] %vm73, %v2904
  %2909 = vst.msk [vmem:[%s17 + $0x18] sm:$0xff] %vm73, %v2905
  %2910 = vst.msk [vmem:[%s18] sm:$0xff] %vm304, %v2109
  %2911 = vst.msk [vmem:[%s18 + $0x8] sm:$0xff] %vm304, %v2110
  %2912 = vst.msk [vmem:[%s19] sm:$0xff] %vm1001, %v1458
  // Predicated region
  $region70: #{aeblock_forward.1} parent=0 // pred_check
    _
  $region71: #{aeblock_forward.1} parent=0 // pred_check_branch
    %2914 = sbr.rel (0) target = $region73
  $region72: #{aeblock_forward.1} parent=0 // pred_region
    _
  $region73: #{aeblock_forward.1} parent=0 // pred_fallthru
    _
  // Predicated region
  $region74: #{aeblock_forward.1} parent=0 // pred_check
    _
  $region75: #{aeblock_forward.1} parent=0 // pred_check_branch
    %2916 = sbr.rel (0) target = $region77
  $region76: #{aeblock_forward.1} parent=0 // pred_region
    _
  $region77: #{aeblock_forward.1} parent=0 // pred_fallthru
    _
  // Predicated region
  $region78: #{aeblock_forward.1} parent=0 // pred_check
    _
  $region79: #{aeblock_forward.1} parent=0 // pred_check_branch
    %2918 = sbr.rel (0) target = $region81
  $region80: #{aeblock_forward.1} parent=0 // pred_region
    _
  $region81: #{aeblock_forward.1} parent=0 // pred_fallthru
    _
  // Predicated region
  $region82: #{aeblock_forward.1} parent=0 // pred_check
    _
  $region83: #{aeblock_forward.1} parent=0 // pred_check_branch
    %2920 = sbr.rel (0) target = $region85
  $region84: #{aeblock_forward.1} parent=0 // pred_region
    _
  $region85: #{aeblock_forward.1} parent=0 // pred_fallthru
    _
  // Predicated region
  $region86: #{aeblock_forward.1} parent=0 // pred_check
    _
  $region87: #{aeblock_forward.1} parent=0 // pred_check_branch
    %2922 = sbr.rel (0) target = $region89
  $region88: #{aeblock_forward.1} parent=0 // pred_region
    _
  $region89: #{aeblock_forward.1} parent=0 // pred_fallthru
    _
  // Predicated region
  $region90: #{aeblock_forward.1} parent=0 // pred_check
    _
  $region91: #{aeblock_forward.1} parent=0 // pred_check_branch
    %2924 = sbr.rel (0) target = $region93
  $region92: #{aeblock_forward.1} parent=0 // pred_region
    _
  $region93: #{aeblock_forward.1} parent=0 // pred_fallthru
    _

</llo_original>
